<compile_context>
chip_gen: v7x
topology: tpu7x:2x2x1
jax: 0.10.0
libtpu: 0.0.40
codegen_flags: <defaults>
</compile_context>

<pallas_src>
import functools

import jax
import jax.numpy as jnp
from jax.experimental import pallas as pl
from jax.experimental.pallas import tpu as pltpu


# ---------------------------------------------------------------------------
# padding / spec helpers
# ---------------------------------------------------------------------------
C_PAD = 128    # node-feature / hidden channel lane width (in_dim=16, hidden=40 -> 128)
H1_PAD = 128   # MLP hidden (5) padded lane width
OUT_PAD = 128  # final output lane width (real width = 1)


def _round_up(n, m):
    return ((n + m - 1) // m) * m


def _pad2d(a, rows, cols):
    a = jnp.asarray(a, jnp.float32)
    return jnp.pad(a, ((0, rows - a.shape[0]), (0, cols - a.shape[1])))


def _full_spec(shape):
    """BlockSpec covering the whole (small) array, grid=(1,)."""
    nd = len(shape)
    return pl.BlockSpec(tuple(shape), lambda i, _nd=nd: (0,) * _nd)


# ---------------------------------------------------------------------------
# fused forward kernel
# ---------------------------------------------------------------------------
def _fused_forward_kernel(*refs, num_node_types, num_edge_types, num_layers,
                          edge_src, edge_dst, num_graphs, g_pad):
    T, E, L = num_node_types, num_edge_types, num_layers
    i = 0
    x_refs = refs[i:i + T]; i += T
    mask_refs = refs[i:i + T]; i += T
    adj_refs = refs[i:i + E]; i += E
    wrel_refs = refs[i:i + L * E]; i += L * E
    wroot_refs = refs[i:i + L * T]; i += L * T      # pre-summed over edge types
    bsum_refs = refs[i:i + L * T]; i += L * T       # pre-summed over edge types
    mlp_refs = refs[i:i + 3 * T]; i += 3 * T        # (w1T, b1, w2T*w_out[t]) per type
    bfin_ref = refs[i]; i += 1                      # sum(w_out*b2) + b_out (col 0)
    out_ref = refs[i]

    x = [x_refs[t][...] for t in range(T)]
    adj = [adj_refs[e][...] for e in range(E)]

    # ---- hetero GraphConv stack: all layers / node types / edge types fused
    for l in range(L):
        apply_relu = l < L - 1
        new_x = []
        for t in range(T):
            # merged root transform + single pre-summed bias per dst type
            acc = jnp.dot(x[t], wroot_refs[l * T + t][...],
                          preferred_element_type=jnp.float32)
            acc = acc + bsum_refs[l * T + t][...]
            for e in range(E):
                if edge_dst[e] != t:
                    continue
                agg = jnp.dot(adj[e], x[edge_src[e]],
                              preferred_element_type=jnp.float32)
                acc = acc + jnp.dot(agg, wrel_refs[l * E + e][...],
                                    preferred_element_type=jnp.float32)
            if apply_relu:
                acc = jnp.maximum(acc, 0.0)
            new_x.append(acc)
        x = new_x

    # ---- global_max_pool + per-type MLP + folded output Linear
    neg = jnp.float32(-3.0e38)
    out = jnp.zeros(out_ref.shape, jnp.float32)
    for t in range(T):
        xm = x[t]
        mask = mask_refs[t][...]                          # (N_pad, G_lane_pad) f32
        pooled = jnp.zeros((g_pad, xm.shape[1]), jnp.float32)
        for g in range(num_graphs):                       # G is tiny & static
            mg = mask[:, g:g + 1]                         # (N_pad, 1)
            row = jnp.max(jnp.where(mg > 0, xm, neg), axis=0, keepdims=True)
            cnt = jnp.sum(mg, axis=0, keepdims=True)      # (1, 1)
            row = jnp.where(cnt > 0, row, 0.0)            # empty graph -> 0
            sel = jax.lax.broadcasted_iota(jnp.int32, pooled.shape, 0) == g
            pooled = jnp.where(sel, row, pooled)          # no per-row stores
        w1T = mlp_refs[3 * t][...]
        b1 = mlp_refs[3 * t + 1][...]
        w2sT = mlp_refs[3 * t + 2][...]                   # already scaled by w_out[0,t]
        h1 = jnp.maximum(
            jnp.dot(pooled, w1T, preferred_element_type=jnp.float32) + b1, 0.0)
        out = out + jnp.dot(h1, w2sT, preferred_element_type=jnp.float32)
    # single lane-dense (g_pad, 128) store
    out_ref[...] = out + bfin_ref[...]


# ---------------------------------------------------------------------------
# parameter init (PyTorch (out,in) layout) and one-time preprocessing
# ---------------------------------------------------------------------------
def init_linear(key, out_c, in_c):
    k1, k2 = jax.random.split(key)
    bound = 1.0 / (in_c ** 0.5)
    w = jax.random.uniform(k1, (out_c, in_c), jnp.float32, -bound, bound)
    b = jax.random.uniform(k2, (out_c,), jnp.float32, -bound, bound)
    return w, b


def init_gnn_hetero_pooling(key, node_types, edge_types, in_dim,
                            hidden_channels, num_mpn_layers):
    params = {"mpn": [], "mlp": {}, "out": None}
    keys = iter(jax.random.split(key, 4096))
    for layer in range(num_mpn_layers):
        in_c = in_dim if layer == 0 else hidden_channels
        layer_params = {}
        for et in edge_types:
            w_rel, b_rel = init_linear(next(keys), hidden_channels, in_c)
            w_root, _ = init_linear(next(keys), hidden_channels, in_c)  # root: no bias
            layer_params[et] = {"w_rel": w_rel, "b_rel": b_rel, "w_root": w_root}
        params["mpn"].append(layer_params)
    for nt in node_types:
        w1, b1 = init_linear(next(keys), 5, hidden_channels)
        w2, b2 = init_linear(next(keys), 1, 5)
        params["mlp"][nt] = {"w1": w1, "b1": b1, "w2": w2, "b2": b2}
    params["out"] = init_linear(next(keys), 1, len(node_types))
    return params


def prepare_params(params, node_types, edge_types):
    """One-time: transpose, cast, zero-pad, and algebraically pre-merge weights
    (sum of per-edge-type root transforms/biases; fold the final Linear into
    each node type's MLP lin2 + a single bias row)."""
    L = len(params["mpn"])
    prep = {"wrelT": [], "wrootT_sum": [], "bsum": []}
    for l in range(L):
        lp = params["mpn"][l]
        prep["wrelT"].append(
            [_pad2d(jnp.transpose(lp[et]["w_rel"]), C_PAD, C_PAD) for et in edge_types])
        wroot_l, bsum_l = [], []
        for nt in node_types:
            wr = jnp.zeros((C_PAD, C_PAD), jnp.float32)
            bs = jnp.zeros((1, C_PAD), jnp.float32)
            for et in edge_types:
                if et[2] != nt:
                    continue
                wr = wr + _pad2d(jnp.transpose(lp[et]["w_root"]), C_PAD, C_PAD)
                bs = bs + _pad2d(lp[et]["b_rel"].reshape(1, -1), 1, C_PAD)
            wroot_l.append(wr)
            bsum_l.append(bs)
        prep["wrootT_sum"].append(wroot_l)
        prep["bsum"].append(bsum_l)

    w_out, b_out = params["out"]                    # (1, T), (1,)
    b_final = jnp.zeros((1, OUT_PAD), jnp.float32).at[0, 0].set(b_out[0])
    mlp_list = []
    for t, nt in enumerate(node_types):
        mp = params["mlp"][nt]
        scale = w_out[0, t]
        w1T = _pad2d(jnp.transpose(mp["w1"]), C_PAD, H1_PAD)
        b1 = _pad2d(mp["b1"].reshape(1, -1), 1, H1_PAD)
        w2sT = _pad2d(jnp.transpose(mp["w2"]) * scale, H1_PAD, OUT_PAD)
        mlp_list.append((w1T, b1, w2sT))
        b_final = b_final.at[0, 0].add(scale * mp["b2"][0])
    prep["mlp"] = mlp_list
    prep["b_final"] = b_final
    return prep


# ---------------------------------------------------------------------------
# forward (single fused pallas_call)
# ---------------------------------------------------------------------------
def gnn_hetero_pooling_forward(prep, node_types, edge_types,
                               x_dict, adj_dict, batch_dict, num_graphs):
    T, E, L = len(node_types), len(edge_types), len(prep["wrelT"])
    type_idx = {nt: i for i, nt in enumerate(node_types)}
    edge_src = tuple(type_idx[et[0]] for et in edge_types)
    edge_dst = tuple(type_idx[et[2]] for et in edge_types)

    g_pad = _round_up(num_graphs, 8)               # sublane-aligned output rows
    g_lane = _round_up(num_graphs, 128)            # lane-aligned mask width
    n_pad = {nt: _round_up(x_dict[nt].shape[0], 8) for nt in node_types}

    # pad node features (zero rows/channels keep the real rows exact)
    x_args = [_pad2d(x_dict[nt], n_pad[nt], C_PAD) for nt in node_types]
    # per-graph membership masks
    mask_args = []
    for nt in node_types:
        m = (batch_dict[nt][:, None] == jnp.arange(num_graphs)[None, :]).astype(jnp.float32)
        mask_args.append(_pad2d(m, n_pad[nt], g_lane))
    # dense adjacency, padded (padded src columns are zero -> no contribution)
    # TODO(synk): for realistic graph sizes, reduction-tile adj over a grid axis
    # (bf16) with a 'parallel' axis so both v7x TensorCores are used, instead of
    # holding the full (N_dst, N_src) block in VMEM.
    adj_args = [_pad2d(adj_dict[et], n_pad[et[2]], n_pad[et[0]]) for et in edge_types]

    wrel_args = [prep["wrelT"][l][e] for l in range(L) for e in range(E)]
    wroot_args = [prep["wrootT_sum"][l][t] for l in range(L) for t in range(T)]
    bsum_args = [prep["bsum"][l][t] for l in range(L) for t in range(T)]
    mlp_args = [a for t in range(T) for a in prep["mlp"][t]]

    args = (x_args + mask_args + adj_args + wrel_args + wroot_args
            + bsum_args + mlp_args + [prep["b_final"]])

    out_shape = jax.ShapeDtypeStruct((g_pad, OUT_PAD), jnp.float32)
    kernel = functools.partial(
        _fused_forward_kernel,
        num_node_types=T, num_edge_types=E, num_layers=L,
        edge_src=edge_src, edge_dst=edge_dst,
        num_graphs=num_graphs, g_pad=g_pad,
    )
    out_pad = pl.pallas_call(
        kernel,
        grid=(1,),
        in_specs=[_full_spec(a.shape) for a in args],
        out_specs=_full_spec(out_shape.shape),
        out_shape=out_shape,
        compiler_params=pltpu.CompilerParams(dimension_semantics=("arbitrary",)),
    )(*args)
    return out_pad[:num_graphs, :1]


# ---------------------------------------------------------------------------
# main
# ---------------------------------------------------------------------------
if __name__ == "__main__":
    key = jax.random.PRNGKey(0)

    # metadata = (node_types, edge_types)
    node_types = ["a", "b"]
    edge_types = [("a", "to", "a"), ("a", "to", "b"), ("b", "rev", "a")]

    in_dim = 16
    hidden_channels = 40
    num_mpn_layers = 3
    num_graphs = 2
    num_nodes = {"a": 12, "b": 10}
    num_edges = 20

    keys = iter(jax.random.split(key, 64))

    x_dict = {
        nt: jax.random.normal(next(keys), (num_nodes[nt], in_dim), jnp.float32)
        for nt in node_types
    }
    batch_dict = {
        "a": jnp.array([0] * 7 + [1] * 5, dtype=jnp.int32),
        "b": jnp.array([0] * 5 + [1] * 5, dtype=jnp.int32),
    }

    # TODO(synk): sparse edge_index scatter is done as a dense adjacency build
    # in plain JAX; the aggregation matmul itself runs inside the Pallas kernel.
    adj_dict = {}
    for et in edge_types:
        src_t, _, dst_t = et
        src_idx = jax.random.randint(next(keys), (num_edges,), 0, num_nodes[src_t])
        dst_idx = jax.random.randint(next(keys), (num_edges,), 0, num_nodes[dst_t])
        adj = jnp.zeros((num_nodes[dst_t], num_nodes[src_t]), jnp.float32)
        adj_dict[et] = adj.at[dst_idx, src_idx].add(1.0)

    params = init_gnn_hetero_pooling(
        next(keys), node_types, edge_types, in_dim, hidden_channels, num_mpn_layers
    )
    prep = prepare_params(params, node_types, edge_types)   # one-time weight prep

    out = gnn_hetero_pooling_forward(
        prep, node_types, edge_types, x_dict, adj_dict, batch_dict, num_graphs
    )
    out = jax.block_until_ready(out)
    assert out.shape == (num_graphs, 1) and out.dtype == jnp.float32
    print("KERNEL_OK")
</pallas_src>

<mosaic_0001>
module attributes {stable_mosaic.version = 11 : i64} {
  func.func @_fused_forward_kernel(%arg0: i32, %arg1: memref<16x128xf32, #tpu.memory_space<vmem>>, %arg2: memref<16x128xf32, #tpu.memory_space<vmem>>, %arg3: memref<16x128xf32, #tpu.memory_space<vmem>>, %arg4: memref<16x128xf32, #tpu.memory_space<vmem>>, %arg5: memref<16x16xf32, #tpu.memory_space<vmem>>, %arg6: memref<16x16xf32, #tpu.memory_space<vmem>>, %arg7: memref<16x16xf32, #tpu.memory_space<vmem>>, %arg8: memref<128x128xf32, #tpu.memory_space<vmem>>, %arg9: memref<128x128xf32, #tpu.memory_space<vmem>>, %arg10: memref<128x128xf32, #tpu.memory_space<vmem>>, %arg11: memref<128x128xf32, #tpu.memory_space<vmem>>, %arg12: memref<128x128xf32, #tpu.memory_space<vmem>>, %arg13: memref<128x128xf32, #tpu.memory_space<vmem>>, %arg14: memref<128x128xf32, #tpu.memory_space<vmem>>, %arg15: memref<128x128xf32, #tpu.memory_space<vmem>>, %arg16: memref<128x128xf32, #tpu.memory_space<vmem>>, %arg17: memref<128x128xf32, #tpu.memory_space<vmem>>, %arg18: memref<128x128xf32, #tpu.memory_space<vmem>>, %arg19: memref<128x128xf32, #tpu.memory_space<vmem>>, %arg20: memref<128x128xf32, #tpu.memory_space<vmem>>, %arg21: memref<128x128xf32, #tpu.memory_space<vmem>>, %arg22: memref<128x128xf32, #tpu.memory_space<vmem>>, %arg23: memref<1x128xf32, #tpu.memory_space<vmem>>, %arg24: memref<1x128xf32, #tpu.memory_space<vmem>>, %arg25: memref<1x128xf32, #tpu.memory_space<vmem>>, %arg26: memref<1x128xf32, #tpu.memory_space<vmem>>, %arg27: memref<1x128xf32, #tpu.memory_space<vmem>>, %arg28: memref<1x128xf32, #tpu.memory_space<vmem>>, %arg29: memref<128x128xf32, #tpu.memory_space<vmem>>, %arg30: memref<1x128xf32, #tpu.memory_space<vmem>>, %arg31: memref<128x128xf32, #tpu.memory_space<vmem>>, %arg32: memref<128x128xf32, #tpu.memory_space<vmem>>, %arg33: memref<1x128xf32, #tpu.memory_space<vmem>>, %arg34: memref<128x128xf32, #tpu.memory_space<vmem>>, %arg35: memref<1x128xf32, #tpu.memory_space<vmem>>, %arg36: memref<8x128xf32, #tpu.memory_space<vmem>>) attributes {dimension_semantics = [#tpu.dimension_semantics<arbitrary>], iteration_bounds = array<i64: 1>, scalar_prefetch = 0 : i64, scratch_operands = 0 : i64, tpu.core_type = #tpu.core_type<tc>, window_params = [{pipeline_mode = #tpu.pipeline_mode<synchronous>, transform_indices = @transform_0, window_bounds = array<i64: 16, 128>}, {pipeline_mode = #tpu.pipeline_mode<synchronous>, transform_indices = @transform_1, window_bounds = array<i64: 16, 128>}, {pipeline_mode = #tpu.pipeline_mode<synchronous>, transform_indices = @transform_2, window_bounds = array<i64: 16, 128>}, {pipeline_mode = #tpu.pipeline_mode<synchronous>, transform_indices = @transform_3, window_bounds = array<i64: 16, 128>}, {pipeline_mode = #tpu.pipeline_mode<synchronous>, transform_indices = @transform_4, window_bounds = array<i64: 16, 16>}, {pipeline_mode = #tpu.pipeline_mode<synchronous>, transform_indices = @transform_5, window_bounds = array<i64: 16, 16>}, {pipeline_mode = #tpu.pipeline_mode<synchronous>, transform_indices = @transform_6, window_bounds = array<i64: 16, 16>}, {pipeline_mode = #tpu.pipeline_mode<synchronous>, transform_indices = @transform_7, window_bounds = array<i64: 128, 128>}, {pipeline_mode = #tpu.pipeline_mode<synchronous>, transform_indices = @transform_8, window_bounds = array<i64: 128, 128>}, {pipeline_mode = #tpu.pipeline_mode<synchronous>, transform_indices = @transform_9, window_bounds = array<i64: 128, 128>}, {pipeline_mode = #tpu.pipeline_mode<synchronous>, transform_indices = @transform_10, window_bounds = array<i64: 128, 128>}, {pipeline_mode = #tpu.pipeline_mode<synchronous>, transform_indices = @transform_11, window_bounds = array<i64: 128, 128>}, {pipeline_mode = #tpu.pipeline_mode<synchronous>, transform_indices = @transform_12, window_bounds = array<i64: 128, 128>}, {pipeline_mode = #tpu.pipeline_mode<synchronous>, transform_indices = @transform_13, window_bounds = array<i64: 128, 128>}, {pipeline_mode = #tpu.pipeline_mode<synchronous>, transform_indices = @transform_14, window_bounds = array<i64: 128, 128>}, {pipeline_mode = #tpu.pipeline_mode<synchronous>, transform_indices = @transform_15, window_bounds = array<i64: 128, 128>}, {pipeline_mode = #tpu.pipeline_mode<synchronous>, transform_indices = @transform_16, window_bounds = array<i64: 128, 128>}, {pipeline_mode = #tpu.pipeline_mode<synchronous>, transform_indices = @transform_17, window_bounds = array<i64: 128, 128>}, {pipeline_mode = #tpu.pipeline_mode<synchronous>, transform_indices = @transform_18, window_bounds = array<i64: 128, 128>}, {pipeline_mode = #tpu.pipeline_mode<synchronous>, transform_indices = @transform_19, window_bounds = array<i64: 128, 128>}, {pipeline_mode = #tpu.pipeline_mode<synchronous>, transform_indices = @transform_20, window_bounds = array<i64: 128, 128>}, {pipeline_mode = #tpu.pipeline_mode<synchronous>, transform_indices = @transform_21, window_bounds = array<i64: 128, 128>}, {pipeline_mode = #tpu.pipeline_mode<synchronous>, transform_indices = @transform_22, window_bounds = array<i64: 1, 128>}, {pipeline_mode = #tpu.pipeline_mode<synchronous>, transform_indices = @transform_23, window_bounds = array<i64: 1, 128>}, {pipeline_mode = #tpu.pipeline_mode<synchronous>, transform_indices = @transform_24, window_bounds = array<i64: 1, 128>}, {pipeline_mode = #tpu.pipeline_mode<synchronous>, transform_indices = @transform_25, window_bounds = array<i64: 1, 128>}, {pipeline_mode = #tpu.pipeline_mode<synchronous>, transform_indices = @transform_26, window_bounds = array<i64: 1, 128>}, {pipeline_mode = #tpu.pipeline_mode<synchronous>, transform_indices = @transform_27, window_bounds = array<i64: 1, 128>}, {pipeline_mode = #tpu.pipeline_mode<synchronous>, transform_indices = @transform_28, window_bounds = array<i64: 128, 128>}, {pipeline_mode = #tpu.pipeline_mode<synchronous>, transform_indices = @transform_29, window_bounds = array<i64: 1, 128>}, {pipeline_mode = #tpu.pipeline_mode<synchronous>, transform_indices = @transform_30, window_bounds = array<i64: 128, 128>}, {pipeline_mode = #tpu.pipeline_mode<synchronous>, transform_indices = @transform_31, window_bounds = array<i64: 128, 128>}, {pipeline_mode = #tpu.pipeline_mode<synchronous>, transform_indices = @transform_32, window_bounds = array<i64: 1, 128>}, {pipeline_mode = #tpu.pipeline_mode<synchronous>, transform_indices = @transform_33, window_bounds = array<i64: 128, 128>}, {pipeline_mode = #tpu.pipeline_mode<synchronous>, transform_indices = @transform_34, window_bounds = array<i64: 1, 128>}, {pipeline_mode = #tpu.pipeline_mode<synchronous>, transform_indices = @transform_35, window_bounds = array<i64: 8, 128>}]} {
    %c0 = arith.constant 0 : index
    %c0_0 = arith.constant 0 : index
    %0 = vector.load %arg1[%c0, %c0_0] : memref<16x128xf32, #tpu.memory_space<vmem>>, vector<16x128xf32>
    %c0_1 = arith.constant 0 : index
    %c0_2 = arith.constant 0 : index
    %1 = vector.load %arg2[%c0_1, %c0_2] : memref<16x128xf32, #tpu.memory_space<vmem>>, vector<16x128xf32>
    %c0_3 = arith.constant 0 : index
    %c0_4 = arith.constant 0 : index
    %2 = vector.load %arg5[%c0_3, %c0_4] : memref<16x16xf32, #tpu.memory_space<vmem>>, vector<16x16xf32>
    %c0_5 = arith.constant 0 : index
    %c0_6 = arith.constant 0 : index
    %3 = vector.load %arg6[%c0_5, %c0_6] : memref<16x16xf32, #tpu.memory_space<vmem>>, vector<16x16xf32>
    %c0_7 = arith.constant 0 : index
    %c0_8 = arith.constant 0 : index
    %4 = vector.load %arg7[%c0_7, %c0_8] : memref<16x16xf32, #tpu.memory_space<vmem>>, vector<16x16xf32>
    %c0_9 = arith.constant 0 : index
    %c0_10 = arith.constant 0 : index
    %5 = vector.load %arg17[%c0_9, %c0_10] : memref<128x128xf32, #tpu.memory_space<vmem>>, vector<128x128xf32>
    %cst = arith.constant dense<0.000000e+00> : vector<16x128xf32>
    %6 = tpu.matmul %0, %5, %cst {dimension_numbers = #tpu.dot_dimension_numbers<[1], [0], [0], [1], [0, 0, 1, 1], [], []>} : vector<16x128xf32>, vector<128x128xf32>, vector<16x128xf32> -> vector<16x128xf32>
    %c0_11 = arith.constant 0 : index
    %c0_12 = arith.constant 0 : index
    %7 = vector.load %arg23[%c0_11, %c0_12] : memref<1x128xf32, #tpu.memory_space<vmem>>, vector<1x128xf32>
    %8 = vector.broadcast %7 : vector<1x128xf32> to vector<16x128xf32>
    %9 = arith.addf %6, %8 : vector<16x128xf32>
    %cst_13 = arith.constant dense<0.000000e+00> : vector<16x128xf32>
    %10 = tpu.matmul %2, %0, %cst_13 {dimension_numbers = #tpu.dot_dimension_numbers<[1], [0], [0], [1], [0, 0, 1, 1], [], []>} : vector<16x16xf32>, vector<16x128xf32>, vector<16x128xf32> -> vector<16x128xf32>
    %c0_14 = arith.constant 0 : index
    %c0_15 = arith.constant 0 : index
    %11 = vector.load %arg8[%c0_14, %c0_15] : memref<128x128xf32, #tpu.memory_space<vmem>>, vector<128x128xf32>
    %cst_16 = arith.constant dense<0.000000e+00> : vector<16x128xf32>
    %12 = tpu.matmul %10, %11, %cst_16 {dimension_numbers = #tpu.dot_dimension_numbers<[1], [0], [0], [1], [0, 0, 1, 1], [], []>} : vector<16x128xf32>, vector<128x128xf32>, vector<16x128xf32> -> vector<16x128xf32>
    %13 = arith.addf %9, %12 : vector<16x128xf32>
    %cst_17 = arith.constant dense<0.000000e+00> : vector<16x128xf32>
    %14 = tpu.matmul %4, %1, %cst_17 {dimension_numbers = #tpu.dot_dimension_numbers<[1], [0], [0], [1], [0, 0, 1, 1], [], []>} : vector<16x16xf32>, vector<16x128xf32>, vector<16x128xf32> -> vector<16x128xf32>
    %c0_18 = arith.constant 0 : index
    %c0_19 = arith.constant 0 : index
    %15 = vector.load %arg10[%c0_18, %c0_19] : memref<128x128xf32, #tpu.memory_space<vmem>>, vector<128x128xf32>
    %cst_20 = arith.constant dense<0.000000e+00> : vector<16x128xf32>
    %16 = tpu.matmul %14, %15, %cst_20 {dimension_numbers = #tpu.dot_dimension_numbers<[1], [0], [0], [1], [0, 0, 1, 1], [], []>} : vector<16x128xf32>, vector<128x128xf32>, vector<16x128xf32> -> vector<16x128xf32>
    %17 = arith.addf %13, %16 : vector<16x128xf32>
    %cst_21 = arith.constant 0.000000e+00 : f32
    %18 = vector.broadcast %cst_21 : f32 to vector<16x128xf32>
    %19 = arith.maximumf %17, %18 : vector<16x128xf32>
    %c0_22 = arith.constant 0 : index
    %c0_23 = arith.constant 0 : index
    %20 = vector.load %arg18[%c0_22, %c0_23] : memref<128x128xf32, #tpu.memory_space<vmem>>, vector<128x128xf32>
    %cst_24 = arith.constant dense<0.000000e+00> : vector<16x128xf32>
    %21 = tpu.matmul %1, %20, %cst_24 {dimension_numbers = #tpu.dot_dimension_numbers<[1], [0], [0], [1], [0, 0, 1, 1], [], []>} : vector<16x128xf32>, vector<128x128xf32>, vector<16x128xf32> -> vector<16x128xf32>
    %c0_25 = arith.constant 0 : index
    %c0_26 = arith.constant 0 : index
    %22 = vector.load %arg24[%c0_25, %c0_26] : memref<1x128xf32, #tpu.memory_space<vmem>>, vector<1x128xf32>
    %23 = vector.broadcast %22 : vector<1x128xf32> to vector<16x128xf32>
    %24 = arith.addf %21, %23 : vector<16x128xf32>
    %cst_27 = arith.constant dense<0.000000e+00> : vector<16x128xf32>
    %25 = tpu.matmul %3, %0, %cst_27 {dimension_numbers = #tpu.dot_dimension_numbers<[1], [0], [0], [1], [0, 0, 1, 1], [], []>} : vector<16x16xf32>, vector<16x128xf32>, vector<16x128xf32> -> vector<16x128xf32>
    %c0_28 = arith.constant 0 : index
    %c0_29 = arith.constant 0 : index
    %26 = vector.load %arg9[%c0_28, %c0_29] : memref<128x128xf32, #tpu.memory_space<vmem>>, vector<128x128xf32>
    %cst_30 = arith.constant dense<0.000000e+00> : vector<16x128xf32>
    %27 = tpu.matmul %25, %26, %cst_30 {dimension_numbers = #tpu.dot_dimension_numbers<[1], [0], [0], [1], [0, 0, 1, 1], [], []>} : vector<16x128xf32>, vector<128x128xf32>, vector<16x128xf32> -> vector<16x128xf32>
    %28 = arith.addf %24, %27 : vector<16x128xf32>
    %cst_31 = arith.constant 0.000000e+00 : f32
    %29 = vector.broadcast %cst_31 : f32 to vector<16x128xf32>
    %30 = arith.maximumf %28, %29 : vector<16x128xf32>
    %c0_32 = arith.constant 0 : index
    %c0_33 = arith.constant 0 : index
    %31 = vector.load %arg19[%c0_32, %c0_33] : memref<128x128xf32, #tpu.memory_space<vmem>>, vector<128x128xf32>
    %cst_34 = arith.constant dense<0.000000e+00> : vector<16x128xf32>
    %32 = tpu.matmul %19, %31, %cst_34 {dimension_numbers = #tpu.dot_dimension_numbers<[1], [0], [0], [1], [0, 0, 1, 1], [], []>} : vector<16x128xf32>, vector<128x128xf32>, vector<16x128xf32> -> vector<16x128xf32>
    %c0_35 = arith.constant 0 : index
    %c0_36 = arith.constant 0 : index
    %33 = vector.load %arg25[%c0_35, %c0_36] : memref<1x128xf32, #tpu.memory_space<vmem>>, vector<1x128xf32>
    %34 = vector.broadcast %33 : vector<1x128xf32> to vector<16x128xf32>
    %35 = arith.addf %32, %34 : vector<16x128xf32>
    %cst_37 = arith.constant dense<0.000000e+00> : vector<16x128xf32>
    %36 = tpu.matmul %2, %19, %cst_37 {dimension_numbers = #tpu.dot_dimension_numbers<[1], [0], [0], [1], [0, 0, 1, 1], [], []>} : vector<16x16xf32>, vector<16x128xf32>, vector<16x128xf32> -> vector<16x128xf32>
    %c0_38 = arith.constant 0 : index
    %c0_39 = arith.constant 0 : index
    %37 = vector.load %arg11[%c0_38, %c0_39] : memref<128x128xf32, #tpu.memory_space<vmem>>, vector<128x128xf32>
    %cst_40 = arith.constant dense<0.000000e+00> : vector<16x128xf32>
    %38 = tpu.matmul %36, %37, %cst_40 {dimension_numbers = #tpu.dot_dimension_numbers<[1], [0], [0], [1], [0, 0, 1, 1], [], []>} : vector<16x128xf32>, vector<128x128xf32>, vector<16x128xf32> -> vector<16x128xf32>
    %39 = arith.addf %35, %38 : vector<16x128xf32>
    %cst_41 = arith.constant dense<0.000000e+00> : vector<16x128xf32>
    %40 = tpu.matmul %4, %30, %cst_41 {dimension_numbers = #tpu.dot_dimension_numbers<[1], [0], [0], [1], [0, 0, 1, 1], [], []>} : vector<16x16xf32>, vector<16x128xf32>, vector<16x128xf32> -> vector<16x128xf32>
    %c0_42 = arith.constant 0 : index
    %c0_43 = arith.constant 0 : index
    %41 = vector.load %arg13[%c0_42, %c0_43] : memref<128x128xf32, #tpu.memory_space<vmem>>, vector<128x128xf32>
    %cst_44 = arith.constant dense<0.000000e+00> : vector<16x128xf32>
    %42 = tpu.matmul %40, %41, %cst_44 {dimension_numbers = #tpu.dot_dimension_numbers<[1], [0], [0], [1], [0, 0, 1, 1], [], []>} : vector<16x128xf32>, vector<128x128xf32>, vector<16x128xf32> -> vector<16x128xf32>
    %43 = arith.addf %39, %42 : vector<16x128xf32>
    %cst_45 = arith.constant 0.000000e+00 : f32
    %44 = vector.broadcast %cst_45 : f32 to vector<16x128xf32>
    %45 = arith.maximumf %43, %44 : vector<16x128xf32>
    %c0_46 = arith.constant 0 : index
    %c0_47 = arith.constant 0 : index
    %46 = vector.load %arg20[%c0_46, %c0_47] : memref<128x128xf32, #tpu.memory_space<vmem>>, vector<128x128xf32>
    %cst_48 = arith.constant dense<0.000000e+00> : vector<16x128xf32>
    %47 = tpu.matmul %30, %46, %cst_48 {dimension_numbers = #tpu.dot_dimension_numbers<[1], [0], [0], [1], [0, 0, 1, 1], [], []>} : vector<16x128xf32>, vector<128x128xf32>, vector<16x128xf32> -> vector<16x128xf32>
    %c0_49 = arith.constant 0 : index
    %c0_50 = arith.constant 0 : index
    %48 = vector.load %arg26[%c0_49, %c0_50] : memref<1x128xf32, #tpu.memory_space<vmem>>, vector<1x128xf32>
    %49 = vector.broadcast %48 : vector<1x128xf32> to vector<16x128xf32>
    %50 = arith.addf %47, %49 : vector<16x128xf32>
    %cst_51 = arith.constant dense<0.000000e+00> : vector<16x128xf32>
    %51 = tpu.matmul %3, %19, %cst_51 {dimension_numbers = #tpu.dot_dimension_numbers<[1], [0], [0], [1], [0, 0, 1, 1], [], []>} : vector<16x16xf32>, vector<16x128xf32>, vector<16x128xf32> -> vector<16x128xf32>
    %c0_52 = arith.constant 0 : index
    %c0_53 = arith.constant 0 : index
    %52 = vector.load %arg12[%c0_52, %c0_53] : memref<128x128xf32, #tpu.memory_space<vmem>>, vector<128x128xf32>
    %cst_54 = arith.constant dense<0.000000e+00> : vector<16x128xf32>
    %53 = tpu.matmul %51, %52, %cst_54 {dimension_numbers = #tpu.dot_dimension_numbers<[1], [0], [0], [1], [0, 0, 1, 1], [], []>} : vector<16x128xf32>, vector<128x128xf32>, vector<16x128xf32> -> vector<16x128xf32>
    %54 = arith.addf %50, %53 : vector<16x128xf32>
    %cst_55 = arith.constant 0.000000e+00 : f32
    %55 = vector.broadcast %cst_55 : f32 to vector<16x128xf32>
    %56 = arith.maximumf %54, %55 : vector<16x128xf32>
    %c0_56 = arith.constant 0 : index
    %c0_57 = arith.constant 0 : index
    %57 = vector.load %arg21[%c0_56, %c0_57] : memref<128x128xf32, #tpu.memory_space<vmem>>, vector<128x128xf32>
    %cst_58 = arith.constant dense<0.000000e+00> : vector<16x128xf32>
    %58 = tpu.matmul %45, %57, %cst_58 {dimension_numbers = #tpu.dot_dimension_numbers<[1], [0], [0], [1], [0, 0, 1, 1], [], []>} : vector<16x128xf32>, vector<128x128xf32>, vector<16x128xf32> -> vector<16x128xf32>
    %c0_59 = arith.constant 0 : index
    %c0_60 = arith.constant 0 : index
    %59 = vector.load %arg27[%c0_59, %c0_60] : memref<1x128xf32, #tpu.memory_space<vmem>>, vector<1x128xf32>
    %60 = vector.broadcast %59 : vector<1x128xf32> to vector<16x128xf32>
    %61 = arith.addf %58, %60 : vector<16x128xf32>
    %cst_61 = arith.constant dense<0.000000e+00> : vector<16x128xf32>
    %62 = tpu.matmul %2, %45, %cst_61 {dimension_numbers = #tpu.dot_dimension_numbers<[1], [0], [0], [1], [0, 0, 1, 1], [], []>} : vector<16x16xf32>, vector<16x128xf32>, vector<16x128xf32> -> vector<16x128xf32>
    %c0_62 = arith.constant 0 : index
    %c0_63 = arith.constant 0 : index
    %63 = vector.load %arg14[%c0_62, %c0_63] : memref<128x128xf32, #tpu.memory_space<vmem>>, vector<128x128xf32>
    %cst_64 = arith.constant dense<0.000000e+00> : vector<16x128xf32>
    %64 = tpu.matmul %62, %63, %cst_64 {dimension_numbers = #tpu.dot_dimension_numbers<[1], [0], [0], [1], [0, 0, 1, 1], [], []>} : vector<16x128xf32>, vector<128x128xf32>, vector<16x128xf32> -> vector<16x128xf32>
    %65 = arith.addf %61, %64 : vector<16x128xf32>
    %cst_65 = arith.constant dense<0.000000e+00> : vector<16x128xf32>
    %66 = tpu.matmul %4, %56, %cst_65 {dimension_numbers = #tpu.dot_dimension_numbers<[1], [0], [0], [1], [0, 0, 1, 1], [], []>} : vector<16x16xf32>, vector<16x128xf32>, vector<16x128xf32> -> vector<16x128xf32>
    %c0_66 = arith.constant 0 : index
    %c0_67 = arith.constant 0 : index
    %67 = vector.load %arg16[%c0_66, %c0_67] : memref<128x128xf32, #tpu.memory_space<vmem>>, vector<128x128xf32>
    %cst_68 = arith.constant dense<0.000000e+00> : vector<16x128xf32>
    %68 = tpu.matmul %66, %67, %cst_68 {dimension_numbers = #tpu.dot_dimension_numbers<[1], [0], [0], [1], [0, 0, 1, 1], [], []>} : vector<16x128xf32>, vector<128x128xf32>, vector<16x128xf32> -> vector<16x128xf32>
    %69 = arith.addf %65, %68 : vector<16x128xf32>
    %c0_69 = arith.constant 0 : index
    %c0_70 = arith.constant 0 : index
    %70 = vector.load %arg22[%c0_69, %c0_70] : memref<128x128xf32, #tpu.memory_space<vmem>>, vector<128x128xf32>
    %cst_71 = arith.constant dense<0.000000e+00> : vector<16x128xf32>
    %71 = tpu.matmul %56, %70, %cst_71 {dimension_numbers = #tpu.dot_dimension_numbers<[1], [0], [0], [1], [0, 0, 1, 1], [], []>} : vector<16x128xf32>, vector<128x128xf32>, vector<16x128xf32> -> vector<16x128xf32>
    %c0_72 = arith.constant 0 : index
    %c0_73 = arith.constant 0 : index
    %72 = vector.load %arg28[%c0_72, %c0_73] : memref<1x128xf32, #tpu.memory_space<vmem>>, vector<1x128xf32>
    %73 = vector.broadcast %72 : vector<1x128xf32> to vector<16x128xf32>
    %74 = arith.addf %71, %73 : vector<16x128xf32>
    %cst_74 = arith.constant dense<0.000000e+00> : vector<16x128xf32>
    %75 = tpu.matmul %3, %45, %cst_74 {dimension_numbers = #tpu.dot_dimension_numbers<[1], [0], [0], [1], [0, 0, 1, 1], [], []>} : vector<16x16xf32>, vector<16x128xf32>, vector<16x128xf32> -> vector<16x128xf32>
    %c0_75 = arith.constant 0 : index
    %c0_76 = arith.constant 0 : index
    %76 = vector.load %arg15[%c0_75, %c0_76] : memref<128x128xf32, #tpu.memory_space<vmem>>, vector<128x128xf32>
    %cst_77 = arith.constant dense<0.000000e+00> : vector<16x128xf32>
    %77 = tpu.matmul %75, %76, %cst_77 {dimension_numbers = #tpu.dot_dimension_numbers<[1], [0], [0], [1], [0, 0, 1, 1], [], []>} : vector<16x128xf32>, vector<128x128xf32>, vector<16x128xf32> -> vector<16x128xf32>
    %78 = arith.addf %74, %77 : vector<16x128xf32>
    %cst_78 = arith.constant 0.000000e+00 : f32
    %79 = vector.broadcast %cst_78 : f32 to vector<8x128xf32>
    %c0_79 = arith.constant 0 : index
    %c0_80 = arith.constant 0 : index
    %80 = vector.load %arg3[%c0_79, %c0_80] : memref<16x128xf32, #tpu.memory_space<vmem>>, vector<16x128xf32>
    %cst_81 = arith.constant 0.000000e+00 : f32
    %81 = vector.broadcast %cst_81 : f32 to vector<8x128xf32>
    %82 = vector.extract_strided_slice %80 {offsets = [0, 0], sizes = [16, 1], strides = [1, 1]} : vector<16x128xf32> to vector<16x1xf32>
    %cst_82 = arith.constant 0.000000e+00 : f32
    %83 = vector.broadcast %cst_82 : f32 to vector<16x1xf32>
    %84 = arith.cmpf ogt, %82, %83 : vector<16x1xf32>
    %cst_83 = arith.constant -3.000000e+38 : f32
    %85 = vector.shape_cast %84 : vector<16x1xi1> to vector<16x1xi1>
    %86 = vector.broadcast %85 : vector<16x1xi1> to vector<16x128xi1>
    %87 = vector.broadcast %cst_83 : f32 to vector<16x128xf32>
    %88 = arith.select %86, %69, %87 : vector<16x128xi1>, vector<16x128xf32>
    %cst_84 = arith.constant dense<0xFF800000> : vector<128xf32>
    %89 = vector.multi_reduction <maximumf>, %88, %cst_84 [0] : vector<16x128xf32> to vector<128xf32>
    %90 = vector.shape_cast %89 : vector<128xf32> to vector<1x128xf32>
    %cst_85 = arith.constant dense<0.000000e+00> : vector<1xf32>
    %91 = vector.multi_reduction <add>, %82, %cst_85 [0] : vector<16x1xf32> to vector<1xf32>
    %92 = vector.shape_cast %91 : vector<1xf32> to vector<1x1xf32>
    %cst_86 = arith.constant 0.000000e+00 : f32
    %93 = vector.broadcast %cst_86 : f32 to vector<1x1xf32>
    %94 = arith.cmpf ogt, %92, %93 : vector<1x1xf32>
    %cst_87 = arith.constant 0.000000e+00 : f32
    %95 = vector.shape_cast %94 : vector<1x1xi1> to vector<1x1xi1>
    %96 = vector.broadcast %95 : vector<1x1xi1> to vector<1x128xi1>
    %97 = vector.broadcast %cst_87 : f32 to vector<1x128xf32>
    %98 = arith.select %96, %90, %97 : vector<1x128xi1>, vector<1x128xf32>
    %99 = tpu.iota {dimensions = array<i32: 0>} : vector<8x128xi32>
    %c0_i32 = arith.constant 0 : i32
    %100 = vector.broadcast %c0_i32 : i32 to vector<8x128xi32>
    %101 = arith.cmpi eq, %99, %100 : vector<8x128xi32>
    %102 = vector.shape_cast %98 : vector<1x128xf32> to vector<1x128xf32>
    %103 = vector.broadcast %102 : vector<1x128xf32> to vector<8x128xf32>
    %104 = arith.select %101, %103, %81 : vector<8x128xi1>, vector<8x128xf32>
    %105 = vector.extract_strided_slice %80 {offsets = [0, 1], sizes = [16, 1], strides = [1, 1]} : vector<16x128xf32> to vector<16x1xf32>
    %cst_88 = arith.constant 0.000000e+00 : f32
    %106 = vector.broadcast %cst_88 : f32 to vector<16x1xf32>
    %107 = arith.cmpf ogt, %105, %106 : vector<16x1xf32>
    %cst_89 = arith.constant -3.000000e+38 : f32
    %108 = vector.shape_cast %107 : vector<16x1xi1> to vector<16x1xi1>
    %109 = vector.broadcast %108 : vector<16x1xi1> to vector<16x128xi1>
    %110 = vector.broadcast %cst_89 : f32 to vector<16x128xf32>
    %111 = arith.select %109, %69, %110 : vector<16x128xi1>, vector<16x128xf32>
    %cst_90 = arith.constant dense<0xFF800000> : vector<128xf32>
    %112 = vector.multi_reduction <maximumf>, %111, %cst_90 [0] : vector<16x128xf32> to vector<128xf32>
    %113 = vector.shape_cast %112 : vector<128xf32> to vector<1x128xf32>
    %cst_91 = arith.constant dense<0.000000e+00> : vector<1xf32>
    %114 = vector.multi_reduction <add>, %105, %cst_91 [0] : vector<16x1xf32> to vector<1xf32>
    %115 = vector.shape_cast %114 : vector<1xf32> to vector<1x1xf32>
    %cst_92 = arith.constant 0.000000e+00 : f32
    %116 = vector.broadcast %cst_92 : f32 to vector<1x1xf32>
    %117 = arith.cmpf ogt, %115, %116 : vector<1x1xf32>
    %cst_93 = arith.constant 0.000000e+00 : f32
    %118 = vector.shape_cast %117 : vector<1x1xi1> to vector<1x1xi1>
    %119 = vector.broadcast %118 : vector<1x1xi1> to vector<1x128xi1>
    %120 = vector.broadcast %cst_93 : f32 to vector<1x128xf32>
    %121 = arith.select %119, %113, %120 : vector<1x128xi1>, vector<1x128xf32>
    %122 = tpu.iota {dimensions = array<i32: 0>} : vector<8x128xi32>
    %c1_i32 = arith.constant 1 : i32
    %123 = vector.broadcast %c1_i32 : i32 to vector<8x128xi32>
    %124 = arith.cmpi eq, %122, %123 : vector<8x128xi32>
    %125 = vector.shape_cast %121 : vector<1x128xf32> to vector<1x128xf32>
    %126 = vector.broadcast %125 : vector<1x128xf32> to vector<8x128xf32>
    %127 = arith.select %124, %126, %104 : vector<8x128xi1>, vector<8x128xf32>
    %c0_94 = arith.constant 0 : index
    %c0_95 = arith.constant 0 : index
    %128 = vector.load %arg29[%c0_94, %c0_95] : memref<128x128xf32, #tpu.memory_space<vmem>>, vector<128x128xf32>
    %c0_96 = arith.constant 0 : index
    %c0_97 = arith.constant 0 : index
    %129 = vector.load %arg30[%c0_96, %c0_97] : memref<1x128xf32, #tpu.memory_space<vmem>>, vector<1x128xf32>
    %c0_98 = arith.constant 0 : index
    %c0_99 = arith.constant 0 : index
    %130 = vector.load %arg31[%c0_98, %c0_99] : memref<128x128xf32, #tpu.memory_space<vmem>>, vector<128x128xf32>
    %cst_100 = arith.constant dense<0.000000e+00> : vector<8x128xf32>
    %131 = tpu.matmul %127, %128, %cst_100 {dimension_numbers = #tpu.dot_dimension_numbers<[1], [0], [0], [1], [0, 0, 1, 1], [], []>} : vector<8x128xf32>, vector<128x128xf32>, vector<8x128xf32> -> vector<8x128xf32>
    %132 = vector.broadcast %129 : vector<1x128xf32> to vector<8x128xf32>
    %133 = arith.addf %131, %132 : vector<8x128xf32>
    %cst_101 = arith.constant 0.000000e+00 : f32
    %134 = vector.broadcast %cst_101 : f32 to vector<8x128xf32>
    %135 = arith.maximumf %133, %134 : vector<8x128xf32>
    %cst_102 = arith.constant dense<0.000000e+00> : vector<8x128xf32>
    %136 = tpu.matmul %135, %130, %cst_102 {dimension_numbers = #tpu.dot_dimension_numbers<[1], [0], [0], [1], [0, 0, 1, 1], [], []>} : vector<8x128xf32>, vector<128x128xf32>, vector<8x128xf32> -> vector<8x128xf32>
    %137 = arith.addf %79, %136 : vector<8x128xf32>
    %c0_103 = arith.constant 0 : index
    %c0_104 = arith.constant 0 : index
    %138 = vector.load %arg4[%c0_103, %c0_104] : memref<16x128xf32, #tpu.memory_space<vmem>>, vector<16x128xf32>
    %cst_105 = arith.constant 0.000000e+00 : f32
    %139 = vector.broadcast %cst_105 : f32 to vector<8x128xf32>
    %140 = vector.extract_strided_slice %138 {offsets = [0, 0], sizes = [16, 1], strides = [1, 1]} : vector<16x128xf32> to vector<16x1xf32>
    %cst_106 = arith.constant 0.000000e+00 : f32
    %141 = vector.broadcast %cst_106 : f32 to vector<16x1xf32>
    %142 = arith.cmpf ogt, %140, %141 : vector<16x1xf32>
    %cst_107 = arith.constant -3.000000e+38 : f32
    %143 = vector.shape_cast %142 : vector<16x1xi1> to vector<16x1xi1>
    %144 = vector.broadcast %143 : vector<16x1xi1> to vector<16x128xi1>
    %145 = vector.broadcast %cst_107 : f32 to vector<16x128xf32>
    %146 = arith.select %144, %78, %145 : vector<16x128xi1>, vector<16x128xf32>
    %cst_108 = arith.constant dense<0xFF800000> : vector<128xf32>
    %147 = vector.multi_reduction <maximumf>, %146, %cst_108 [0] : vector<16x128xf32> to vector<128xf32>
    %148 = vector.shape_cast %147 : vector<128xf32> to vector<1x128xf32>
    %cst_109 = arith.constant dense<0.000000e+00> : vector<1xf32>
    %149 = vector.multi_reduction <add>, %140, %cst_109 [0] : vector<16x1xf32> to vector<1xf32>
    %150 = vector.shape_cast %149 : vector<1xf32> to vector<1x1xf32>
    %cst_110 = arith.constant 0.000000e+00 : f32
    %151 = vector.broadcast %cst_110 : f32 to vector<1x1xf32>
    %152 = arith.cmpf ogt, %150, %151 : vector<1x1xf32>
    %cst_111 = arith.constant 0.000000e+00 : f32
    %153 = vector.shape_cast %152 : vector<1x1xi1> to vector<1x1xi1>
    %154 = vector.broadcast %153 : vector<1x1xi1> to vector<1x128xi1>
    %155 = vector.broadcast %cst_111 : f32 to vector<1x128xf32>
    %156 = arith.select %154, %148, %155 : vector<1x128xi1>, vector<1x128xf32>
    %157 = tpu.iota {dimensions = array<i32: 0>} : vector<8x128xi32>
    %c0_i32_112 = arith.constant 0 : i32
    %158 = vector.broadcast %c0_i32_112 : i32 to vector<8x128xi32>
    %159 = arith.cmpi eq, %157, %158 : vector<8x128xi32>
    %160 = vector.shape_cast %156 : vector<1x128xf32> to vector<1x128xf32>
    %161 = vector.broadcast %160 : vector<1x128xf32> to vector<8x128xf32>
    %162 = arith.select %159, %161, %139 : vector<8x128xi1>, vector<8x128xf32>
    %163 = vector.extract_strided_slice %138 {offsets = [0, 1], sizes = [16, 1], strides = [1, 1]} : vector<16x128xf32> to vector<16x1xf32>
    %cst_113 = arith.constant 0.000000e+00 : f32
    %164 = vector.broadcast %cst_113 : f32 to vector<16x1xf32>
    %165 = arith.cmpf ogt, %163, %164 : vector<16x1xf32>
    %cst_114 = arith.constant -3.000000e+38 : f32
    %166 = vector.shape_cast %165 : vector<16x1xi1> to vector<16x1xi1>
    %167 = vector.broadcast %166 : vector<16x1xi1> to vector<16x128xi1>
    %168 = vector.broadcast %cst_114 : f32 to vector<16x128xf32>
    %169 = arith.select %167, %78, %168 : vector<16x128xi1>, vector<16x128xf32>
    %cst_115 = arith.constant dense<0xFF800000> : vector<128xf32>
    %170 = vector.multi_reduction <maximumf>, %169, %cst_115 [0] : vector<16x128xf32> to vector<128xf32>
    %171 = vector.shape_cast %170 : vector<128xf32> to vector<1x128xf32>
    %cst_116 = arith.constant dense<0.000000e+00> : vector<1xf32>
    %172 = vector.multi_reduction <add>, %163, %cst_116 [0] : vector<16x1xf32> to vector<1xf32>
    %173 = vector.shape_cast %172 : vector<1xf32> to vector<1x1xf32>
    %cst_117 = arith.constant 0.000000e+00 : f32
    %174 = vector.broadcast %cst_117 : f32 to vector<1x1xf32>
    %175 = arith.cmpf ogt, %173, %174 : vector<1x1xf32>
    %cst_118 = arith.constant 0.000000e+00 : f32
    %176 = vector.shape_cast %175 : vector<1x1xi1> to vector<1x1xi1>
    %177 = vector.broadcast %176 : vector<1x1xi1> to vector<1x128xi1>
    %178 = vector.broadcast %cst_118 : f32 to vector<1x128xf32>
    %179 = arith.select %177, %171, %178 : vector<1x128xi1>, vector<1x128xf32>
    %180 = tpu.iota {dimensions = array<i32: 0>} : vector<8x128xi32>
    %c1_i32_119 = arith.constant 1 : i32
    %181 = vector.broadcast %c1_i32_119 : i32 to vector<8x128xi32>
    %182 = arith.cmpi eq, %180, %181 : vector<8x128xi32>
    %183 = vector.shape_cast %179 : vector<1x128xf32> to vector<1x128xf32>
    %184 = vector.broadcast %183 : vector<1x128xf32> to vector<8x128xf32>
    %185 = arith.select %182, %184, %162 : vector<8x128xi1>, vector<8x128xf32>
    %c0_120 = arith.constant 0 : index
    %c0_121 = arith.constant 0 : index
    %186 = vector.load %arg32[%c0_120, %c0_121] : memref<128x128xf32, #tpu.memory_space<vmem>>, vector<128x128xf32>
    %c0_122 = arith.constant 0 : index
    %c0_123 = arith.constant 0 : index
    %187 = vector.load %arg33[%c0_122, %c0_123] : memref<1x128xf32, #tpu.memory_space<vmem>>, vector<1x128xf32>
    %c0_124 = arith.constant 0 : index
    %c0_125 = arith.constant 0 : index
    %188 = vector.load %arg34[%c0_124, %c0_125] : memref<128x128xf32, #tpu.memory_space<vmem>>, vector<128x128xf32>
    %cst_126 = arith.constant dense<0.000000e+00> : vector<8x128xf32>
    %189 = tpu.matmul %185, %186, %cst_126 {dimension_numbers = #tpu.dot_dimension_numbers<[1], [0], [0], [1], [0, 0, 1, 1], [], []>} : vector<8x128xf32>, vector<128x128xf32>, vector<8x128xf32> -> vector<8x128xf32>
    %190 = vector.broadcast %187 : vector<1x128xf32> to vector<8x128xf32>
    %191 = arith.addf %189, %190 : vector<8x128xf32>
    %cst_127 = arith.constant 0.000000e+00 : f32
    %192 = vector.broadcast %cst_127 : f32 to vector<8x128xf32>
    %193 = arith.maximumf %191, %192 : vector<8x128xf32>
    %cst_128 = arith.constant dense<0.000000e+00> : vector<8x128xf32>
    %194 = tpu.matmul %193, %188, %cst_128 {dimension_numbers = #tpu.dot_dimension_numbers<[1], [0], [0], [1], [0, 0, 1, 1], [], []>} : vector<8x128xf32>, vector<128x128xf32>, vector<8x128xf32> -> vector<8x128xf32>
    %195 = arith.addf %137, %194 : vector<8x128xf32>
    %c0_129 = arith.constant 0 : index
    %c0_130 = arith.constant 0 : index
    %196 = vector.load %arg35[%c0_129, %c0_130] : memref<1x128xf32, #tpu.memory_space<vmem>>, vector<1x128xf32>
    %197 = vector.broadcast %196 : vector<1x128xf32> to vector<8x128xf32>
    %198 = arith.addf %195, %197 : vector<8x128xf32>
    %c0_131 = arith.constant 0 : index
    %c0_132 = arith.constant 0 : index
    %199 = vector.load %arg36[%c0_131, %c0_132] : memref<8x128xf32, #tpu.memory_space<vmem>>, vector<8x128xf32>
    tpu.vector_store %arg36[%c0_131, %c0_132], %198 {strides = array<i32>} : memref<8x128xf32, #tpu.memory_space<vmem>>, vector<8x128xf32>,
    return
  }
  func.func @transform_0(%arg0: i32) -> (i32, i32) {
    %c0_i32 = arith.constant 0 : i32
    %c0_i32_0 = arith.constant 0 : i32
    %c0_i32_1 = arith.constant 0 : i32
    return %c0_i32, %c0_i32_0 : i32, i32
  }
  func.func @transform_1(%arg0: i32) -> (i32, i32) {
    %c0_i32 = arith.constant 0 : i32
    %c0_i32_0 = arith.constant 0 : i32
    %c0_i32_1 = arith.constant 0 : i32
    return %c0_i32, %c0_i32_0 : i32, i32
  }
  func.func @transform_2(%arg0: i32) -> (i32, i32) {
    %c0_i32 = arith.constant 0 : i32
    %c0_i32_0 = arith.constant 0 : i32
    %c0_i32_1 = arith.constant 0 : i32
    return %c0_i32, %c0_i32_0 : i32, i32
  }
  func.func @transform_3(%arg0: i32) -> (i32, i32) {
    %c0_i32 = arith.constant 0 : i32
    %c0_i32_0 = arith.constant 0 : i32
    %c0_i32_1 = arith.constant 0 : i32
    return %c0_i32, %c0_i32_0 : i32, i32
  }
  func.func @transform_4(%arg0: i32) -> (i32, i32) {
    %c0_i32 = arith.constant 0 : i32
    %c0_i32_0 = arith.constant 0 : i32
    %c0_i32_1 = arith.constant 0 : i32
    return %c0_i32, %c0_i32_0 : i32, i32
  }
  func.func @transform_5(%arg0: i32) -> (i32, i32) {
    %c0_i32 = arith.constant 0 : i32
    %c0_i32_0 = arith.constant 0 : i32
    %c0_i32_1 = arith.constant 0 : i32
    return %c0_i32, %c0_i32_0 : i32, i32
  }
  func.func @transform_6(%arg0: i32) -> (i32, i32) {
    %c0_i32 = arith.constant 0 : i32
    %c0_i32_0 = arith.constant 0 : i32
    %c0_i32_1 = arith.constant 0 : i32
    return %c0_i32, %c0_i32_0 : i32, i32
  }
  func.func @transform_7(%arg0: i32) -> (i32, i32) {
    %c0_i32 = arith.constant 0 : i32
    %c0_i32_0 = arith.constant 0 : i32
    %c0_i32_1 = arith.constant 0 : i32
    return %c0_i32, %c0_i32_0 : i32, i32
  }
  func.func @transform_8(%arg0: i32) -> (i32, i32) {
    %c0_i32 = arith.constant 0 : i32
    %c0_i32_0 = arith.constant 0 : i32
    %c0_i32_1 = arith.constant 0 : i32
    return %c0_i32, %c0_i32_0 : i32, i32
  }
  func.func @transform_9(%arg0: i32) -> (i32, i32) {
    %c0_i32 = arith.constant 0 : i32
    %c0_i32_0 = arith.constant 0 : i32
    %c0_i32_1 = arith.constant 0 : i32
    return %c0_i32, %c0_i32_0 : i32, i32
  }
  func.func @transform_10(%arg0: i32) -> (i32, i32) {
    %c0_i32 = arith.constant 0 : i32
    %c0_i32_0 = arith.constant 0 : i32
    %c0_i32_1 = arith.constant 0 : i32
    return %c0_i32, %c0_i32_0 : i32, i32
  }
  func.func @transform_11(%arg0: i32) -> (i32, i32) {
    %c0_i32 = arith.constant 0 : i32
    %c0_i32_0 = arith.constant 0 : i32
    %c0_i32_1 = arith.constant 0 : i32
    return %c0_i32, %c0_i32_0 : i32, i32
  }
  func.func @transform_12(%arg0: i32) -> (i32, i32) {
    %c0_i32 = arith.constant 0 : i32
    %c0_i32_0 = arith.constant 0 : i32
    %c0_i32_1 = arith.constant 0 : i32
    return %c0_i32, %c0_i32_0 : i32, i32
  }
  func.func @transform_13(%arg0: i32) -> (i32, i32) {
    %c0_i32 = arith.constant 0 : i32
    %c0_i32_0 = arith.constant 0 : i32
    %c0_i32_1 = arith.constant 0 : i32
    return %c0_i32, %c0_i32_0 : i32, i32
  }
  func.func @transform_14(%arg0: i32) -> (i32, i32) {
    %c0_i32 = arith.constant 0 : i32
    %c0_i32_0 = arith.constant 0 : i32
    %c0_i32_1 = arith.constant 0 : i32
    return %c0_i32, %c0_i32_0 : i32, i32
  }
  func.func @transform_15(%arg0: i32) -> (i32, i32) {
    %c0_i32 = arith.constant 0 : i32
    %c0_i32_0 = arith.constant 0 : i32
    %c0_i32_1 = arith.constant 0 : i32
    return %c0_i32, %c0_i32_0 : i32, i32
  }
  func.func @transform_16(%arg0: i32) -> (i32, i32) {
    %c0_i32 = arith.constant 0 : i32
    %c0_i32_0 = arith.constant 0 : i32
    %c0_i32_1 = arith.constant 0 : i32
    return %c0_i32, %c0_i32_0 : i32, i32
  }
  func.func @transform_17(%arg0: i32) -> (i32, i32) {
    %c0_i32 = arith.constant 0 : i32
    %c0_i32_0 = arith.constant 0 : i32
    %c0_i32_1 = arith.constant 0 : i32
    return %c0_i32, %c0_i32_0 : i32, i32
  }
  func.func @transform_18(%arg0: i32) -> (i32, i32) {
    %c0_i32 = arith.constant 0 : i32
    %c0_i32_0 = arith.constant 0 : i32
    %c0_i32_1 = arith.constant 0 : i32
    return %c0_i32, %c0_i32_0 : i32, i32
  }
  func.func @transform_19(%arg0: i32) -> (i32, i32) {
    %c0_i32 = arith.constant 0 : i32
    %c0_i32_0 = arith.constant 0 : i32
    %c0_i32_1 = arith.constant 0 : i32
    return %c0_i32, %c0_i32_0 : i32, i32
  }
  func.func @transform_20(%arg0: i32) -> (i32, i32) {
    %c0_i32 = arith.constant 0 : i32
    %c0_i32_0 = arith.constant 0 : i32
    %c0_i32_1 = arith.constant 0 : i32
    return %c0_i32, %c0_i32_0 : i32, i32
  }
  func.func @transform_21(%arg0: i32) -> (i32, i32) {
    %c0_i32 = arith.constant 0 : i32
    %c0_i32_0 = arith.constant 0 : i32
    %c0_i32_1 = arith.constant 0 : i32
    return %c0_i32, %c0_i32_0 : i32, i32
  }
  func.func @transform_22(%arg0: i32) -> (i32, i32) {
    %c0_i32 = arith.constant 0 : i32
    %c0_i32_0 = arith.constant 0 : i32
    %c0_i32_1 = arith.constant 0 : i32
    return %c0_i32, %c0_i32_0 : i32, i32
  }
  func.func @transform_23(%arg0: i32) -> (i32, i32) {
    %c0_i32 = arith.constant 0 : i32
    %c0_i32_0 = arith.constant 0 : i32
    %c0_i32_1 = arith.constant 0 : i32
    return %c0_i32, %c0_i32_0 : i32, i32
  }
  func.func @transform_24(%arg0: i32) -> (i32, i32) {
    %c0_i32 = arith.constant 0 : i32
    %c0_i32_0 = arith.constant 0 : i32
    %c0_i32_1 = arith.constant 0 : i32
    return %c0_i32, %c0_i32_0 : i32, i32
  }
  func.func @transform_25(%arg0: i32) -> (i32, i32) {
    %c0_i32 = arith.constant 0 : i32
    %c0_i32_0 = arith.constant 0 : i32
    %c0_i32_1 = arith.constant 0 : i32
    return %c0_i32, %c0_i32_0 : i32, i32
  }
  func.func @transform_26(%arg0: i32) -> (i32, i32) {
    %c0_i32 = arith.constant 0 : i32
    %c0_i32_0 = arith.constant 0 : i32
    %c0_i32_1 = arith.constant 0 : i32
    return %c0_i32, %c0_i32_0 : i32, i32
  }
  func.func @transform_27(%arg0: i32) -> (i32, i32) {
    %c0_i32 = arith.constant 0 : i32
    %c0_i32_0 = arith.constant 0 : i32
    %c0_i32_1 = arith.constant 0 : i32
    return %c0_i32, %c0_i32_0 : i32, i32
  }
  func.func @transform_28(%arg0: i32) -> (i32, i32) {
    %c0_i32 = arith.constant 0 : i32
    %c0_i32_0 = arith.constant 0 : i32
    %c0_i32_1 = arith.constant 0 : i32
    return %c0_i32, %c0_i32_0 : i32, i32
  }
  func.func @transform_29(%arg0: i32) -> (i32, i32) {
    %c0_i32 = arith.constant 0 : i32
    %c0_i32_0 = arith.constant 0 : i32
    %c0_i32_1 = arith.constant 0 : i32
    return %c0_i32, %c0_i32_0 : i32, i32
  }
  func.func @transform_30(%arg0: i32) -> (i32, i32) {
    %c0_i32 = arith.constant 0 : i32
    %c0_i32_0 = arith.constant 0 : i32
    %c0_i32_1 = arith.constant 0 : i32
    return %c0_i32, %c0_i32_0 : i32, i32
  }
  func.func @transform_31(%arg0: i32) -> (i32, i32) {
    %c0_i32 = arith.constant 0 : i32
    %c0_i32_0 = arith.constant 0 : i32
    %c0_i32_1 = arith.constant 0 : i32
    return %c0_i32, %c0_i32_0 : i32, i32
  }
  func.func @transform_32(%arg0: i32) -> (i32, i32) {
    %c0_i32 = arith.constant 0 : i32
    %c0_i32_0 = arith.constant 0 : i32
    %c0_i32_1 = arith.constant 0 : i32
    return %c0_i32, %c0_i32_0 : i32, i32
  }
  func.func @transform_33(%arg0: i32) -> (i32, i32) {
    %c0_i32 = arith.constant 0 : i32
    %c0_i32_0 = arith.constant 0 : i32
    %c0_i32_1 = arith.constant 0 : i32
    return %c0_i32, %c0_i32_0 : i32, i32
  }
  func.func @transform_34(%arg0: i32) -> (i32, i32) {
    %c0_i32 = arith.constant 0 : i32
    %c0_i32_0 = arith.constant 0 : i32
    %c0_i32_1 = arith.constant 0 : i32
    return %c0_i32, %c0_i32_0 : i32, i32
  }
  func.func @transform_35(%arg0: i32) -> (i32, i32) {
    %c0_i32 = arith.constant 0 : i32
    %c0_i32_0 = arith.constant 0 : i32
    %c0_i32_1 = arith.constant 0 : i32
    return %c0_i32, %c0_i32_0 : i32, i32
  }
}

</mosaic_0001>

<llo_original>
// kernel: tpu_custom_call.1
$region0: #{tpu_custom_call.1}
  #allocation0 [shape = 'u32[]', space=smem, size = 0x4, offset = 0x4, fixed_abs, tag = 'smem constant byte address 0x4 - core index']
  #allocation1 [shape = 'u32[144,128]{1,0:T(1,128)}', space=vmem, size = 0x12000, scoped, tag = 'internal scratch']
  %s0 = inlined_call_operand.smem [shape: u32[36], index: -1, kind: input, shape index: {}]
  %s1 = sld [smem:[%s0]]
  %s2 = scalar_lea.smem %s0, 1
  %s3 = sld [smem:[%s2]]
  %s4 = scalar_lea.smem %s0, 2
  %s5 = sld [smem:[%s4]]
  %s6 = scalar_lea.smem %s0, 3
  %s7 = sld [smem:[%s6]]
  %s8 = scalar_lea.smem %s0, 4
  %s9 = sld [smem:[%s8]]
  %s10 = scalar_lea.smem %s0, 5
  %s11 = sld [smem:[%s10]]
  %s12 = scalar_lea.smem %s0, 6
  %s13 = sld [smem:[%s12]]
  %s14 = scalar_lea.smem %s0, 7
  %s15 = sld [smem:[%s14]]
  %s16 = scalar_lea.smem %s0, 8
  %s17 = sld [smem:[%s16]]
  %s18 = scalar_lea.smem %s0, 9
  %s19 = sld [smem:[%s18]]
  %s20 = scalar_lea.smem %s0, 10
  %s21 = sld [smem:[%s20]]
  %s22 = scalar_lea.smem %s0, 11
  %s23 = sld [smem:[%s22]]
  %s24 = scalar_lea.smem %s0, 12
  %s25 = sld [smem:[%s24]]
  %s26 = scalar_lea.smem %s0, 13
  %s27 = sld [smem:[%s26]]
  %s28 = scalar_lea.smem %s0, 14
  %s29 = sld [smem:[%s28]]
  %s30 = scalar_lea.smem %s0, 15
  %s31 = sld [smem:[%s30]]
  %s32 = scalar_lea.smem %s0, 16
  %s33 = sld [smem:[%s32]]
  %s34 = scalar_lea.smem %s0, 17
  %s35 = sld [smem:[%s34]]
  %s36 = scalar_lea.smem %s0, 18
  %s37 = sld [smem:[%s36]]
  %s38 = scalar_lea.smem %s0, 19
  %s39 = sld [smem:[%s38]]
  %s40 = scalar_lea.smem %s0, 20
  %s41 = sld [smem:[%s40]]
  %s42 = scalar_lea.smem %s0, 21
  %s43 = sld [smem:[%s42]]
  %s44 = scalar_lea.smem %s0, 22
  %s45 = sld [smem:[%s44]]
  %s46 = scalar_lea.smem %s0, 23
  %s47 = sld [smem:[%s46]]
  %s48 = scalar_lea.smem %s0, 24
  %s49 = sld [smem:[%s48]]
  %s50 = scalar_lea.smem %s0, 25
  %s51 = sld [smem:[%s50]]
  %s52 = scalar_lea.smem %s0, 26
  %s53 = sld [smem:[%s52]]
  %s54 = scalar_lea.smem %s0, 27
  %s55 = sld [smem:[%s54]]
  %s56 = scalar_lea.smem %s0, 28
  %s57 = sld [smem:[%s56]]
  %s58 = scalar_lea.smem %s0, 29
  %s59 = sld [smem:[%s58]]
  %s60 = scalar_lea.smem %s0, 30
  %s61 = sld [smem:[%s60]]
  %s62 = scalar_lea.smem %s0, 31
  %s63 = sld [smem:[%s62]]
  %s64 = scalar_lea.smem %s0, 32
  %s65 = sld [smem:[%s64]]
  %s66 = scalar_lea.smem %s0, 33
  %s67 = sld [smem:[%s66]]
  %s68 = scalar_lea.smem %s0, 34
  %s69 = sld [smem:[%s68]]
  %s70 = scalar_lea.smem %s0, 35
  %s71 = sld [smem:[%s70]]
  %s72 = sld [smem:[#allocation0]]
  $region250: #{tpu_custom_call.1} parent=0
    _
  %s74 = ssub.s32 1, %s72
  %s75 = scalar_select 0, %s74, %s72
  $region1: #{tpu_custom_call.1} parent=0
    #allocation2 [shape = 'u8[8192]{0}', space=vmem, size = 0x2000, scoped, tag = 'input window, operand 0, single buffered']
    #allocation3 [shape = 's32[1]{0}', space=sflag, size = 0x4, scoped, tag = 'scoped memory for tpu_custom_call.1']
    #allocation4 [shape = 's32[1]{0}', space=sflag, size = 0x4, scoped, tag = 'scoped memory for tpu_custom_call.1']
    #allocation5 [shape = 'u8[8192]{0}', space=vmem, size = 0x2000, scoped, tag = 'input window, operand 1, single buffered']
    #allocation6 [shape = 's32[1]{0}', space=sflag, size = 0x4, scoped, tag = 'scoped memory for tpu_custom_call.1']
    #allocation7 [shape = 'u8[8192]{0}', space=vmem, size = 0x2000, scoped, tag = 'input window, operand 2, single buffered']
    #allocation8 [shape = 'u8[8192]{0}', space=vmem, size = 0x2000, scoped, tag = 'input window, operand 3, single buffered']
    #allocation9 [shape = 's32[1]{0}', space=sflag, size = 0x4, scoped, tag = 'scoped memory for tpu_custom_call.1']
    #allocation10 [shape = 'u8[8192]{0}', space=vmem, size = 0x2000, scoped, tag = 'input window, operand 4, single buffered']
    #allocation11 [shape = 'u8[8192]{0}', space=vmem, size = 0x2000, scoped, tag = 'input window, operand 6, single buffered']
    #allocation12 [shape = 's32[1]{0}', space=sflag, size = 0x4, scoped, tag = 'scoped memory for tpu_custom_call.1']
    #allocation13 [shape = 'u8[65536]{0}', space=vmem, size = 0x10000, scoped, tag = 'input window, operand 7, single buffered']
    #allocation14 [shape = 'u8[65536]{0}', space=vmem, size = 0x10000, scoped, tag = 'input window, operand 8, single buffered']
    #allocation15 [shape = 's32[1]{0}', space=sflag, size = 0x4, scoped, tag = 'scoped memory for tpu_custom_call.1']
    #allocation16 [shape = 'u8[65536]{0}', space=vmem, size = 0x10000, scoped, tag = 'input window, operand 9, single buffered']
    #allocation17 [shape = 'u8[65536]{0}', space=vmem, size = 0x10000, scoped, tag = 'input window, operand 10, single buffered']
    #allocation18 [shape = 's32[1]{0}', space=sflag, size = 0x4, scoped, tag = 'scoped memory for tpu_custom_call.1']
    #allocation19 [shape = 'u8[65536]{0}', space=vmem, size = 0x10000, scoped, tag = 'input window, operand 11, single buffered']
    #allocation20 [shape = 'u8[65536]{0}', space=vmem, size = 0x10000, scoped, tag = 'input window, operand 12, single buffered']
    #allocation21 [shape = 's32[1]{0}', space=sflag, size = 0x4, scoped, tag = 'scoped memory for tpu_custom_call.1']
    #allocation22 [shape = 'u8[65536]{0}', space=vmem, size = 0x10000, scoped, tag = 'input window, operand 13, single buffered']
    #allocation23 [shape = 'u8[65536]{0}', space=vmem, size = 0x10000, scoped, tag = 'input window, operand 14, single buffered']
    #allocation24 [shape = 's32[1]{0}', space=sflag, size = 0x4, scoped, tag = 'scoped memory for tpu_custom_call.1']
    #allocation25 [shape = 'u8[65536]{0}', space=vmem, size = 0x10000, scoped, tag = 'input window, operand 15, single buffered']
    #allocation26 [shape = 'u8[65536]{0}', space=vmem, size = 0x10000, scoped, tag = 'input window, operand 16, single buffered']
    #allocation27 [shape = 's32[1]{0}', space=sflag, size = 0x4, scoped, tag = 'scoped memory for tpu_custom_call.1']
    #allocation28 [shape = 'u8[65536]{0}', space=vmem, size = 0x10000, scoped, tag = 'input window, operand 17, single buffered']
    #allocation29 [shape = 'u8[65536]{0}', space=vmem, size = 0x10000, scoped, tag = 'input window, operand 18, single buffered']
    #allocation30 [shape = 's32[1]{0}', space=sflag, size = 0x4, scoped, tag = 'scoped memory for tpu_custom_call.1']
    #allocation31 [shape = 'u8[65536]{0}', space=vmem, size = 0x10000, scoped, tag = 'input window, operand 19, single buffered']
    #allocation32 [shape = 'u8[65536]{0}', space=vmem, size = 0x10000, scoped, tag = 'input window, operand 20, single buffered']
    #allocation33 [shape = 's32[1]{0}', space=sflag, size = 0x4, scoped, tag = 'scoped memory for tpu_custom_call.1']
    #allocation34 [shape = 'u8[65536]{0}', space=vmem, size = 0x10000, scoped, tag = 'input window, operand 21, single buffered']
    #allocation35 [shape = 'u8[65536]{0}', space=vmem, size = 0x10000, scoped, tag = 'input window, operand 28, single buffered']
    #allocation36 [shape = 's32[1]{0}', space=sflag, size = 0x4, scoped, tag = 'scoped memory for tpu_custom_call.1']
    #allocation37 [shape = 'u8[65536]{0}', space=vmem, size = 0x10000, scoped, tag = 'input window, operand 30, single buffered']
    #allocation38 [shape = 'u8[65536]{0}', space=vmem, size = 0x10000, scoped, tag = 'input window, operand 31, single buffered']
    #allocation39 [shape = 's32[1]{0}', space=sflag, size = 0x4, scoped, tag = 'scoped memory for tpu_custom_call.1']
    #allocation40 [shape = 'u8[65536]{0}', space=vmem, size = 0x10000, scoped, tag = 'input window, operand 33, single buffered']
    #allocation41 [shape = 'u8[4096]{0}', space=vmem, size = 0x1000, scoped, tag = 'output window, operand 0, single buffered']
    %76 = vsyncpa [#allocation3], 0
    %77 = vsyncpa [#allocation6], 0
    %78 = vsyncpa [#allocation9], 0
    %79 = vsyncpa [#allocation12], 0
    %80 = vsyncpa [#allocation15], 0
    %81 = vsyncpa [#allocation18], 0
    %82 = vsyncpa [#allocation21], 0
    %83 = vsyncpa [#allocation24], 0
    %84 = vsyncpa [#allocation27], 0
    %85 = vsyncpa [#allocation30], 0
    %86 = vsyncpa [#allocation33], 0
    %87 = vsyncpa [#allocation36], 0
    %88 = vsyncpa [#allocation39], 0
    %89 = vsyncpa [#allocation4], 0
    // Predicated region
    $region2: #{tpu_custom_call.1} parent=1 // pred_check
      _
    $region3: #{tpu_custom_call.1} parent=1 // pred_check_branch
      %91 = sbr.rel (0) target = $region5
    $region4: #{tpu_custom_call.1} parent=1 // pred_region
      %s93 = ssub.s32 256, 256
      %94 = vsyncadd [#allocation3], %s93
      %s95 = sshll.u32 [#allocation2], 4
      %s96 = int_to_ptr.vmem [resolvable:$true] %s95
      %101 = dma.hbm_to_vmem [thread:$0]  %s1, 256, %s96, [#allocation3], 128, 128, 8
    $region5: #{tpu_custom_call.1} parent=1 // pred_fallthru
      _
    // Predicated region
    $region6: #{tpu_custom_call.1} parent=1 // pred_check
      _
    $region7: #{tpu_custom_call.1} parent=1 // pred_check_branch
      %103 = sbr.rel (0) target = $region9
    $region8: #{tpu_custom_call.1} parent=1 // pred_region
      %s105 = ssub.s32 256, 256
      %106 = vsyncadd [#allocation6], %s105
      %s107 = sshll.u32 [#allocation5], 4
      %s108 = int_to_ptr.vmem [resolvable:$true] %s107
      %113 = dma.hbm_to_vmem [thread:$0]  %s3, 256, %s108, [#allocation6], 128, 128, 8
    $region9: #{tpu_custom_call.1} parent=1 // pred_fallthru
      _
    // Predicated region
    $region10: #{tpu_custom_call.1} parent=1 // pred_check
      _
    $region11: #{tpu_custom_call.1} parent=1 // pred_check_branch
      %115 = sbr.rel (0) target = $region13
    $region12: #{tpu_custom_call.1} parent=1 // pred_region
      %s117 = ssub.s32 256, 256
      %118 = vsyncadd [#allocation6], %s117
      %s119 = sshll.u32 [#allocation7], 4
      %s120 = int_to_ptr.vmem [resolvable:$true] %s119
      %125 = dma.hbm_to_vmem [thread:$0]  %s5, 256, %s120, [#allocation6], 128, 128, 8
    $region13: #{tpu_custom_call.1} parent=1 // pred_fallthru
      _
    // Predicated region
    $region14: #{tpu_custom_call.1} parent=1 // pred_check
      _
    $region15: #{tpu_custom_call.1} parent=1 // pred_check_branch
      %127 = sbr.rel (0) target = $region17
    $region16: #{tpu_custom_call.1} parent=1 // pred_region
      %s129 = ssub.s32 256, 256
      %130 = vsyncadd [#allocation9], %s129
      %s131 = sshll.u32 [#allocation8], 4
      %s132 = int_to_ptr.vmem [resolvable:$true] %s131
      %137 = dma.hbm_to_vmem [thread:$0]  %s7, 256, %s132, [#allocation9], 128, 128, 8
    $region17: #{tpu_custom_call.1} parent=1 // pred_fallthru
      _
    // Predicated region
    $region18: #{tpu_custom_call.1} parent=1 // pred_check
      _
    $region19: #{tpu_custom_call.1} parent=1 // pred_check_branch
      %139 = sbr.rel (0) target = $region21
    $region20: #{tpu_custom_call.1} parent=1 // pred_region
      %s141 = ssub.s32 256, 256
      %142 = vsyncadd [#allocation9], %s141
      %s143 = sshll.u32 [#allocation10], 4
      %s144 = int_to_ptr.vmem [resolvable:$true] %s143
      %149 = dma.hbm_to_vmem [thread:$0]  %s9, 256, %s144, [#allocation9], 128, 128, 8
    $region21: #{tpu_custom_call.1} parent=1 // pred_fallthru
      _
    // Predicated region
    $region22: #{tpu_custom_call.1} parent=1 // pred_check
      _
    $region23: #{tpu_custom_call.1} parent=1 // pred_check_branch
      %151 = sbr.rel (0) target = $region25
    $region24: #{tpu_custom_call.1} parent=1 // pred_region
      _
    $region25: #{tpu_custom_call.1} parent=1 // pred_fallthru
      _
    // Predicated region
    $region26: #{tpu_custom_call.1} parent=1 // pred_check
      _
    $region27: #{tpu_custom_call.1} parent=1 // pred_check_branch
      %153 = sbr.rel (0) target = $region29
    $region28: #{tpu_custom_call.1} parent=1 // pred_region
      %s155 = ssub.s32 256, 256
      %156 = vsyncadd [#allocation12], %s155
      %s157 = sshll.u32 [#allocation11], 4
      %s158 = int_to_ptr.vmem [resolvable:$true] %s157
      %163 = dma.hbm_to_vmem [thread:$0]  %s13, 256, %s158, [#allocation12], 128, 128, 8
    $region29: #{tpu_custom_call.1} parent=1 // pred_fallthru
      _
    // Predicated region
    $region30: #{tpu_custom_call.1} parent=1 // pred_check
      _
    $region31: #{tpu_custom_call.1} parent=1 // pred_check_branch
      %165 = sbr.rel (0) target = $region33
    $region32: #{tpu_custom_call.1} parent=1 // pred_region
      %s167 = ssub.s32 2048, 2048
      %168 = vsyncadd [#allocation12], %s167
      %s169 = sshll.u32 [#allocation13], 4
      %s170 = int_to_ptr.vmem [resolvable:$true] %s169
      %175 = dma.hbm_to_vmem [thread:$0]  %s15, 2048, %s170, [#allocation12], 128, 128, 8
    $region33: #{tpu_custom_call.1} parent=1 // pred_fallthru
      _
    // Predicated region
    $region34: #{tpu_custom_call.1} parent=1 // pred_check
      _
    $region35: #{tpu_custom_call.1} parent=1 // pred_check_branch
      %177 = sbr.rel (0) target = $region37
    $region36: #{tpu_custom_call.1} parent=1 // pred_region
      %s179 = ssub.s32 2048, 2048
      %180 = vsyncadd [#allocation15], %s179
      %s181 = sshll.u32 [#allocation14], 4
      %s182 = int_to_ptr.vmem [resolvable:$true] %s181
      %187 = dma.hbm_to_vmem [thread:$0]  %s17, 2048, %s182, [#allocation15], 128, 128, 8
    $region37: #{tpu_custom_call.1} parent=1 // pred_fallthru
      _
    // Predicated region
    $region38: #{tpu_custom_call.1} parent=1 // pred_check
      _
    $region39: #{tpu_custom_call.1} parent=1 // pred_check_branch
      %189 = sbr.rel (0) target = $region41
    $region40: #{tpu_custom_call.1} parent=1 // pred_region
      %s191 = ssub.s32 2048, 2048
      %192 = vsyncadd [#allocation15], %s191
      %s193 = sshll.u32 [#allocation16], 4
      %s194 = int_to_ptr.vmem [resolvable:$true] %s193
      %199 = dma.hbm_to_vmem [thread:$0]  %s19, 2048, %s194, [#allocation15], 128, 128, 8
    $region41: #{tpu_custom_call.1} parent=1 // pred_fallthru
      _
    // Predicated region
    $region42: #{tpu_custom_call.1} parent=1 // pred_check
      _
    $region43: #{tpu_custom_call.1} parent=1 // pred_check_branch
      %201 = sbr.rel (0) target = $region45
    $region44: #{tpu_custom_call.1} parent=1 // pred_region
      %s203 = ssub.s32 2048, 2048
      %204 = vsyncadd [#allocation18], %s203
      %s205 = sshll.u32 [#allocation17], 4
      %s206 = int_to_ptr.vmem [resolvable:$true] %s205
      %211 = dma.hbm_to_vmem [thread:$0]  %s21, 2048, %s206, [#allocation18], 128, 128, 8
    $region45: #{tpu_custom_call.1} parent=1 // pred_fallthru
      _
    // Predicated region
    $region46: #{tpu_custom_call.1} parent=1 // pred_check
      _
    $region47: #{tpu_custom_call.1} parent=1 // pred_check_branch
      %213 = sbr.rel (0) target = $region49
    $region48: #{tpu_custom_call.1} parent=1 // pred_region
      %s215 = ssub.s32 2048, 2048
      %216 = vsyncadd [#allocation18], %s215
      %s217 = sshll.u32 [#allocation19], 4
      %s218 = int_to_ptr.vmem [resolvable:$true] %s217
      %223 = dma.hbm_to_vmem [thread:$0]  %s23, 2048, %s218, [#allocation18], 128, 128, 8
    $region49: #{tpu_custom_call.1} parent=1 // pred_fallthru
      _
    // Predicated region
    $region50: #{tpu_custom_call.1} parent=1 // pred_check
      _
    $region51: #{tpu_custom_call.1} parent=1 // pred_check_branch
      %225 = sbr.rel (0) target = $region53
    $region52: #{tpu_custom_call.1} parent=1 // pred_region
      %s227 = ssub.s32 2048, 2048
      %228 = vsyncadd [#allocation21], %s227
      %s229 = sshll.u32 [#allocation20], 4
      %s230 = int_to_ptr.vmem [resolvable:$true] %s229
      %235 = dma.hbm_to_vmem [thread:$0]  %s25, 2048, %s230, [#allocation21], 128, 128, 8
    $region53: #{tpu_custom_call.1} parent=1 // pred_fallthru
      _
    // Predicated region
    $region54: #{tpu_custom_call.1} parent=1 // pred_check
      _
    $region55: #{tpu_custom_call.1} parent=1 // pred_check_branch
      %237 = sbr.rel (0) target = $region57
    $region56: #{tpu_custom_call.1} parent=1 // pred_region
      %s239 = ssub.s32 2048, 2048
      %240 = vsyncadd [#allocation21], %s239
      %s241 = sshll.u32 [#allocation22], 4
      %s242 = int_to_ptr.vmem [resolvable:$true] %s241
      %247 = dma.hbm_to_vmem [thread:$0]  %s27, 2048, %s242, [#allocation21], 128, 128, 8
    $region57: #{tpu_custom_call.1} parent=1 // pred_fallthru
      _
    // Predicated region
    $region58: #{tpu_custom_call.1} parent=1 // pred_check
      _
    $region59: #{tpu_custom_call.1} parent=1 // pred_check_branch
      %249 = sbr.rel (0) target = $region61
    $region60: #{tpu_custom_call.1} parent=1 // pred_region
      %s251 = ssub.s32 2048, 2048
      %252 = vsyncadd [#allocation24], %s251
      %s253 = sshll.u32 [#allocation23], 4
      %s254 = int_to_ptr.vmem [resolvable:$true] %s253
      %259 = dma.hbm_to_vmem [thread:$0]  %s29, 2048, %s254, [#allocation24], 128, 128, 8
    $region61: #{tpu_custom_call.1} parent=1 // pred_fallthru
      _
    // Predicated region
    $region62: #{tpu_custom_call.1} parent=1 // pred_check
      _
    $region63: #{tpu_custom_call.1} parent=1 // pred_check_branch
      %261 = sbr.rel (0) target = $region65
    $region64: #{tpu_custom_call.1} parent=1 // pred_region
      %s263 = ssub.s32 2048, 2048
      %264 = vsyncadd [#allocation24], %s263
      %s265 = sshll.u32 [#allocation25], 4
      %s266 = int_to_ptr.vmem [resolvable:$true] %s265
      %271 = dma.hbm_to_vmem [thread:$0]  %s31, 2048, %s266, [#allocation24], 128, 128, 8
    $region65: #{tpu_custom_call.1} parent=1 // pred_fallthru
      _
    // Predicated region
    $region66: #{tpu_custom_call.1} parent=1 // pred_check
      _
    $region67: #{tpu_custom_call.1} parent=1 // pred_check_branch
      %273 = sbr.rel (0) target = $region69
    $region68: #{tpu_custom_call.1} parent=1 // pred_region
      %s275 = ssub.s32 2048, 2048
      %276 = vsyncadd [#allocation27], %s275
      %s277 = sshll.u32 [#allocation26], 4
      %s278 = int_to_ptr.vmem [resolvable:$true] %s277
      %283 = dma.hbm_to_vmem [thread:$0]  %s33, 2048, %s278, [#allocation27], 128, 128, 8
    $region69: #{tpu_custom_call.1} parent=1 // pred_fallthru
      _
    // Predicated region
    $region70: #{tpu_custom_call.1} parent=1 // pred_check
      _
    $region71: #{tpu_custom_call.1} parent=1 // pred_check_branch
      %285 = sbr.rel (0) target = $region73
    $region72: #{tpu_custom_call.1} parent=1 // pred_region
      %s287 = ssub.s32 2048, 2048
      %288 = vsyncadd [#allocation27], %s287
      %s289 = sshll.u32 [#allocation28], 4
      %s290 = int_to_ptr.vmem [resolvable:$true] %s289
      %295 = dma.hbm_to_vmem [thread:$0]  %s35, 2048, %s290, [#allocation27], 128, 128, 8
    $region73: #{tpu_custom_call.1} parent=1 // pred_fallthru
      _
    // Predicated region
    $region74: #{tpu_custom_call.1} parent=1 // pred_check
      _
    $region75: #{tpu_custom_call.1} parent=1 // pred_check_branch
      %297 = sbr.rel (0) target = $region77
    $region76: #{tpu_custom_call.1} parent=1 // pred_region
      %s299 = ssub.s32 2048, 2048
      %300 = vsyncadd [#allocation30], %s299
      %s301 = sshll.u32 [#allocation29], 4
      %s302 = int_to_ptr.vmem [resolvable:$true] %s301
      %307 = dma.hbm_to_vmem [thread:$0]  %s37, 2048, %s302, [#allocation30], 128, 128, 8
    $region77: #{tpu_custom_call.1} parent=1 // pred_fallthru
      _
    // Predicated region
    $region78: #{tpu_custom_call.1} parent=1 // pred_check
      _
    $region79: #{tpu_custom_call.1} parent=1 // pred_check_branch
      %309 = sbr.rel (0) target = $region81
    $region80: #{tpu_custom_call.1} parent=1 // pred_region
      %s311 = ssub.s32 2048, 2048
      %312 = vsyncadd [#allocation30], %s311
      %s313 = sshll.u32 [#allocation31], 4
      %s314 = int_to_ptr.vmem [resolvable:$true] %s313
      %319 = dma.hbm_to_vmem [thread:$0]  %s39, 2048, %s314, [#allocation30], 128, 128, 8
    $region81: #{tpu_custom_call.1} parent=1 // pred_fallthru
      _
    // Predicated region
    $region82: #{tpu_custom_call.1} parent=1 // pred_check
      _
    $region83: #{tpu_custom_call.1} parent=1 // pred_check_branch
      %321 = sbr.rel (0) target = $region85
    $region84: #{tpu_custom_call.1} parent=1 // pred_region
      %s323 = ssub.s32 2048, 2048
      %324 = vsyncadd [#allocation33], %s323
      %s325 = sshll.u32 [#allocation32], 4
      %s326 = int_to_ptr.vmem [resolvable:$true] %s325
      %331 = dma.hbm_to_vmem [thread:$0]  %s41, 2048, %s326, [#allocation33], 128, 128, 8
    $region85: #{tpu_custom_call.1} parent=1 // pred_fallthru
      _
    // Predicated region
    $region86: #{tpu_custom_call.1} parent=1 // pred_check
      _
    $region87: #{tpu_custom_call.1} parent=1 // pred_check_branch
      %333 = sbr.rel (0) target = $region89
    $region88: #{tpu_custom_call.1} parent=1 // pred_region
      %s335 = ssub.s32 2048, 2048
      %336 = vsyncadd [#allocation33], %s335
      %s337 = sshll.u32 [#allocation34], 4
      %s338 = int_to_ptr.vmem [resolvable:$true] %s337
      %343 = dma.hbm_to_vmem [thread:$0]  %s43, 2048, %s338, [#allocation33], 128, 128, 8
    $region89: #{tpu_custom_call.1} parent=1 // pred_fallthru
      _
    // Predicated region
    $region90: #{tpu_custom_call.1} parent=1 // pred_check
      _
    $region91: #{tpu_custom_call.1} parent=1 // pred_check_branch
      %345 = sbr.rel (0) target = $region93
    $region92: #{tpu_custom_call.1} parent=1 // pred_region
      _
    $region93: #{tpu_custom_call.1} parent=1 // pred_fallthru
      _
    // Predicated region
    $region94: #{tpu_custom_call.1} parent=1 // pred_check
      _
    $region95: #{tpu_custom_call.1} parent=1 // pred_check_branch
      %347 = sbr.rel (0) target = $region97
    $region96: #{tpu_custom_call.1} parent=1 // pred_region
      _
    $region97: #{tpu_custom_call.1} parent=1 // pred_fallthru
      _
    // Predicated region
    $region98: #{tpu_custom_call.1} parent=1 // pred_check
      _
    $region99: #{tpu_custom_call.1} parent=1 // pred_check_branch
      %349 = sbr.rel (0) target = $region101
    $region100: #{tpu_custom_call.1} parent=1 // pred_region
      _
    $region101: #{tpu_custom_call.1} parent=1 // pred_fallthru
      _
    // Predicated region
    $region102: #{tpu_custom_call.1} parent=1 // pred_check
      _
    $region103: #{tpu_custom_call.1} parent=1 // pred_check_branch
      %351 = sbr.rel (0) target = $region105
    $region104: #{tpu_custom_call.1} parent=1 // pred_region
      _
    $region105: #{tpu_custom_call.1} parent=1 // pred_fallthru
      _
    // Predicated region
    $region106: #{tpu_custom_call.1} parent=1 // pred_check
      _
    $region107: #{tpu_custom_call.1} parent=1 // pred_check_branch
      %353 = sbr.rel (0) target = $region109
    $region108: #{tpu_custom_call.1} parent=1 // pred_region
      _
    $region109: #{tpu_custom_call.1} parent=1 // pred_fallthru
      _
    // Predicated region
    $region110: #{tpu_custom_call.1} parent=1 // pred_check
      _
    $region111: #{tpu_custom_call.1} parent=1 // pred_check_branch
      %355 = sbr.rel (0) target = $region113
    $region112: #{tpu_custom_call.1} parent=1 // pred_region
      _
    $region113: #{tpu_custom_call.1} parent=1 // pred_fallthru
      _
    // Predicated region
    $region114: #{tpu_custom_call.1} parent=1 // pred_check
      _
    $region115: #{tpu_custom_call.1} parent=1 // pred_check_branch
      %357 = sbr.rel (0) target = $region117
    $region116: #{tpu_custom_call.1} parent=1 // pred_region
      %s359 = ssub.s32 2048, 2048
      %360 = vsyncadd [#allocation36], %s359
      %s361 = sshll.u32 [#allocation35], 4
      %s362 = int_to_ptr.vmem [resolvable:$true] %s361
      %367 = dma.hbm_to_vmem [thread:$0]  %s57, 2048, %s362, [#allocation36], 128, 128, 8
    $region117: #{tpu_custom_call.1} parent=1 // pred_fallthru
      _
    // Predicated region
    $region118: #{tpu_custom_call.1} parent=1 // pred_check
      _
    $region119: #{tpu_custom_call.1} parent=1 // pred_check_branch
      %369 = sbr.rel (0) target = $region121
    $region120: #{tpu_custom_call.1} parent=1 // pred_region
      _
    $region121: #{tpu_custom_call.1} parent=1 // pred_fallthru
      _
    // Predicated region
    $region122: #{tpu_custom_call.1} parent=1 // pred_check
      _
    $region123: #{tpu_custom_call.1} parent=1 // pred_check_branch
      %371 = sbr.rel (0) target = $region125
    $region124: #{tpu_custom_call.1} parent=1 // pred_region
      %s373 = ssub.s32 2048, 2048
      %374 = vsyncadd [#allocation36], %s373
      %s375 = sshll.u32 [#allocation37], 4
      %s376 = int_to_ptr.vmem [resolvable:$true] %s375
      %381 = dma.hbm_to_vmem [thread:$0]  %s61, 2048, %s376, [#allocation36], 128, 128, 8
    $region125: #{tpu_custom_call.1} parent=1 // pred_fallthru
      _
    // Predicated region
    $region126: #{tpu_custom_call.1} parent=1 // pred_check
      _
    $region127: #{tpu_custom_call.1} parent=1 // pred_check_branch
      %383 = sbr.rel (0) target = $region129
    $region128: #{tpu_custom_call.1} parent=1 // pred_region
      %s385 = ssub.s32 2048, 2048
      %386 = vsyncadd [#allocation39], %s385
      %s387 = sshll.u32 [#allocation38], 4
      %s388 = int_to_ptr.vmem [resolvable:$true] %s387
      %393 = dma.hbm_to_vmem [thread:$0]  %s63, 2048, %s388, [#allocation39], 128, 128, 8
    $region129: #{tpu_custom_call.1} parent=1 // pred_fallthru
      _
    // Predicated region
    $region130: #{tpu_custom_call.1} parent=1 // pred_check
      _
    $region131: #{tpu_custom_call.1} parent=1 // pred_check_branch
      %395 = sbr.rel (0) target = $region133
    $region132: #{tpu_custom_call.1} parent=1 // pred_region
      _
    $region133: #{tpu_custom_call.1} parent=1 // pred_fallthru
      _
    // Predicated region
    $region134: #{tpu_custom_call.1} parent=1 // pred_check
      _
    $region135: #{tpu_custom_call.1} parent=1 // pred_check_branch
      %397 = sbr.rel (0) target = $region137
    $region136: #{tpu_custom_call.1} parent=1 // pred_region
      %s399 = ssub.s32 2048, 2048
      %400 = vsyncadd [#allocation39], %s399
      %s401 = sshll.u32 [#allocation40], 4
      %s402 = int_to_ptr.vmem [resolvable:$true] %s401
      %407 = dma.hbm_to_vmem [thread:$0]  %s67, 2048, %s402, [#allocation39], 128, 128, 8
    $region137: #{tpu_custom_call.1} parent=1 // pred_fallthru
      _
    // Predicated region
    $region138: #{tpu_custom_call.1} parent=1 // pred_check
      _
    $region139: #{tpu_custom_call.1} parent=1 // pred_check_branch
      %409 = sbr.rel (0) target = $region141
    $region140: #{tpu_custom_call.1} parent=1 // pred_region
      _
    $region141: #{tpu_custom_call.1} parent=1 // pred_fallthru
      _
    // Predicated region
    $region142: #{tpu_custom_call.1} parent=1 // pred_check
      _
    $region143: #{tpu_custom_call.1} parent=1 // pred_check_branch
      %411 = sbr.rel (0) target = $region145
    $region144: #{tpu_custom_call.1} parent=1 // pred_region
      %412 = dma.done [#allocation3], 256
    $region145: #{tpu_custom_call.1} parent=1 // pred_fallthru
      _
    // Predicated region
    $region146: #{tpu_custom_call.1} parent=1 // pred_check
      _
    $region147: #{tpu_custom_call.1} parent=1 // pred_check_branch
      %414 = sbr.rel (0) target = $region149
    $region148: #{tpu_custom_call.1} parent=1 // pred_region
      %415 = dma.done [#allocation6], 256
    $region149: #{tpu_custom_call.1} parent=1 // pred_fallthru
      _
    // Predicated region
    $region150: #{tpu_custom_call.1} parent=1 // pred_check
      _
    $region151: #{tpu_custom_call.1} parent=1 // pred_check_branch
      %417 = sbr.rel (0) target = $region153
    $region152: #{tpu_custom_call.1} parent=1 // pred_region
      %418 = dma.done [#allocation6], 256
    $region153: #{tpu_custom_call.1} parent=1 // pred_fallthru
      _
    // Predicated region
    $region154: #{tpu_custom_call.1} parent=1 // pred_check
      _
    $region155: #{tpu_custom_call.1} parent=1 // pred_check_branch
      %420 = sbr.rel (0) target = $region157
    $region156: #{tpu_custom_call.1} parent=1 // pred_region
      %421 = dma.done [#allocation9], 256
    $region157: #{tpu_custom_call.1} parent=1 // pred_fallthru
      _
    // Predicated region
    $region158: #{tpu_custom_call.1} parent=1 // pred_check
      _
    $region159: #{tpu_custom_call.1} parent=1 // pred_check_branch
      %423 = sbr.rel (0) target = $region161
    $region160: #{tpu_custom_call.1} parent=1 // pred_region
      %424 = dma.done [#allocation9], 256
    $region161: #{tpu_custom_call.1} parent=1 // pred_fallthru
      _
    // Predicated region
    $region162: #{tpu_custom_call.1} parent=1 // pred_check
      _
    $region163: #{tpu_custom_call.1} parent=1 // pred_check_branch
      %426 = sbr.rel (0) target = $region165
    $region164: #{tpu_custom_call.1} parent=1 // pred_region
      %427 = dma.done [#allocation12], 256
    $region165: #{tpu_custom_call.1} parent=1 // pred_fallthru
      _
    // Predicated region
    $region166: #{tpu_custom_call.1} parent=1 // pred_check
      _
    $region167: #{tpu_custom_call.1} parent=1 // pred_check_branch
      %429 = sbr.rel (0) target = $region169
    $region168: #{tpu_custom_call.1} parent=1 // pred_region
      %430 = dma.done [#allocation12], 2048
    $region169: #{tpu_custom_call.1} parent=1 // pred_fallthru
      _
    // Predicated region
    $region170: #{tpu_custom_call.1} parent=1 // pred_check
      _
    $region171: #{tpu_custom_call.1} parent=1 // pred_check_branch
      %432 = sbr.rel (0) target = $region173
    $region172: #{tpu_custom_call.1} parent=1 // pred_region
      %433 = dma.done [#allocation15], 2048
    $region173: #{tpu_custom_call.1} parent=1 // pred_fallthru
      _
    // Predicated region
    $region174: #{tpu_custom_call.1} parent=1 // pred_check
      _
    $region175: #{tpu_custom_call.1} parent=1 // pred_check_branch
      %435 = sbr.rel (0) target = $region177
    $region176: #{tpu_custom_call.1} parent=1 // pred_region
      %436 = dma.done [#allocation15], 2048
    $region177: #{tpu_custom_call.1} parent=1 // pred_fallthru
      _
    // Predicated region
    $region178: #{tpu_custom_call.1} parent=1 // pred_check
      _
    $region179: #{tpu_custom_call.1} parent=1 // pred_check_branch
      %438 = sbr.rel (0) target = $region181
    $region180: #{tpu_custom_call.1} parent=1 // pred_region
      %439 = dma.done [#allocation18], 2048
    $region181: #{tpu_custom_call.1} parent=1 // pred_fallthru
      _
    // Predicated region
    $region182: #{tpu_custom_call.1} parent=1 // pred_check
      _
    $region183: #{tpu_custom_call.1} parent=1 // pred_check_branch
      %441 = sbr.rel (0) target = $region185
    $region184: #{tpu_custom_call.1} parent=1 // pred_region
      %442 = dma.done [#allocation18], 2048
    $region185: #{tpu_custom_call.1} parent=1 // pred_fallthru
      _
    // Predicated region
    $region186: #{tpu_custom_call.1} parent=1 // pred_check
      _
    $region187: #{tpu_custom_call.1} parent=1 // pred_check_branch
      %444 = sbr.rel (0) target = $region189
    $region188: #{tpu_custom_call.1} parent=1 // pred_region
      %445 = dma.done [#allocation21], 2048
    $region189: #{tpu_custom_call.1} parent=1 // pred_fallthru
      _
    // Predicated region
    $region190: #{tpu_custom_call.1} parent=1 // pred_check
      _
    $region191: #{tpu_custom_call.1} parent=1 // pred_check_branch
      %447 = sbr.rel (0) target = $region193
    $region192: #{tpu_custom_call.1} parent=1 // pred_region
      %448 = dma.done [#allocation21], 2048
    $region193: #{tpu_custom_call.1} parent=1 // pred_fallthru
      _
    // Predicated region
    $region194: #{tpu_custom_call.1} parent=1 // pred_check
      _
    $region195: #{tpu_custom_call.1} parent=1 // pred_check_branch
      %450 = sbr.rel (0) target = $region197
    $region196: #{tpu_custom_call.1} parent=1 // pred_region
      %451 = dma.done [#allocation24], 2048
    $region197: #{tpu_custom_call.1} parent=1 // pred_fallthru
      _
    // Predicated region
    $region198: #{tpu_custom_call.1} parent=1 // pred_check
      _
    $region199: #{tpu_custom_call.1} parent=1 // pred_check_branch
      %453 = sbr.rel (0) target = $region201
    $region200: #{tpu_custom_call.1} parent=1 // pred_region
      %454 = dma.done [#allocation24], 2048
    $region201: #{tpu_custom_call.1} parent=1 // pred_fallthru
      _
    // Predicated region
    $region202: #{tpu_custom_call.1} parent=1 // pred_check
      _
    $region203: #{tpu_custom_call.1} parent=1 // pred_check_branch
      %456 = sbr.rel (0) target = $region205
    $region204: #{tpu_custom_call.1} parent=1 // pred_region
      %457 = dma.done [#allocation27], 2048
    $region205: #{tpu_custom_call.1} parent=1 // pred_fallthru
      _
    // Predicated region
    $region206: #{tpu_custom_call.1} parent=1 // pred_check
      _
    $region207: #{tpu_custom_call.1} parent=1 // pred_check_branch
      %459 = sbr.rel (0) target = $region209
    $region208: #{tpu_custom_call.1} parent=1 // pred_region
      %460 = dma.done [#allocation27], 2048
    $region209: #{tpu_custom_call.1} parent=1 // pred_fallthru
      _
    // Predicated region
    $region210: #{tpu_custom_call.1} parent=1 // pred_check
      _
    $region211: #{tpu_custom_call.1} parent=1 // pred_check_branch
      %462 = sbr.rel (0) target = $region213
    $region212: #{tpu_custom_call.1} parent=1 // pred_region
      %463 = dma.done [#allocation30], 2048
    $region213: #{tpu_custom_call.1} parent=1 // pred_fallthru
      _
    // Predicated region
    $region214: #{tpu_custom_call.1} parent=1 // pred_check
      _
    $region215: #{tpu_custom_call.1} parent=1 // pred_check_branch
      %465 = sbr.rel (0) target = $region217
    $region216: #{tpu_custom_call.1} parent=1 // pred_region
      %466 = dma.done [#allocation30], 2048
    $region217: #{tpu_custom_call.1} parent=1 // pred_fallthru
      _
    // Predicated region
    $region218: #{tpu_custom_call.1} parent=1 // pred_check
      _
    $region219: #{tpu_custom_call.1} parent=1 // pred_check_branch
      %468 = sbr.rel (0) target = $region221
    $region220: #{tpu_custom_call.1} parent=1 // pred_region
      %469 = dma.done [#allocation33], 2048
    $region221: #{tpu_custom_call.1} parent=1 // pred_fallthru
      _
    // Predicated region
    $region222: #{tpu_custom_call.1} parent=1 // pred_check
      _
    $region223: #{tpu_custom_call.1} parent=1 // pred_check_branch
      %471 = sbr.rel (0) target = $region225
    $region224: #{tpu_custom_call.1} parent=1 // pred_region
      %472 = dma.done [#allocation33], 2048
    $region225: #{tpu_custom_call.1} parent=1 // pred_fallthru
      _
    // Predicated region
    $region226: #{tpu_custom_call.1} parent=1 // pred_check
      _
    $region227: #{tpu_custom_call.1} parent=1 // pred_check_branch
      %474 = sbr.rel (0) target = $region229
    $region228: #{tpu_custom_call.1} parent=1 // pred_region
      %475 = dma.done [#allocation36], 2048
    $region229: #{tpu_custom_call.1} parent=1 // pred_fallthru
      _
    // Predicated region
    $region230: #{tpu_custom_call.1} parent=1 // pred_check
      _
    $region231: #{tpu_custom_call.1} parent=1 // pred_check_branch
      %477 = sbr.rel (0) target = $region233
    $region232: #{tpu_custom_call.1} parent=1 // pred_region
      %478 = dma.done [#allocation36], 2048
    $region233: #{tpu_custom_call.1} parent=1 // pred_fallthru
      _
    // Predicated region
    $region234: #{tpu_custom_call.1} parent=1 // pred_check
      _
    $region235: #{tpu_custom_call.1} parent=1 // pred_check_branch
      %480 = sbr.rel (0) target = $region237
    $region236: #{tpu_custom_call.1} parent=1 // pred_region
      %481 = dma.done [#allocation39], 2048
    $region237: #{tpu_custom_call.1} parent=1 // pred_fallthru
      _
    // Predicated region
    $region238: #{tpu_custom_call.1} parent=1 // pred_check
      _
    $region239: #{tpu_custom_call.1} parent=1 // pred_check_branch
      %483 = sbr.rel (0) target = $region241
    $region240: #{tpu_custom_call.1} parent=1 // pred_region
      %484 = dma.done [#allocation39], 2048
    $region241: #{tpu_custom_call.1} parent=1 // pred_fallthru
      _
    %v485 = vld [vmem:[#allocation2] sm:$0xff]
    %v486 = vld [vmem:[#allocation2 + $0x8] sm:$0xff]
    %v487 = vld [vmem:[#allocation5] sm:$0xff]
    %v488 = vld [vmem:[#allocation5 + $0x8] sm:$0xff]
    %v489 = vld [vmem:[#allocation10] sm:$0xff]
    %v490 = vld [vmem:[#allocation10 + $0x8] sm:$0xff]
    %v491 = vld [vmem:[%s11] sm:$0xff]
    %v492 = vld [vmem:[%s11 + $0x8] sm:$0xff]
    %v493 = vld [vmem:[#allocation11] sm:$0xff]
    %v494 = vld [vmem:[#allocation11 + $0x8] sm:$0xff]
    %v495 = vld [vmem:[#allocation26] sm:$0xff]
    %v496 = vld [vmem:[#allocation26 + $0x8] sm:$0xff]
    %v497 = vld [vmem:[#allocation26 + $0x10] sm:$0xff]
    %v498 = vld [vmem:[#allocation26 + $0x18] sm:$0xff]
    %v499 = vld [vmem:[#allocation26 + $0x20] sm:$0xff]
    %v500 = vld [vmem:[#allocation26 + $0x28] sm:$0xff]
    %v501 = vld [vmem:[#allocation26 + $0x30] sm:$0xff]
    %v502 = vld [vmem:[#allocation26 + $0x38] sm:$0xff]
    %v503 = vld [vmem:[#allocation26 + $0x40] sm:$0xff]
    %v504 = vld [vmem:[#allocation26 + $0x48] sm:$0xff]
    %v505 = vld [vmem:[#allocation26 + $0x50] sm:$0xff]
    %v506 = vld [vmem:[#allocation26 + $0x58] sm:$0xff]
    %v507 = vld [vmem:[#allocation26 + $0x60] sm:$0xff]
    %v508 = vld [vmem:[#allocation26 + $0x68] sm:$0xff]
    %v509 = vld [vmem:[#allocation26 + $0x70] sm:$0xff]
    %v510 = vld [vmem:[#allocation26 + $0x78] sm:$0xff]
    %v511 = vld [vmem:[%s45] sm:$0x1]
    %v513 = vlaneseq
    %v514 = vshrl.u32 %v513, 7
    %v515 = vsub.s32 0, %v514
    %v516 = vrot.slane %v511, %v515
    %518 = vmatprep.subr.mxu0 0.0
    %519 = vmatpush1.msra.mxu0 %v495
    %520 = vmatprep.subr.mxu0 0.0
    %521 = vmatpush1.msra.mxu0 %v496
    %522 = vmatprep.subr.mxu0 0.0
    %523 = vmatpush1.msra.mxu0 %v497
    %524 = vmatprep.subr.mxu0 0.0
    %525 = vmatpush1.msra.mxu0 %v498
    %526 = vmatprep.subr.mxu0 0.0
    %527 = vmatpush1.msra.mxu0 %v499
    %528 = vmatprep.subr.mxu0 0.0
    %529 = vmatpush1.msra.mxu0 %v500
    %530 = vmatprep.subr.mxu0 0.0
    %531 = vmatpush1.msra.mxu0 %v501
    %532 = vmatprep.subr.mxu0 0.0
    %533 = vmatpush1.msra.mxu0 %v502
    %534 = vmatprep.subr.mxu0 0.0
    %535 = vmatpush1.msra.mxu0 %v503
    %536 = vmatprep.subr.mxu0 0.0
    %537 = vmatpush1.msra.mxu0 %v504
    %538 = vmatprep.subr.mxu0 0.0
    %539 = vmatpush1.msra.mxu0 %v505
    %540 = vmatprep.subr.mxu0 0.0
    %541 = vmatpush1.msra.mxu0 %v506
    %542 = vmatprep.subr.mxu0 0.0
    %543 = vmatpush1.msra.mxu0 %v507
    %544 = vmatprep.subr.mxu0 0.0
    %545 = vmatpush1.msra.mxu0 %v508
    %546 = vmatprep.subr.mxu0 0.0
    %547 = vmatpush1.msra.mxu0 %v509
    %548 = vmatprep.subr.mxu0 0.0
    %549 = vmatpush1.msra.mxu0 %v510
    %550 = vmatprep.subr.mxu0 0.0
    %551 = vmatpush1.msra.mxu0 0.0
    %552 = vmatprep.subr.mxu0 0.0
    %553 = vmatpush1.msra.mxu0 0.0
    %554 = vmatprep.subr.mxu0 0.0
    %555 = vmatpush1.msra.mxu0 0.0
    %556 = vmatprep.subr.mxu0 0.0
    %557 = vmatpush1.msra.mxu0 0.0
    %558 = vmatprep.subr.mxu0 0.0
    %559 = vmatpush1.msra.mxu0 0.0
    %560 = vmatprep.subr.mxu0 0.0
    %561 = vmatpush1.msra.mxu0 0.0
    %562 = vmatprep.subr.mxu0 0.0
    %563 = vmatpush1.msra.mxu0 0.0
    %564 = vmatprep.subr.mxu0 0.0
    %565 = vmatpush1.msra.mxu0 0.0
    %566 = vmatprep.subr.mxu0 0.0
    %567 = vmatpush1.msra.mxu0 0.0
    %568 = vmatprep.subr.mxu0 0.0
    %569 = vmatpush1.msra.mxu0 0.0
    %570 = vmatprep.subr.mxu0 0.0
    %571 = vmatpush1.msra.mxu0 0.0
    %572 = vmatprep.subr.mxu0 0.0
    %573 = vmatpush1.msra.mxu0 0.0
    %574 = vmatprep.subr.mxu0 0.0
    %575 = vmatpush1.msra.mxu0 0.0
    %576 = vmatprep.subr.mxu0 0.0
    %577 = vmatpush1.msra.mxu0 0.0
    %578 = vmatprep.subr.mxu0 0.0
    %579 = vmatpush1.msra.mxu0 0.0
    %580 = vmatprep.subr.mxu0 0.0
    %581 = vmatpush1.msra.mxu0 0.0
    %582 = vmatprep.mubr.f32.mxu0 0.0
    %583 = vmatmul.mubr.f32.gmra.mrb[0].mxu0 %v485
    %v584 = vpop.f32.mrb[0].mxu0
    %v585 = vadd.f32 %v516, %v584
    %v586 = vpop.f32.mrb[0].mxu0
    %587 = vmatprep.mubr.f32.mxu0 0.0
    %588 = vmatmul.mubr.f32.gmra.mrb[0].mxu0 %v486
    %v589 = vpop.f32.mrb[0].mxu0
    %v590 = vadd.f32 %v516, %v589
    %v591 = vpop.f32.mrb[0].mxu0
    %592 = vdwg.mxu0
    %vm593 = vcmask 130048
    %v595 = vsel %vm593, %v489, 0
    %v598 = vsel %vm593, %v490, 0
    %600 = vmatprep.subr.mxu0 0.0
    %601 = vmatpush1.msra.mxu0 %v485
    %602 = vmatprep.subr.mxu0 0.0
    %603 = vmatpush1.msra.mxu0 %v486
    %604 = vmatprep.subr.mxu0 0.0
    %605 = vmatpush1.msra.mxu0 0.0
    %606 = vmatprep.subr.mxu0 0.0
    %607 = vmatpush1.msra.mxu0 0.0
    %608 = vmatprep.subr.mxu0 0.0
    %609 = vmatpush1.msra.mxu0 0.0
    %610 = vmatprep.subr.mxu0 0.0
    %611 = vmatpush1.msra.mxu0 0.0
    %612 = vmatprep.subr.mxu0 0.0
    %613 = vmatpush1.msra.mxu0 0.0
    %614 = vmatprep.subr.mxu0 0.0
    %615 = vmatpush1.msra.mxu0 0.0
    %616 = vmatprep.subr.mxu0 0.0
    %617 = vmatpush1.msra.mxu0 0.0
    %618 = vmatprep.subr.mxu0 0.0
    %619 = vmatpush1.msra.mxu0 0.0
    %620 = vmatprep.subr.mxu0 0.0
    %621 = vmatpush1.msra.mxu0 0.0
    %622 = vmatprep.subr.mxu0 0.0
    %623 = vmatpush1.msra.mxu0 0.0
    %624 = vmatprep.subr.mxu0 0.0
    %625 = vmatpush1.msra.mxu0 0.0
    %626 = vmatprep.subr.mxu0 0.0
    %627 = vmatpush1.msra.mxu0 0.0
    %628 = vmatprep.subr.mxu0 0.0
    %629 = vmatpush1.msra.mxu0 0.0
    %630 = vmatprep.subr.mxu0 0.0
    %631 = vmatpush1.msra.mxu0 0.0
    %632 = vmatprep.subr.mxu0 0.0
    %633 = vmatpush1.msra.mxu0 0.0
    %634 = vmatprep.subr.mxu0 0.0
    %635 = vmatpush1.msra.mxu0 0.0
    %636 = vmatprep.subr.mxu0 0.0
    %637 = vmatpush1.msra.mxu0 0.0
    %638 = vmatprep.subr.mxu0 0.0
    %639 = vmatpush1.msra.mxu0 0.0
    %640 = vmatprep.subr.mxu0 0.0
    %641 = vmatpush1.msra.mxu0 0.0
    %642 = vmatprep.subr.mxu0 0.0
    %643 = vmatpush1.msra.mxu0 0.0
    %644 = vmatprep.subr.mxu0 0.0
    %645 = vmatpush1.msra.mxu0 0.0
    %646 = vmatprep.subr.mxu0 0.0
    %647 = vmatpush1.msra.mxu0 0.0
    %648 = vmatprep.subr.mxu0 0.0
    %649 = vmatpush1.msra.mxu0 0.0
    %650 = vmatprep.subr.mxu0 0.0
    %651 = vmatpush1.msra.mxu0 0.0
    %652 = vmatprep.subr.mxu0 0.0
    %653 = vmatpush1.msra.mxu0 0.0
    %654 = vmatprep.subr.mxu0 0.0
    %655 = vmatpush1.msra.mxu0 0.0
    %656 = vmatprep.subr.mxu0 0.0
    %657 = vmatpush1.msra.mxu0 0.0
    %658 = vmatprep.subr.mxu0 0.0
    %659 = vmatpush1.msra.mxu0 0.0
    %660 = vmatprep.subr.mxu0 0.0
    %661 = vmatpush1.msra.mxu0 0.0
    %662 = vmatprep.subr.mxu0 0.0
    %663 = vmatpush1.msra.mxu0 0.0
    %664 = vmatprep.mubr.f32.mxu0 0.0
    %665 = vmatmul.mubr.f32.gmra.mrb[0].mxu0 %v595
    %v666 = vpop.f32.mrb[0].mxu0
    %v667 = vadd.f32 0.0, %v666
    %v668 = vpop.f32.mrb[0].mxu0
    %669 = vmatprep.mubr.f32.mxu0 0.0
    %670 = vmatmul.mubr.f32.gmra.mrb[0].mxu0 %v598
    %v671 = vpop.f32.mrb[0].mxu0
    %v672 = vadd.f32 0.0, %v671
    %v673 = vpop.f32.mrb[0].mxu0
    %674 = vdwg.mxu0
    %v675 = vld [vmem:[#allocation13] sm:$0xff]
    %v676 = vld [vmem:[#allocation13 + $0x8] sm:$0xff]
    %v677 = vld [vmem:[#allocation13 + $0x10] sm:$0xff]
    %v678 = vld [vmem:[#allocation13 + $0x18] sm:$0xff]
    %v679 = vld [vmem:[#allocation13 + $0x20] sm:$0xff]
    %v680 = vld [vmem:[#allocation13 + $0x28] sm:$0xff]
    %v681 = vld [vmem:[#allocation13 + $0x30] sm:$0xff]
    %v682 = vld [vmem:[#allocation13 + $0x38] sm:$0xff]
    %v683 = vld [vmem:[#allocation13 + $0x40] sm:$0xff]
    %v684 = vld [vmem:[#allocation13 + $0x48] sm:$0xff]
    %v685 = vld [vmem:[#allocation13 + $0x50] sm:$0xff]
    %v686 = vld [vmem:[#allocation13 + $0x58] sm:$0xff]
    %v687 = vld [vmem:[#allocation13 + $0x60] sm:$0xff]
    %v688 = vld [vmem:[#allocation13 + $0x68] sm:$0xff]
    %v689 = vld [vmem:[#allocation13 + $0x70] sm:$0xff]
    %v690 = vld [vmem:[#allocation13 + $0x78] sm:$0xff]
    %691 = vmatprep.subr.mxu0 0.0
    %692 = vmatpush1.msra.mxu0 %v675
    %693 = vmatprep.subr.mxu0 0.0
    %694 = vmatpush1.msra.mxu0 %v676
    %695 = vmatprep.subr.mxu0 0.0
    %696 = vmatpush1.msra.mxu0 %v677
    %697 = vmatprep.subr.mxu0 0.0
    %698 = vmatpush1.msra.mxu0 %v678
    %699 = vmatprep.subr.mxu0 0.0
    %700 = vmatpush1.msra.mxu0 %v679
    %701 = vmatprep.subr.mxu0 0.0
    %702 = vmatpush1.msra.mxu0 %v680
    %703 = vmatprep.subr.mxu0 0.0
    %704 = vmatpush1.msra.mxu0 %v681
    %705 = vmatprep.subr.mxu0 0.0
    %706 = vmatpush1.msra.mxu0 %v682
    %707 = vmatprep.subr.mxu0 0.0
    %708 = vmatpush1.msra.mxu0 %v683
    %709 = vmatprep.subr.mxu0 0.0
    %710 = vmatpush1.msra.mxu0 %v684
    %711 = vmatprep.subr.mxu0 0.0
    %712 = vmatpush1.msra.mxu0 %v685
    %713 = vmatprep.subr.mxu0 0.0
    %714 = vmatpush1.msra.mxu0 %v686
    %715 = vmatprep.subr.mxu0 0.0
    %716 = vmatpush1.msra.mxu0 %v687
    %717 = vmatprep.subr.mxu0 0.0
    %718 = vmatpush1.msra.mxu0 %v688
    %719 = vmatprep.subr.mxu0 0.0
    %720 = vmatpush1.msra.mxu0 %v689
    %721 = vmatprep.subr.mxu0 0.0
    %722 = vmatpush1.msra.mxu0 %v690
    %723 = vmatprep.subr.mxu0 0.0
    %724 = vmatpush1.msra.mxu0 0.0
    %725 = vmatprep.subr.mxu0 0.0
    %726 = vmatpush1.msra.mxu0 0.0
    %727 = vmatprep.subr.mxu0 0.0
    %728 = vmatpush1.msra.mxu0 0.0
    %729 = vmatprep.subr.mxu0 0.0
    %730 = vmatpush1.msra.mxu0 0.0
    %731 = vmatprep.subr.mxu0 0.0
    %732 = vmatpush1.msra.mxu0 0.0
    %733 = vmatprep.subr.mxu0 0.0
    %734 = vmatpush1.msra.mxu0 0.0
    %735 = vmatprep.subr.mxu0 0.0
    %736 = vmatpush1.msra.mxu0 0.0
    %737 = vmatprep.subr.mxu0 0.0
    %738 = vmatpush1.msra.mxu0 0.0
    %739 = vmatprep.subr.mxu0 0.0
    %740 = vmatpush1.msra.mxu0 0.0
    %741 = vmatprep.subr.mxu0 0.0
    %742 = vmatpush1.msra.mxu0 0.0
    %743 = vmatprep.subr.mxu0 0.0
    %744 = vmatpush1.msra.mxu0 0.0
    %745 = vmatprep.subr.mxu0 0.0
    %746 = vmatpush1.msra.mxu0 0.0
    %747 = vmatprep.subr.mxu0 0.0
    %748 = vmatpush1.msra.mxu0 0.0
    %749 = vmatprep.subr.mxu0 0.0
    %750 = vmatpush1.msra.mxu0 0.0
    %751 = vmatprep.subr.mxu0 0.0
    %752 = vmatpush1.msra.mxu0 0.0
    %753 = vmatprep.subr.mxu0 0.0
    %754 = vmatpush1.msra.mxu0 0.0
    %755 = vmatprep.mubr.f32.mxu0 0.0
    %756 = vmatmul.mubr.f32.gmra.mrb[0].mxu0 %v667
    %v757 = vpop.f32.mrb[0].mxu0
    %v758 = vadd.f32 0.0, %v757
    %v759 = vpop.f32.mrb[0].mxu0
    %760 = vmatprep.mubr.f32.mxu0 0.0
    %761 = vmatmul.mubr.f32.gmra.mrb[0].mxu0 %v672
    %v762 = vpop.f32.mrb[0].mxu0
    %v763 = vadd.f32 0.0, %v762
    %v764 = vpop.f32.mrb[0].mxu0
    %765 = vdwg.mxu0
    %v766 = vadd.f32 %v585, %v758
    %v767 = vadd.f32 %v590, %v763
    %v769 = vsel %vm593, %v493, 0
    %v772 = vsel %vm593, %v494, 0
    %774 = vmatprep.subr.mxu0 0.0
    %775 = vmatpush1.msra.mxu0 %v487
    %776 = vmatprep.subr.mxu0 0.0
    %777 = vmatpush1.msra.mxu0 %v488
    %778 = vmatprep.subr.mxu0 0.0
    %779 = vmatpush1.msra.mxu0 0.0
    %780 = vmatprep.subr.mxu0 0.0
    %781 = vmatpush1.msra.mxu0 0.0
    %782 = vmatprep.subr.mxu0 0.0
    %783 = vmatpush1.msra.mxu0 0.0
    %784 = vmatprep.subr.mxu0 0.0
    %785 = vmatpush1.msra.mxu0 0.0
    %786 = vmatprep.subr.mxu0 0.0
    %787 = vmatpush1.msra.mxu0 0.0
    %788 = vmatprep.subr.mxu0 0.0
    %789 = vmatpush1.msra.mxu0 0.0
    %790 = vmatprep.subr.mxu0 0.0
    %791 = vmatpush1.msra.mxu0 0.0
    %792 = vmatprep.subr.mxu0 0.0
    %793 = vmatpush1.msra.mxu0 0.0
    %794 = vmatprep.subr.mxu0 0.0
    %795 = vmatpush1.msra.mxu0 0.0
    %796 = vmatprep.subr.mxu0 0.0
    %797 = vmatpush1.msra.mxu0 0.0
    %798 = vmatprep.subr.mxu0 0.0
    %799 = vmatpush1.msra.mxu0 0.0
    %800 = vmatprep.subr.mxu0 0.0
    %801 = vmatpush1.msra.mxu0 0.0
    %802 = vmatprep.subr.mxu0 0.0
    %803 = vmatpush1.msra.mxu0 0.0
    %804 = vmatprep.subr.mxu0 0.0
    %805 = vmatpush1.msra.mxu0 0.0
    %806 = vmatprep.subr.mxu0 0.0
    %807 = vmatpush1.msra.mxu0 0.0
    %808 = vmatprep.subr.mxu0 0.0
    %809 = vmatpush1.msra.mxu0 0.0
    %810 = vmatprep.subr.mxu0 0.0
    %811 = vmatpush1.msra.mxu0 0.0
    %812 = vmatprep.subr.mxu0 0.0
    %813 = vmatpush1.msra.mxu0 0.0
    %814 = vmatprep.subr.mxu0 0.0
    %815 = vmatpush1.msra.mxu0 0.0
    %816 = vmatprep.subr.mxu0 0.0
    %817 = vmatpush1.msra.mxu0 0.0
    %818 = vmatprep.subr.mxu0 0.0
    %819 = vmatpush1.msra.mxu0 0.0
    %820 = vmatprep.subr.mxu0 0.0
    %821 = vmatpush1.msra.mxu0 0.0
    %822 = vmatprep.subr.mxu0 0.0
    %823 = vmatpush1.msra.mxu0 0.0
    %824 = vmatprep.subr.mxu0 0.0
    %825 = vmatpush1.msra.mxu0 0.0
    %826 = vmatprep.subr.mxu0 0.0
    %827 = vmatpush1.msra.mxu0 0.0
    %828 = vmatprep.subr.mxu0 0.0
    %829 = vmatpush1.msra.mxu0 0.0
    %830 = vmatprep.subr.mxu0 0.0
    %831 = vmatpush1.msra.mxu0 0.0
    %832 = vmatprep.subr.mxu0 0.0
    %833 = vmatpush1.msra.mxu0 0.0
    %834 = vmatprep.subr.mxu0 0.0
    %835 = vmatpush1.msra.mxu0 0.0
    %836 = vmatprep.subr.mxu0 0.0
    %837 = vmatpush1.msra.mxu0 0.0
    %838 = vmatprep.mubr.f32.mxu0 0.0
    %839 = vmatmul.mubr.f32.gmra.mrb[0].mxu0 %v769
    %v840 = vpop.f32.mrb[0].mxu0
    %v841 = vadd.f32 0.0, %v840
    %v842 = vpop.f32.mrb[0].mxu0
    %843 = vmatprep.mubr.f32.mxu0 0.0
    %844 = vmatmul.mubr.f32.gmra.mrb[0].mxu0 %v772
    %v845 = vpop.f32.mrb[0].mxu0
    %v846 = vadd.f32 0.0, %v845
    %v847 = vpop.f32.mrb[0].mxu0
    %848 = vdwg.mxu0
    %v849 = vld [vmem:[#allocation16] sm:$0xff]
    %v850 = vld [vmem:[#allocation16 + $0x8] sm:$0xff]
    %v851 = vld [vmem:[#allocation16 + $0x10] sm:$0xff]
    %v852 = vld [vmem:[#allocation16 + $0x18] sm:$0xff]
    %v853 = vld [vmem:[#allocation16 + $0x20] sm:$0xff]
    %v854 = vld [vmem:[#allocation16 + $0x28] sm:$0xff]
    %v855 = vld [vmem:[#allocation16 + $0x30] sm:$0xff]
    %v856 = vld [vmem:[#allocation16 + $0x38] sm:$0xff]
    %v857 = vld [vmem:[#allocation16 + $0x40] sm:$0xff]
    %v858 = vld [vmem:[#allocation16 + $0x48] sm:$0xff]
    %v859 = vld [vmem:[#allocation16 + $0x50] sm:$0xff]
    %v860 = vld [vmem:[#allocation16 + $0x58] sm:$0xff]
    %v861 = vld [vmem:[#allocation16 + $0x60] sm:$0xff]
    %v862 = vld [vmem:[#allocation16 + $0x68] sm:$0xff]
    %v863 = vld [vmem:[#allocation16 + $0x70] sm:$0xff]
    %v864 = vld [vmem:[#allocation16 + $0x78] sm:$0xff]
    %865 = vmatprep.subr.mxu0 0.0
    %866 = vmatpush1.msra.mxu0 %v849
    %867 = vmatprep.subr.mxu0 0.0
    %868 = vmatpush1.msra.mxu0 %v850
    %869 = vmatprep.subr.mxu0 0.0
    %870 = vmatpush1.msra.mxu0 %v851
    %871 = vmatprep.subr.mxu0 0.0
    %872 = vmatpush1.msra.mxu0 %v852
    %873 = vmatprep.subr.mxu0 0.0
    %874 = vmatpush1.msra.mxu0 %v853
    %875 = vmatprep.subr.mxu0 0.0
    %876 = vmatpush1.msra.mxu0 %v854
    %877 = vmatprep.subr.mxu0 0.0
    %878 = vmatpush1.msra.mxu0 %v855
    %879 = vmatprep.subr.mxu0 0.0
    %880 = vmatpush1.msra.mxu0 %v856
    %881 = vmatprep.subr.mxu0 0.0
    %882 = vmatpush1.msra.mxu0 %v857
    %883 = vmatprep.subr.mxu0 0.0
    %884 = vmatpush1.msra.mxu0 %v858
    %885 = vmatprep.subr.mxu0 0.0
    %886 = vmatpush1.msra.mxu0 %v859
    %887 = vmatprep.subr.mxu0 0.0
    %888 = vmatpush1.msra.mxu0 %v860
    %889 = vmatprep.subr.mxu0 0.0
    %890 = vmatpush1.msra.mxu0 %v861
    %891 = vmatprep.subr.mxu0 0.0
    %892 = vmatpush1.msra.mxu0 %v862
    %893 = vmatprep.subr.mxu0 0.0
    %894 = vmatpush1.msra.mxu0 %v863
    %895 = vmatprep.subr.mxu0 0.0
    %896 = vmatpush1.msra.mxu0 %v864
    %897 = vmatprep.subr.mxu0 0.0
    %898 = vmatpush1.msra.mxu0 0.0
    %899 = vmatprep.subr.mxu0 0.0
    %900 = vmatpush1.msra.mxu0 0.0
    %901 = vmatprep.subr.mxu0 0.0
    %902 = vmatpush1.msra.mxu0 0.0
    %903 = vmatprep.subr.mxu0 0.0
    %904 = vmatpush1.msra.mxu0 0.0
    %905 = vmatprep.subr.mxu0 0.0
    %906 = vmatpush1.msra.mxu0 0.0
    %907 = vmatprep.subr.mxu0 0.0
    %908 = vmatpush1.msra.mxu0 0.0
    %909 = vmatprep.subr.mxu0 0.0
    %910 = vmatpush1.msra.mxu0 0.0
    %911 = vmatprep.subr.mxu0 0.0
    %912 = vmatpush1.msra.mxu0 0.0
    %913 = vmatprep.subr.mxu0 0.0
    %914 = vmatpush1.msra.mxu0 0.0
    %915 = vmatprep.subr.mxu0 0.0
    %916 = vmatpush1.msra.mxu0 0.0
    %917 = vmatprep.subr.mxu0 0.0
    %918 = vmatpush1.msra.mxu0 0.0
    %919 = vmatprep.subr.mxu0 0.0
    %920 = vmatpush1.msra.mxu0 0.0
    %921 = vmatprep.subr.mxu0 0.0
    %922 = vmatpush1.msra.mxu0 0.0
    %923 = vmatprep.subr.mxu0 0.0
    %924 = vmatpush1.msra.mxu0 0.0
    %925 = vmatprep.subr.mxu0 0.0
    %926 = vmatpush1.msra.mxu0 0.0
    %927 = vmatprep.subr.mxu0 0.0
    %928 = vmatpush1.msra.mxu0 0.0
    %929 = vmatprep.mubr.f32.mxu0 0.0
    %930 = vmatmul.mubr.f32.gmra.mrb[0].mxu0 %v841
    %v931 = vpop.f32.mrb[0].mxu0
    %v932 = vadd.f32 0.0, %v931
    %v933 = vpop.f32.mrb[0].mxu0
    %934 = vmatprep.mubr.f32.mxu0 0.0
    %935 = vmatmul.mubr.f32.gmra.mrb[0].mxu0 %v846
    %v936 = vpop.f32.mrb[0].mxu0
    %v937 = vadd.f32 0.0, %v936
    %v938 = vpop.f32.mrb[0].mxu0
    %939 = vdwg.mxu0
    %v940 = vadd.f32 %v766, %v932
    %v941 = vadd.f32 %v767, %v937
    %v942 = vmax.f32 %v940, 0.0
    %v943 = vmax.f32 %v941, 0.0
    %v944 = vld [vmem:[#allocation28] sm:$0xff]
    %v945 = vld [vmem:[#allocation28 + $0x8] sm:$0xff]
    %v946 = vld [vmem:[#allocation28 + $0x10] sm:$0xff]
    %v947 = vld [vmem:[#allocation28 + $0x18] sm:$0xff]
    %v948 = vld [vmem:[#allocation28 + $0x20] sm:$0xff]
    %v949 = vld [vmem:[#allocation28 + $0x28] sm:$0xff]
    %v950 = vld [vmem:[#allocation28 + $0x30] sm:$0xff]
    %v951 = vld [vmem:[#allocation28 + $0x38] sm:$0xff]
    %v952 = vld [vmem:[#allocation28 + $0x40] sm:$0xff]
    %v953 = vld [vmem:[#allocation28 + $0x48] sm:$0xff]
    %v954 = vld [vmem:[#allocation28 + $0x50] sm:$0xff]
    %v955 = vld [vmem:[#allocation28 + $0x58] sm:$0xff]
    %v956 = vld [vmem:[#allocation28 + $0x60] sm:$0xff]
    %v957 = vld [vmem:[#allocation28 + $0x68] sm:$0xff]
    %v958 = vld [vmem:[#allocation28 + $0x70] sm:$0xff]
    %v959 = vld [vmem:[#allocation28 + $0x78] sm:$0xff]
    %v960 = vld [vmem:[%s47] sm:$0x1]
    %v962 = vlaneseq
    %v963 = vshrl.u32 %v962, 7
    %v964 = vsub.s32 0, %v963
    %v965 = vrot.slane %v960, %v964
    %967 = vmatprep.subr.mxu0 0.0
    %968 = vmatpush1.msra.mxu0 %v944
    %969 = vmatprep.subr.mxu0 0.0
    %970 = vmatpush1.msra.mxu0 %v945
    %971 = vmatprep.subr.mxu0 0.0
    %972 = vmatpush1.msra.mxu0 %v946
    %973 = vmatprep.subr.mxu0 0.0
    %974 = vmatpush1.msra.mxu0 %v947
    %975 = vmatprep.subr.mxu0 0.0
    %976 = vmatpush1.msra.mxu0 %v948
    %977 = vmatprep.subr.mxu0 0.0
    %978 = vmatpush1.msra.mxu0 %v949
    %979 = vmatprep.subr.mxu0 0.0
    %980 = vmatpush1.msra.mxu0 %v950
    %981 = vmatprep.subr.mxu0 0.0
    %982 = vmatpush1.msra.mxu0 %v951
    %983 = vmatprep.subr.mxu0 0.0
    %984 = vmatpush1.msra.mxu0 %v952
    %985 = vmatprep.subr.mxu0 0.0
    %986 = vmatpush1.msra.mxu0 %v953
    %987 = vmatprep.subr.mxu0 0.0
    %988 = vmatpush1.msra.mxu0 %v954
    %989 = vmatprep.subr.mxu0 0.0
    %990 = vmatpush1.msra.mxu0 %v955
    %991 = vmatprep.subr.mxu0 0.0
    %992 = vmatpush1.msra.mxu0 %v956
    %993 = vmatprep.subr.mxu0 0.0
    %994 = vmatpush1.msra.mxu0 %v957
    %995 = vmatprep.subr.mxu0 0.0
    %996 = vmatpush1.msra.mxu0 %v958
    %997 = vmatprep.subr.mxu0 0.0
    %998 = vmatpush1.msra.mxu0 %v959
    %999 = vmatprep.subr.mxu0 0.0
    %1000 = vmatpush1.msra.mxu0 0.0
    %1001 = vmatprep.subr.mxu0 0.0
    %1002 = vmatpush1.msra.mxu0 0.0
    %1003 = vmatprep.subr.mxu0 0.0
    %1004 = vmatpush1.msra.mxu0 0.0
    %1005 = vmatprep.subr.mxu0 0.0
    %1006 = vmatpush1.msra.mxu0 0.0
    %1007 = vmatprep.subr.mxu0 0.0
    %1008 = vmatpush1.msra.mxu0 0.0
    %1009 = vmatprep.subr.mxu0 0.0
    %1010 = vmatpush1.msra.mxu0 0.0
    %1011 = vmatprep.subr.mxu0 0.0
    %1012 = vmatpush1.msra.mxu0 0.0
    %1013 = vmatprep.subr.mxu0 0.0
    %1014 = vmatpush1.msra.mxu0 0.0
    %1015 = vmatprep.subr.mxu0 0.0
    %1016 = vmatpush1.msra.mxu0 0.0
    %1017 = vmatprep.subr.mxu0 0.0
    %1018 = vmatpush1.msra.mxu0 0.0
    %1019 = vmatprep.subr.mxu0 0.0
    %1020 = vmatpush1.msra.mxu0 0.0
    %1021 = vmatprep.subr.mxu0 0.0
    %1022 = vmatpush1.msra.mxu0 0.0
    %1023 = vmatprep.subr.mxu0 0.0
    %1024 = vmatpush1.msra.mxu0 0.0
    %1025 = vmatprep.subr.mxu0 0.0
    %1026 = vmatpush1.msra.mxu0 0.0
    %1027 = vmatprep.subr.mxu0 0.0
    %1028 = vmatpush1.msra.mxu0 0.0
    %1029 = vmatprep.subr.mxu0 0.0
    %1030 = vmatpush1.msra.mxu0 0.0
    %1031 = vmatprep.mubr.f32.mxu0 0.0
    %1032 = vmatmul.mubr.f32.gmra.mrb[0].mxu0 %v487
    %v1033 = vpop.f32.mrb[0].mxu0
    %v1034 = vadd.f32 %v965, %v1033
    %v1035 = vpop.f32.mrb[0].mxu0
    %1036 = vmatprep.mubr.f32.mxu0 0.0
    %1037 = vmatmul.mubr.f32.gmra.mrb[0].mxu0 %v488
    %v1038 = vpop.f32.mrb[0].mxu0
    %v1039 = vadd.f32 %v965, %v1038
    %v1040 = vpop.f32.mrb[0].mxu0
    %1041 = vdwg.mxu0
    %v1043 = vsel %vm593, %v491, 0
    %v1046 = vsel %vm593, %v492, 0
    %1048 = vmatprep.subr.mxu0 0.0
    %1049 = vmatpush1.msra.mxu0 %v485
    %1050 = vmatprep.subr.mxu0 0.0
    %1051 = vmatpush1.msra.mxu0 %v486
    %1052 = vmatprep.subr.mxu0 0.0
    %1053 = vmatpush1.msra.mxu0 0.0
    %1054 = vmatprep.subr.mxu0 0.0
    %1055 = vmatpush1.msra.mxu0 0.0
    %1056 = vmatprep.subr.mxu0 0.0
    %1057 = vmatpush1.msra.mxu0 0.0
    %1058 = vmatprep.subr.mxu0 0.0
    %1059 = vmatpush1.msra.mxu0 0.0
    %1060 = vmatprep.subr.mxu0 0.0
    %1061 = vmatpush1.msra.mxu0 0.0
    %1062 = vmatprep.subr.mxu0 0.0
    %1063 = vmatpush1.msra.mxu0 0.0
    %1064 = vmatprep.subr.mxu0 0.0
    %1065 = vmatpush1.msra.mxu0 0.0
    %1066 = vmatprep.subr.mxu0 0.0
    %1067 = vmatpush1.msra.mxu0 0.0
    %1068 = vmatprep.subr.mxu0 0.0
    %1069 = vmatpush1.msra.mxu0 0.0
    %1070 = vmatprep.subr.mxu0 0.0
    %1071 = vmatpush1.msra.mxu0 0.0
    %1072 = vmatprep.subr.mxu0 0.0
    %1073 = vmatpush1.msra.mxu0 0.0
    %1074 = vmatprep.subr.mxu0 0.0
    %1075 = vmatpush1.msra.mxu0 0.0
    %1076 = vmatprep.subr.mxu0 0.0
    %1077 = vmatpush1.msra.mxu0 0.0
    %1078 = vmatprep.subr.mxu0 0.0
    %1079 = vmatpush1.msra.mxu0 0.0
    %1080 = vmatprep.subr.mxu0 0.0
    %1081 = vmatpush1.msra.mxu0 0.0
    %1082 = vmatprep.subr.mxu0 0.0
    %1083 = vmatpush1.msra.mxu0 0.0
    %1084 = vmatprep.subr.mxu0 0.0
    %1085 = vmatpush1.msra.mxu0 0.0
    %1086 = vmatprep.subr.mxu0 0.0
    %1087 = vmatpush1.msra.mxu0 0.0
    %1088 = vmatprep.subr.mxu0 0.0
    %1089 = vmatpush1.msra.mxu0 0.0
    %1090 = vmatprep.subr.mxu0 0.0
    %1091 = vmatpush1.msra.mxu0 0.0
    %1092 = vmatprep.subr.mxu0 0.0
    %1093 = vmatpush1.msra.mxu0 0.0
    %1094 = vmatprep.subr.mxu0 0.0
    %1095 = vmatpush1.msra.mxu0 0.0
    %1096 = vmatprep.subr.mxu0 0.0
    %1097 = vmatpush1.msra.mxu0 0.0
    %1098 = vmatprep.subr.mxu0 0.0
    %1099 = vmatpush1.msra.mxu0 0.0
    %1100 = vmatprep.subr.mxu0 0.0
    %1101 = vmatpush1.msra.mxu0 0.0
    %1102 = vmatprep.subr.mxu0 0.0
    %1103 = vmatpush1.msra.mxu0 0.0
    %1104 = vmatprep.subr.mxu0 0.0
    %1105 = vmatpush1.msra.mxu0 0.0
    %1106 = vmatprep.subr.mxu0 0.0
    %1107 = vmatpush1.msra.mxu0 0.0
    %1108 = vmatprep.subr.mxu0 0.0
    %1109 = vmatpush1.msra.mxu0 0.0
    %1110 = vmatprep.subr.mxu0 0.0
    %1111 = vmatpush1.msra.mxu0 0.0
    %1112 = vmatprep.mubr.f32.mxu0 0.0
    %1113 = vmatmul.mubr.f32.gmra.mrb[0].mxu0 %v1043
    %v1114 = vpop.f32.mrb[0].mxu0
    %v1115 = vadd.f32 0.0, %v1114
    %v1116 = vpop.f32.mrb[0].mxu0
    %1117 = vmatprep.mubr.f32.mxu0 0.0
    %1118 = vmatmul.mubr.f32.gmra.mrb[0].mxu0 %v1046
    %v1119 = vpop.f32.mrb[0].mxu0
    %v1120 = vadd.f32 0.0, %v1119
    %v1121 = vpop.f32.mrb[0].mxu0
    %1122 = vdwg.mxu0
    %v1123 = vld [vmem:[#allocation14] sm:$0xff]
    %v1124 = vld [vmem:[#allocation14 + $0x8] sm:$0xff]
    %v1125 = vld [vmem:[#allocation14 + $0x10] sm:$0xff]
    %v1126 = vld [vmem:[#allocation14 + $0x18] sm:$0xff]
    %v1127 = vld [vmem:[#allocation14 + $0x20] sm:$0xff]
    %v1128 = vld [vmem:[#allocation14 + $0x28] sm:$0xff]
    %v1129 = vld [vmem:[#allocation14 + $0x30] sm:$0xff]
    %v1130 = vld [vmem:[#allocation14 + $0x38] sm:$0xff]
    %v1131 = vld [vmem:[#allocation14 + $0x40] sm:$0xff]
    %v1132 = vld [vmem:[#allocation14 + $0x48] sm:$0xff]
    %v1133 = vld [vmem:[#allocation14 + $0x50] sm:$0xff]
    %v1134 = vld [vmem:[#allocation14 + $0x58] sm:$0xff]
    %v1135 = vld [vmem:[#allocation14 + $0x60] sm:$0xff]
    %v1136 = vld [vmem:[#allocation14 + $0x68] sm:$0xff]
    %v1137 = vld [vmem:[#allocation14 + $0x70] sm:$0xff]
    %v1138 = vld [vmem:[#allocation14 + $0x78] sm:$0xff]
    %1139 = vmatprep.subr.mxu0 0.0
    %1140 = vmatpush1.msra.mxu0 %v1123
    %1141 = vmatprep.subr.mxu0 0.0
    %1142 = vmatpush1.msra.mxu0 %v1124
    %1143 = vmatprep.subr.mxu0 0.0
    %1144 = vmatpush1.msra.mxu0 %v1125
    %1145 = vmatprep.subr.mxu0 0.0
    %1146 = vmatpush1.msra.mxu0 %v1126
    %1147 = vmatprep.subr.mxu0 0.0
    %1148 = vmatpush1.msra.mxu0 %v1127
    %1149 = vmatprep.subr.mxu0 0.0
    %1150 = vmatpush1.msra.mxu0 %v1128
    %1151 = vmatprep.subr.mxu0 0.0
    %1152 = vmatpush1.msra.mxu0 %v1129
    %1153 = vmatprep.subr.mxu0 0.0
    %1154 = vmatpush1.msra.mxu0 %v1130
    %1155 = vmatprep.subr.mxu0 0.0
    %1156 = vmatpush1.msra.mxu0 %v1131
    %1157 = vmatprep.subr.mxu0 0.0
    %1158 = vmatpush1.msra.mxu0 %v1132
    %1159 = vmatprep.subr.mxu0 0.0
    %1160 = vmatpush1.msra.mxu0 %v1133
    %1161 = vmatprep.subr.mxu0 0.0
    %1162 = vmatpush1.msra.mxu0 %v1134
    %1163 = vmatprep.subr.mxu0 0.0
    %1164 = vmatpush1.msra.mxu0 %v1135
    %1165 = vmatprep.subr.mxu0 0.0
    %1166 = vmatpush1.msra.mxu0 %v1136
    %1167 = vmatprep.subr.mxu0 0.0
    %1168 = vmatpush1.msra.mxu0 %v1137
    %1169 = vmatprep.subr.mxu0 0.0
    %1170 = vmatpush1.msra.mxu0 %v1138
    %1171 = vmatprep.subr.mxu0 0.0
    %1172 = vmatpush1.msra.mxu0 0.0
    %1173 = vmatprep.subr.mxu0 0.0
    %1174 = vmatpush1.msra.mxu0 0.0
    %1175 = vmatprep.subr.mxu0 0.0
    %1176 = vmatpush1.msra.mxu0 0.0
    %1177 = vmatprep.subr.mxu0 0.0
    %1178 = vmatpush1.msra.mxu0 0.0
    %1179 = vmatprep.subr.mxu0 0.0
    %1180 = vmatpush1.msra.mxu0 0.0
    %1181 = vmatprep.subr.mxu0 0.0
    %1182 = vmatpush1.msra.mxu0 0.0
    %1183 = vmatprep.subr.mxu0 0.0
    %1184 = vmatpush1.msra.mxu0 0.0
    %1185 = vmatprep.subr.mxu0 0.0
    %1186 = vmatpush1.msra.mxu0 0.0
    %1187 = vmatprep.subr.mxu0 0.0
    %1188 = vmatpush1.msra.mxu0 0.0
    %1189 = vmatprep.subr.mxu0 0.0
    %1190 = vmatpush1.msra.mxu0 0.0
    %1191 = vmatprep.subr.mxu0 0.0
    %1192 = vmatpush1.msra.mxu0 0.0
    %1193 = vmatprep.subr.mxu0 0.0
    %1194 = vmatpush1.msra.mxu0 0.0
    %1195 = vmatprep.subr.mxu0 0.0
    %1196 = vmatpush1.msra.mxu0 0.0
    %1197 = vmatprep.subr.mxu0 0.0
    %1198 = vmatpush1.msra.mxu0 0.0
    %1199 = vmatprep.subr.mxu0 0.0
    %1200 = vmatpush1.msra.mxu0 0.0
    %1201 = vmatprep.subr.mxu0 0.0
    %1202 = vmatpush1.msra.mxu0 0.0
    %1203 = vmatprep.mubr.f32.mxu0 0.0
    %1204 = vmatmul.mubr.f32.gmra.mrb[0].mxu0 %v1115
    %v1205 = vpop.f32.mrb[0].mxu0
    %v1206 = vadd.f32 0.0, %v1205
    %v1207 = vpop.f32.mrb[0].mxu0
    %1208 = vmatprep.mubr.f32.mxu0 0.0
    %1209 = vmatmul.mubr.f32.gmra.mrb[0].mxu0 %v1120
    %v1210 = vpop.f32.mrb[0].mxu0
    %v1211 = vadd.f32 0.0, %v1210
    %v1212 = vpop.f32.mrb[0].mxu0
    %1213 = vdwg.mxu0
    %v1214 = vadd.f32 %v1034, %v1206
    %v1215 = vadd.f32 %v1039, %v1211
    %v1216 = vmax.f32 %v1214, 0.0
    %v1217 = vmax.f32 %v1215, 0.0
    %v1218 = vld [vmem:[#allocation29] sm:$0xff]
    %v1219 = vld [vmem:[#allocation29 + $0x8] sm:$0xff]
    %v1220 = vld [vmem:[#allocation29 + $0x10] sm:$0xff]
    %v1221 = vld [vmem:[#allocation29 + $0x18] sm:$0xff]
    %v1222 = vld [vmem:[#allocation29 + $0x20] sm:$0xff]
    %v1223 = vld [vmem:[#allocation29 + $0x28] sm:$0xff]
    %v1224 = vld [vmem:[#allocation29 + $0x30] sm:$0xff]
    %v1225 = vld [vmem:[#allocation29 + $0x38] sm:$0xff]
    %v1226 = vld [vmem:[#allocation29 + $0x40] sm:$0xff]
    %v1227 = vld [vmem:[#allocation29 + $0x48] sm:$0xff]
    %v1228 = vld [vmem:[#allocation29 + $0x50] sm:$0xff]
    %v1229 = vld [vmem:[#allocation29 + $0x58] sm:$0xff]
    %v1230 = vld [vmem:[#allocation29 + $0x60] sm:$0xff]
    %v1231 = vld [vmem:[#allocation29 + $0x68] sm:$0xff]
    %v1232 = vld [vmem:[#allocation29 + $0x70] sm:$0xff]
    %v1233 = vld [vmem:[#allocation29 + $0x78] sm:$0xff]
    %v1234 = vld [vmem:[%s49] sm:$0x1]
    %v1236 = vlaneseq
    %v1237 = vshrl.u32 %v1236, 7
    %v1238 = vsub.s32 0, %v1237
    %v1239 = vrot.slane %v1234, %v1238
    %1241 = vmatprep.subr.mxu0 0.0
    %1242 = vmatpush1.msra.mxu0 %v1218
    %1243 = vmatprep.subr.mxu0 0.0
    %1244 = vmatpush1.msra.mxu0 %v1219
    %1245 = vmatprep.subr.mxu0 0.0
    %1246 = vmatpush1.msra.mxu0 %v1220
    %1247 = vmatprep.subr.mxu0 0.0
    %1248 = vmatpush1.msra.mxu0 %v1221
    %1249 = vmatprep.subr.mxu0 0.0
    %1250 = vmatpush1.msra.mxu0 %v1222
    %1251 = vmatprep.subr.mxu0 0.0
    %1252 = vmatpush1.msra.mxu0 %v1223
    %1253 = vmatprep.subr.mxu0 0.0
    %1254 = vmatpush1.msra.mxu0 %v1224
    %1255 = vmatprep.subr.mxu0 0.0
    %1256 = vmatpush1.msra.mxu0 %v1225
    %1257 = vmatprep.subr.mxu0 0.0
    %1258 = vmatpush1.msra.mxu0 %v1226
    %1259 = vmatprep.subr.mxu0 0.0
    %1260 = vmatpush1.msra.mxu0 %v1227
    %1261 = vmatprep.subr.mxu0 0.0
    %1262 = vmatpush1.msra.mxu0 %v1228
    %1263 = vmatprep.subr.mxu0 0.0
    %1264 = vmatpush1.msra.mxu0 %v1229
    %1265 = vmatprep.subr.mxu0 0.0
    %1266 = vmatpush1.msra.mxu0 %v1230
    %1267 = vmatprep.subr.mxu0 0.0
    %1268 = vmatpush1.msra.mxu0 %v1231
    %1269 = vmatprep.subr.mxu0 0.0
    %1270 = vmatpush1.msra.mxu0 %v1232
    %1271 = vmatprep.subr.mxu0 0.0
    %1272 = vmatpush1.msra.mxu0 %v1233
    %1273 = vmatprep.subr.mxu0 0.0
    %1274 = vmatpush1.msra.mxu0 0.0
    %1275 = vmatprep.subr.mxu0 0.0
    %1276 = vmatpush1.msra.mxu0 0.0
    %1277 = vmatprep.subr.mxu0 0.0
    %1278 = vmatpush1.msra.mxu0 0.0
    %1279 = vmatprep.subr.mxu0 0.0
    %1280 = vmatpush1.msra.mxu0 0.0
    %1281 = vmatprep.subr.mxu0 0.0
    %1282 = vmatpush1.msra.mxu0 0.0
    %1283 = vmatprep.subr.mxu0 0.0
    %1284 = vmatpush1.msra.mxu0 0.0
    %1285 = vmatprep.subr.mxu0 0.0
    %1286 = vmatpush1.msra.mxu0 0.0
    %1287 = vmatprep.subr.mxu0 0.0
    %1288 = vmatpush1.msra.mxu0 0.0
    %1289 = vmatprep.subr.mxu0 0.0
    %1290 = vmatpush1.msra.mxu0 0.0
    %1291 = vmatprep.subr.mxu0 0.0
    %1292 = vmatpush1.msra.mxu0 0.0
    %1293 = vmatprep.subr.mxu0 0.0
    %1294 = vmatpush1.msra.mxu0 0.0
    %1295 = vmatprep.subr.mxu0 0.0
    %1296 = vmatpush1.msra.mxu0 0.0
    %1297 = vmatprep.subr.mxu0 0.0
    %1298 = vmatpush1.msra.mxu0 0.0
    %1299 = vmatprep.subr.mxu0 0.0
    %1300 = vmatpush1.msra.mxu0 0.0
    %1301 = vmatprep.subr.mxu0 0.0
    %1302 = vmatpush1.msra.mxu0 0.0
    %1303 = vmatprep.subr.mxu0 0.0
    %1304 = vmatpush1.msra.mxu0 0.0
    %1305 = vmatprep.mubr.f32.mxu0 0.0
    %1306 = vmatmul.mubr.f32.gmra.mrb[0].mxu0 %v942
    %v1307 = vpop.f32.mrb[0].mxu0
    %v1308 = vadd.f32 %v1239, %v1307
    %v1309 = vpop.f32.mrb[0].mxu0
    %1310 = vmatprep.mubr.f32.mxu0 0.0
    %1311 = vmatmul.mubr.f32.gmra.mrb[0].mxu0 %v943
    %v1312 = vpop.f32.mrb[0].mxu0
    %v1313 = vadd.f32 %v1239, %v1312
    %v1314 = vpop.f32.mrb[0].mxu0
    %1315 = vdwg.mxu0
    %1316 = vmatprep.subr.mxu0 0.0
    %1317 = vmatpush1.msra.mxu0 %v942
    %1318 = vmatprep.subr.mxu0 0.0
    %1319 = vmatpush1.msra.mxu0 %v943
    %1320 = vmatprep.subr.mxu0 0.0
    %1321 = vmatpush1.msra.mxu0 0.0
    %1322 = vmatprep.subr.mxu0 0.0
    %1323 = vmatpush1.msra.mxu0 0.0
    %1324 = vmatprep.subr.mxu0 0.0
    %1325 = vmatpush1.msra.mxu0 0.0
    %1326 = vmatprep.subr.mxu0 0.0
    %1327 = vmatpush1.msra.mxu0 0.0
    %1328 = vmatprep.subr.mxu0 0.0
    %1329 = vmatpush1.msra.mxu0 0.0
    %1330 = vmatprep.subr.mxu0 0.0
    %1331 = vmatpush1.msra.mxu0 0.0
    %1332 = vmatprep.subr.mxu0 0.0
    %1333 = vmatpush1.msra.mxu0 0.0
    %1334 = vmatprep.subr.mxu0 0.0
    %1335 = vmatpush1.msra.mxu0 0.0
    %1336 = vmatprep.subr.mxu0 0.0
    %1337 = vmatpush1.msra.mxu0 0.0
    %1338 = vmatprep.subr.mxu0 0.0
    %1339 = vmatpush1.msra.mxu0 0.0
    %1340 = vmatprep.subr.mxu0 0.0
    %1341 = vmatpush1.msra.mxu0 0.0
    %1342 = vmatprep.subr.mxu0 0.0
    %1343 = vmatpush1.msra.mxu0 0.0
    %1344 = vmatprep.subr.mxu0 0.0
    %1345 = vmatpush1.msra.mxu0 0.0
    %1346 = vmatprep.subr.mxu0 0.0
    %1347 = vmatpush1.msra.mxu0 0.0
    %1348 = vmatprep.subr.mxu0 0.0
    %1349 = vmatpush1.msra.mxu0 0.0
    %1350 = vmatprep.subr.mxu0 0.0
    %1351 = vmatpush1.msra.mxu0 0.0
    %1352 = vmatprep.subr.mxu0 0.0
    %1353 = vmatpush1.msra.mxu0 0.0
    %1354 = vmatprep.subr.mxu0 0.0
    %1355 = vmatpush1.msra.mxu0 0.0
    %1356 = vmatprep.subr.mxu0 0.0
    %1357 = vmatpush1.msra.mxu0 0.0
    %1358 = vmatprep.subr.mxu0 0.0
    %1359 = vmatpush1.msra.mxu0 0.0
    %1360 = vmatprep.subr.mxu0 0.0
    %1361 = vmatpush1.msra.mxu0 0.0
    %1362 = vmatprep.subr.mxu0 0.0
    %1363 = vmatpush1.msra.mxu0 0.0
    %1364 = vmatprep.subr.mxu0 0.0
    %1365 = vmatpush1.msra.mxu0 0.0
    %1366 = vmatprep.subr.mxu0 0.0
    %1367 = vmatpush1.msra.mxu0 0.0
    %1368 = vmatprep.subr.mxu0 0.0
    %1369 = vmatpush1.msra.mxu0 0.0
    %1370 = vmatprep.subr.mxu0 0.0
    %1371 = vmatpush1.msra.mxu0 0.0
    %1372 = vmatprep.subr.mxu0 0.0
    %1373 = vmatpush1.msra.mxu0 0.0
    %1374 = vmatprep.subr.mxu0 0.0
    %1375 = vmatpush1.msra.mxu0 0.0
    %1376 = vmatprep.subr.mxu0 0.0
    %1377 = vmatpush1.msra.mxu0 0.0
    %1378 = vmatprep.subr.mxu0 0.0
    %1379 = vmatpush1.msra.mxu0 0.0
    %1380 = vmatprep.mubr.f32.mxu0 0.0
    %1381 = vmatmul.mubr.f32.gmra.mrb[0].mxu0 %v595
    %v1382 = vpop.f32.mrb[0].mxu0
    %v1383 = vadd.f32 0.0, %v1382
    %v1384 = vpop.f32.mrb[0].mxu0
    %1385 = vmatprep.mubr.f32.mxu0 0.0
    %1386 = vmatmul.mubr.f32.gmra.mrb[0].mxu0 %v598
    %v1387 = vpop.f32.mrb[0].mxu0
    %v1388 = vadd.f32 0.0, %v1387
    %v1389 = vpop.f32.mrb[0].mxu0
    %1390 = vdwg.mxu0
    %v1391 = vld [vmem:[#allocation17] sm:$0xff]
    %v1392 = vld [vmem:[#allocation17 + $0x8] sm:$0xff]
    %v1393 = vld [vmem:[#allocation17 + $0x10] sm:$0xff]
    %v1394 = vld [vmem:[#allocation17 + $0x18] sm:$0xff]
    %v1395 = vld [vmem:[#allocation17 + $0x20] sm:$0xff]
    %v1396 = vld [vmem:[#allocation17 + $0x28] sm:$0xff]
    %v1397 = vld [vmem:[#allocation17 + $0x30] sm:$0xff]
    %v1398 = vld [vmem:[#allocation17 + $0x38] sm:$0xff]
    %v1399 = vld [vmem:[#allocation17 + $0x40] sm:$0xff]
    %v1400 = vld [vmem:[#allocation17 + $0x48] sm:$0xff]
    %v1401 = vld [vmem:[#allocation17 + $0x50] sm:$0xff]
    %v1402 = vld [vmem:[#allocation17 + $0x58] sm:$0xff]
    %v1403 = vld [vmem:[#allocation17 + $0x60] sm:$0xff]
    %v1404 = vld [vmem:[#allocation17 + $0x68] sm:$0xff]
    %v1405 = vld [vmem:[#allocation17 + $0x70] sm:$0xff]
    %v1406 = vld [vmem:[#allocation17 + $0x78] sm:$0xff]
    %1407 = vmatprep.subr.mxu0 0.0
    %1408 = vmatpush1.msra.mxu0 %v1391
    %1409 = vmatprep.subr.mxu0 0.0
    %1410 = vmatpush1.msra.mxu0 %v1392
    %1411 = vmatprep.subr.mxu0 0.0
    %1412 = vmatpush1.msra.mxu0 %v1393
    %1413 = vmatprep.subr.mxu0 0.0
    %1414 = vmatpush1.msra.mxu0 %v1394
    %1415 = vmatprep.subr.mxu0 0.0
    %1416 = vmatpush1.msra.mxu0 %v1395
    %1417 = vmatprep.subr.mxu0 0.0
    %1418 = vmatpush1.msra.mxu0 %v1396
    %1419 = vmatprep.subr.mxu0 0.0
    %1420 = vmatpush1.msra.mxu0 %v1397
    %1421 = vmatprep.subr.mxu0 0.0
    %1422 = vmatpush1.msra.mxu0 %v1398
    %1423 = vmatprep.subr.mxu0 0.0
    %1424 = vmatpush1.msra.mxu0 %v1399
    %1425 = vmatprep.subr.mxu0 0.0
    %1426 = vmatpush1.msra.mxu0 %v1400
    %1427 = vmatprep.subr.mxu0 0.0
    %1428 = vmatpush1.msra.mxu0 %v1401
    %1429 = vmatprep.subr.mxu0 0.0
    %1430 = vmatpush1.msra.mxu0 %v1402
    %1431 = vmatprep.subr.mxu0 0.0
    %1432 = vmatpush1.msra.mxu0 %v1403
    %1433 = vmatprep.subr.mxu0 0.0
    %1434 = vmatpush1.msra.mxu0 %v1404
    %1435 = vmatprep.subr.mxu0 0.0
    %1436 = vmatpush1.msra.mxu0 %v1405
    %1437 = vmatprep.subr.mxu0 0.0
    %1438 = vmatpush1.msra.mxu0 %v1406
    %1439 = vmatprep.subr.mxu0 0.0
    %1440 = vmatpush1.msra.mxu0 0.0
    %1441 = vmatprep.subr.mxu0 0.0
    %1442 = vmatpush1.msra.mxu0 0.0
    %1443 = vmatprep.subr.mxu0 0.0
    %1444 = vmatpush1.msra.mxu0 0.0
    %1445 = vmatprep.subr.mxu0 0.0
    %1446 = vmatpush1.msra.mxu0 0.0
    %1447 = vmatprep.subr.mxu0 0.0
    %1448 = vmatpush1.msra.mxu0 0.0
    %1449 = vmatprep.subr.mxu0 0.0
    %1450 = vmatpush1.msra.mxu0 0.0
    %1451 = vmatprep.subr.mxu0 0.0
    %1452 = vmatpush1.msra.mxu0 0.0
    %1453 = vmatprep.subr.mxu0 0.0
    %1454 = vmatpush1.msra.mxu0 0.0
    %1455 = vmatprep.subr.mxu0 0.0
    %1456 = vmatpush1.msra.mxu0 0.0
    %1457 = vmatprep.subr.mxu0 0.0
    %1458 = vmatpush1.msra.mxu0 0.0
    %1459 = vmatprep.subr.mxu0 0.0
    %1460 = vmatpush1.msra.mxu0 0.0
    %1461 = vmatprep.subr.mxu0 0.0
    %1462 = vmatpush1.msra.mxu0 0.0
    %1463 = vmatprep.subr.mxu0 0.0
    %1464 = vmatpush1.msra.mxu0 0.0
    %1465 = vmatprep.subr.mxu0 0.0
    %1466 = vmatpush1.msra.mxu0 0.0
    %1467 = vmatprep.subr.mxu0 0.0
    %1468 = vmatpush1.msra.mxu0 0.0
    %1469 = vmatprep.subr.mxu0 0.0
    %1470 = vmatpush1.msra.mxu0 0.0
    %1471 = vmatprep.mubr.f32.mxu0 0.0
    %1472 = vmatmul.mubr.f32.gmra.mrb[0].mxu0 %v1383
    %v1473 = vpop.f32.mrb[0].mxu0
    %v1474 = vadd.f32 0.0, %v1473
    %v1475 = vpop.f32.mrb[0].mxu0
    %1476 = vmatprep.mubr.f32.mxu0 0.0
    %1477 = vmatmul.mubr.f32.gmra.mrb[0].mxu0 %v1388
    %v1478 = vpop.f32.mrb[0].mxu0
    %v1479 = vadd.f32 0.0, %v1478
    %v1480 = vpop.f32.mrb[0].mxu0
    %1481 = vdwg.mxu0
    %v1482 = vadd.f32 %v1308, %v1474
    %v1483 = vadd.f32 %v1313, %v1479
    %1484 = vmatprep.subr.mxu0 0.0
    %1485 = vmatpush1.msra.mxu0 %v1216
    %1486 = vmatprep.subr.mxu0 0.0
    %1487 = vmatpush1.msra.mxu0 %v1217
    %1488 = vmatprep.subr.mxu0 0.0
    %1489 = vmatpush1.msra.mxu0 0.0
    %1490 = vmatprep.subr.mxu0 0.0
    %1491 = vmatpush1.msra.mxu0 0.0
    %1492 = vmatprep.subr.mxu0 0.0
    %1493 = vmatpush1.msra.mxu0 0.0
    %1494 = vmatprep.subr.mxu0 0.0
    %1495 = vmatpush1.msra.mxu0 0.0
    %1496 = vmatprep.subr.mxu0 0.0
    %1497 = vmatpush1.msra.mxu0 0.0
    %1498 = vmatprep.subr.mxu0 0.0
    %1499 = vmatpush1.msra.mxu0 0.0
    %1500 = vmatprep.subr.mxu0 0.0
    %1501 = vmatpush1.msra.mxu0 0.0
    %1502 = vmatprep.subr.mxu0 0.0
    %1503 = vmatpush1.msra.mxu0 0.0
    %1504 = vmatprep.subr.mxu0 0.0
    %1505 = vmatpush1.msra.mxu0 0.0
    %1506 = vmatprep.subr.mxu0 0.0
    %1507 = vmatpush1.msra.mxu0 0.0
    %1508 = vmatprep.subr.mxu0 0.0
    %1509 = vmatpush1.msra.mxu0 0.0
    %1510 = vmatprep.subr.mxu0 0.0
    %1511 = vmatpush1.msra.mxu0 0.0
    %1512 = vmatprep.subr.mxu0 0.0
    %1513 = vmatpush1.msra.mxu0 0.0
    %1514 = vmatprep.subr.mxu0 0.0
    %1515 = vmatpush1.msra.mxu0 0.0
    %1516 = vmatprep.subr.mxu0 0.0
    %1517 = vmatpush1.msra.mxu0 0.0
    %1518 = vmatprep.subr.mxu0 0.0
    %1519 = vmatpush1.msra.mxu0 0.0
    %1520 = vmatprep.subr.mxu0 0.0
    %1521 = vmatpush1.msra.mxu0 0.0
    %1522 = vmatprep.subr.mxu0 0.0
    %1523 = vmatpush1.msra.mxu0 0.0
    %1524 = vmatprep.subr.mxu0 0.0
    %1525 = vmatpush1.msra.mxu0 0.0
    %1526 = vmatprep.subr.mxu0 0.0
    %1527 = vmatpush1.msra.mxu0 0.0
    %1528 = vmatprep.subr.mxu0 0.0
    %1529 = vmatpush1.msra.mxu0 0.0
    %1530 = vmatprep.subr.mxu0 0.0
    %1531 = vmatpush1.msra.mxu0 0.0
    %1532 = vmatprep.subr.mxu0 0.0
    %1533 = vmatpush1.msra.mxu0 0.0
    %1534 = vmatprep.subr.mxu0 0.0
    %1535 = vmatpush1.msra.mxu0 0.0
    %1536 = vmatprep.subr.mxu0 0.0
    %1537 = vmatpush1.msra.mxu0 0.0
    %1538 = vmatprep.subr.mxu0 0.0
    %1539 = vmatpush1.msra.mxu0 0.0
    %1540 = vmatprep.subr.mxu0 0.0
    %1541 = vmatpush1.msra.mxu0 0.0
    %1542 = vmatprep.subr.mxu0 0.0
    %1543 = vmatpush1.msra.mxu0 0.0
    %1544 = vmatprep.subr.mxu0 0.0
    %1545 = vmatpush1.msra.mxu0 0.0
    %1546 = vmatprep.subr.mxu0 0.0
    %1547 = vmatpush1.msra.mxu0 0.0
    %1548 = vmatprep.mubr.f32.mxu0 0.0
    %1549 = vmatmul.mubr.f32.gmra.mrb[0].mxu0 %v769
    %v1550 = vpop.f32.mrb[0].mxu0
    %v1551 = vadd.f32 0.0, %v1550
    %v1552 = vpop.f32.mrb[0].mxu0
    %1553 = vmatprep.mubr.f32.mxu0 0.0
    %1554 = vmatmul.mubr.f32.gmra.mrb[0].mxu0 %v772
    %v1555 = vpop.f32.mrb[0].mxu0
    %v1556 = vadd.f32 0.0, %v1555
    %v1557 = vpop.f32.mrb[0].mxu0
    %1558 = vdwg.mxu0
    %v1559 = vld [vmem:[#allocation20] sm:$0xff]
    %v1560 = vld [vmem:[#allocation20 + $0x8] sm:$0xff]
    %v1561 = vld [vmem:[#allocation20 + $0x10] sm:$0xff]
    %v1562 = vld [vmem:[#allocation20 + $0x18] sm:$0xff]
    %v1563 = vld [vmem:[#allocation20 + $0x20] sm:$0xff]
    %v1564 = vld [vmem:[#allocation20 + $0x28] sm:$0xff]
    %v1565 = vld [vmem:[#allocation20 + $0x30] sm:$0xff]
    %v1566 = vld [vmem:[#allocation20 + $0x38] sm:$0xff]
    %v1567 = vld [vmem:[#allocation20 + $0x40] sm:$0xff]
    %v1568 = vld [vmem:[#allocation20 + $0x48] sm:$0xff]
    %v1569 = vld [vmem:[#allocation20 + $0x50] sm:$0xff]
    %v1570 = vld [vmem:[#allocation20 + $0x58] sm:$0xff]
    %v1571 = vld [vmem:[#allocation20 + $0x60] sm:$0xff]
    %v1572 = vld [vmem:[#allocation20 + $0x68] sm:$0xff]
    %v1573 = vld [vmem:[#allocation20 + $0x70] sm:$0xff]
    %v1574 = vld [vmem:[#allocation20 + $0x78] sm:$0xff]
    %1575 = vmatprep.subr.mxu0 0.0
    %1576 = vmatpush1.msra.mxu0 %v1559
    %1577 = vmatprep.subr.mxu0 0.0
    %1578 = vmatpush1.msra.mxu0 %v1560
    %1579 = vmatprep.subr.mxu0 0.0
    %1580 = vmatpush1.msra.mxu0 %v1561
    %1581 = vmatprep.subr.mxu0 0.0
    %1582 = vmatpush1.msra.mxu0 %v1562
    %1583 = vmatprep.subr.mxu0 0.0
    %1584 = vmatpush1.msra.mxu0 %v1563
    %1585 = vmatprep.subr.mxu0 0.0
    %1586 = vmatpush1.msra.mxu0 %v1564
    %1587 = vmatprep.subr.mxu0 0.0
    %1588 = vmatpush1.msra.mxu0 %v1565
    %1589 = vmatprep.subr.mxu0 0.0
    %1590 = vmatpush1.msra.mxu0 %v1566
    %1591 = vmatprep.subr.mxu0 0.0
    %1592 = vmatpush1.msra.mxu0 %v1567
    %1593 = vmatprep.subr.mxu0 0.0
    %1594 = vmatpush1.msra.mxu0 %v1568
    %1595 = vmatprep.subr.mxu0 0.0
    %1596 = vmatpush1.msra.mxu0 %v1569
    %1597 = vmatprep.subr.mxu0 0.0
    %1598 = vmatpush1.msra.mxu0 %v1570
    %1599 = vmatprep.subr.mxu0 0.0
    %1600 = vmatpush1.msra.mxu0 %v1571
    %1601 = vmatprep.subr.mxu0 0.0
    %1602 = vmatpush1.msra.mxu0 %v1572
    %1603 = vmatprep.subr.mxu0 0.0
    %1604 = vmatpush1.msra.mxu0 %v1573
    %1605 = vmatprep.subr.mxu0 0.0
    %1606 = vmatpush1.msra.mxu0 %v1574
    %1607 = vmatprep.subr.mxu0 0.0
    %1608 = vmatpush1.msra.mxu0 0.0
    %1609 = vmatprep.subr.mxu0 0.0
    %1610 = vmatpush1.msra.mxu0 0.0
    %1611 = vmatprep.subr.mxu0 0.0
    %1612 = vmatpush1.msra.mxu0 0.0
    %1613 = vmatprep.subr.mxu0 0.0
    %1614 = vmatpush1.msra.mxu0 0.0
    %1615 = vmatprep.subr.mxu0 0.0
    %1616 = vmatpush1.msra.mxu0 0.0
    %1617 = vmatprep.subr.mxu0 0.0
    %1618 = vmatpush1.msra.mxu0 0.0
    %1619 = vmatprep.subr.mxu0 0.0
    %1620 = vmatpush1.msra.mxu0 0.0
    %1621 = vmatprep.subr.mxu0 0.0
    %1622 = vmatpush1.msra.mxu0 0.0
    %1623 = vmatprep.subr.mxu0 0.0
    %1624 = vmatpush1.msra.mxu0 0.0
    %1625 = vmatprep.subr.mxu0 0.0
    %1626 = vmatpush1.msra.mxu0 0.0
    %1627 = vmatprep.subr.mxu0 0.0
    %1628 = vmatpush1.msra.mxu0 0.0
    %1629 = vmatprep.subr.mxu0 0.0
    %1630 = vmatpush1.msra.mxu0 0.0
    %1631 = vmatprep.subr.mxu0 0.0
    %1632 = vmatpush1.msra.mxu0 0.0
    %1633 = vmatprep.subr.mxu0 0.0
    %1634 = vmatpush1.msra.mxu0 0.0
    %1635 = vmatprep.subr.mxu0 0.0
    %1636 = vmatpush1.msra.mxu0 0.0
    %1637 = vmatprep.subr.mxu0 0.0
    %1638 = vmatpush1.msra.mxu0 0.0
    %1639 = vmatprep.mubr.f32.mxu0 0.0
    %1640 = vmatmul.mubr.f32.gmra.mrb[0].mxu0 %v1551
    %v1641 = vpop.f32.mrb[0].mxu0
    %v1642 = vadd.f32 0.0, %v1641
    %v1643 = vpop.f32.mrb[0].mxu0
    %1644 = vmatprep.mubr.f32.mxu0 0.0
    %1645 = vmatmul.mubr.f32.gmra.mrb[0].mxu0 %v1556
    %v1646 = vpop.f32.mrb[0].mxu0
    %v1647 = vadd.f32 0.0, %v1646
    %v1648 = vpop.f32.mrb[0].mxu0
    %1649 = vdwg.mxu0
    %v1650 = vadd.f32 %v1482, %v1642
    %v1651 = vadd.f32 %v1483, %v1647
    %v1652 = vmax.f32 %v1650, 0.0
    %v1653 = vmax.f32 %v1651, 0.0
    %v1654 = vld [vmem:[#allocation31] sm:$0xff]
    %v1655 = vld [vmem:[#allocation31 + $0x8] sm:$0xff]
    %v1656 = vld [vmem:[#allocation31 + $0x10] sm:$0xff]
    %v1657 = vld [vmem:[#allocation31 + $0x18] sm:$0xff]
    %v1658 = vld [vmem:[#allocation31 + $0x20] sm:$0xff]
    %v1659 = vld [vmem:[#allocation31 + $0x28] sm:$0xff]
    %v1660 = vld [vmem:[#allocation31 + $0x30] sm:$0xff]
    %v1661 = vld [vmem:[#allocation31 + $0x38] sm:$0xff]
    %v1662 = vld [vmem:[#allocation31 + $0x40] sm:$0xff]
    %v1663 = vld [vmem:[#allocation31 + $0x48] sm:$0xff]
    %v1664 = vld [vmem:[#allocation31 + $0x50] sm:$0xff]
    %v1665 = vld [vmem:[#allocation31 + $0x58] sm:$0xff]
    %v1666 = vld [vmem:[#allocation31 + $0x60] sm:$0xff]
    %v1667 = vld [vmem:[#allocation31 + $0x68] sm:$0xff]
    %v1668 = vld [vmem:[#allocation31 + $0x70] sm:$0xff]
    %v1669 = vld [vmem:[#allocation31 + $0x78] sm:$0xff]
    %v1670 = vld [vmem:[%s51] sm:$0x1]
    %v1672 = vlaneseq
    %v1673 = vshrl.u32 %v1672, 7
    %v1674 = vsub.s32 0, %v1673
    %v1675 = vrot.slane %v1670, %v1674
    %1677 = vmatprep.subr.mxu0 0.0
    %1678 = vmatpush1.msra.mxu0 %v1654
    %1679 = vmatprep.subr.mxu0 0.0
    %1680 = vmatpush1.msra.mxu0 %v1655
    %1681 = vmatprep.subr.mxu0 0.0
    %1682 = vmatpush1.msra.mxu0 %v1656
    %1683 = vmatprep.subr.mxu0 0.0
    %1684 = vmatpush1.msra.mxu0 %v1657
    %1685 = vmatprep.subr.mxu0 0.0
    %1686 = vmatpush1.msra.mxu0 %v1658
    %1687 = vmatprep.subr.mxu0 0.0
    %1688 = vmatpush1.msra.mxu0 %v1659
    %1689 = vmatprep.subr.mxu0 0.0
    %1690 = vmatpush1.msra.mxu0 %v1660
    %1691 = vmatprep.subr.mxu0 0.0
    %1692 = vmatpush1.msra.mxu0 %v1661
    %1693 = vmatprep.subr.mxu0 0.0
    %1694 = vmatpush1.msra.mxu0 %v1662
    %1695 = vmatprep.subr.mxu0 0.0
    %1696 = vmatpush1.msra.mxu0 %v1663
    %1697 = vmatprep.subr.mxu0 0.0
    %1698 = vmatpush1.msra.mxu0 %v1664
    %1699 = vmatprep.subr.mxu0 0.0
    %1700 = vmatpush1.msra.mxu0 %v1665
    %1701 = vmatprep.subr.mxu0 0.0
    %1702 = vmatpush1.msra.mxu0 %v1666
    %1703 = vmatprep.subr.mxu0 0.0
    %1704 = vmatpush1.msra.mxu0 %v1667
    %1705 = vmatprep.subr.mxu0 0.0
    %1706 = vmatpush1.msra.mxu0 %v1668
    %1707 = vmatprep.subr.mxu0 0.0
    %1708 = vmatpush1.msra.mxu0 %v1669
    %1709 = vmatprep.subr.mxu0 0.0
    %1710 = vmatpush1.msra.mxu0 0.0
    %1711 = vmatprep.subr.mxu0 0.0
    %1712 = vmatpush1.msra.mxu0 0.0
    %1713 = vmatprep.subr.mxu0 0.0
    %1714 = vmatpush1.msra.mxu0 0.0
    %1715 = vmatprep.subr.mxu0 0.0
    %1716 = vmatpush1.msra.mxu0 0.0
    %1717 = vmatprep.subr.mxu0 0.0
    %1718 = vmatpush1.msra.mxu0 0.0
    %1719 = vmatprep.subr.mxu0 0.0
    %1720 = vmatpush1.msra.mxu0 0.0
    %1721 = vmatprep.subr.mxu0 0.0
    %1722 = vmatpush1.msra.mxu0 0.0
    %1723 = vmatprep.subr.mxu0 0.0
    %1724 = vmatpush1.msra.mxu0 0.0
    %1725 = vmatprep.subr.mxu0 0.0
    %1726 = vmatpush1.msra.mxu0 0.0
    %1727 = vmatprep.subr.mxu0 0.0
    %1728 = vmatpush1.msra.mxu0 0.0
    %1729 = vmatprep.subr.mxu0 0.0
    %1730 = vmatpush1.msra.mxu0 0.0
    %1731 = vmatprep.subr.mxu0 0.0
    %1732 = vmatpush1.msra.mxu0 0.0
    %1733 = vmatprep.subr.mxu0 0.0
    %1734 = vmatpush1.msra.mxu0 0.0
    %1735 = vmatprep.subr.mxu0 0.0
    %1736 = vmatpush1.msra.mxu0 0.0
    %1737 = vmatprep.subr.mxu0 0.0
    %1738 = vmatpush1.msra.mxu0 0.0
    %1739 = vmatprep.subr.mxu0 0.0
    %1740 = vmatpush1.msra.mxu0 0.0
    %1741 = vmatprep.mubr.f32.mxu0 0.0
    %1742 = vmatmul.mubr.f32.gmra.mrb[0].mxu0 %v1216
    %v1743 = vpop.f32.mrb[0].mxu0
    %v1744 = vadd.f32 %v1675, %v1743
    %v1745 = vpop.f32.mrb[0].mxu0
    %1746 = vmatprep.mubr.f32.mxu0 0.0
    %1747 = vmatmul.mubr.f32.gmra.mrb[0].mxu0 %v1217
    %v1748 = vpop.f32.mrb[0].mxu0
    %v1749 = vadd.f32 %v1675, %v1748
    %v1750 = vpop.f32.mrb[0].mxu0
    %1751 = vdwg.mxu0
    %1752 = vmatprep.subr.mxu0 0.0
    %1753 = vmatpush1.msra.mxu0 %v942
    %1754 = vmatprep.subr.mxu0 0.0
    %1755 = vmatpush1.msra.mxu0 %v943
    %1756 = vmatprep.subr.mxu0 0.0
    %1757 = vmatpush1.msra.mxu0 0.0
    %1758 = vmatprep.subr.mxu0 0.0
    %1759 = vmatpush1.msra.mxu0 0.0
    %1760 = vmatprep.subr.mxu0 0.0
    %1761 = vmatpush1.msra.mxu0 0.0
    %1762 = vmatprep.subr.mxu0 0.0
    %1763 = vmatpush1.msra.mxu0 0.0
    %1764 = vmatprep.subr.mxu0 0.0
    %1765 = vmatpush1.msra.mxu0 0.0
    %1766 = vmatprep.subr.mxu0 0.0
    %1767 = vmatpush1.msra.mxu0 0.0
    %1768 = vmatprep.subr.mxu0 0.0
    %1769 = vmatpush1.msra.mxu0 0.0
    %1770 = vmatprep.subr.mxu0 0.0
    %1771 = vmatpush1.msra.mxu0 0.0
    %1772 = vmatprep.subr.mxu0 0.0
    %1773 = vmatpush1.msra.mxu0 0.0
    %1774 = vmatprep.subr.mxu0 0.0
    %1775 = vmatpush1.msra.mxu0 0.0
    %1776 = vmatprep.subr.mxu0 0.0
    %1777 = vmatpush1.msra.mxu0 0.0
    %1778 = vmatprep.subr.mxu0 0.0
    %1779 = vmatpush1.msra.mxu0 0.0
    %1780 = vmatprep.subr.mxu0 0.0
    %1781 = vmatpush1.msra.mxu0 0.0
    %1782 = vmatprep.subr.mxu0 0.0
    %1783 = vmatpush1.msra.mxu0 0.0
    %1784 = vmatprep.subr.mxu0 0.0
    %1785 = vmatpush1.msra.mxu0 0.0
    %1786 = vmatprep.subr.mxu0 0.0
    %1787 = vmatpush1.msra.mxu0 0.0
    %1788 = vmatprep.subr.mxu0 0.0
    %1789 = vmatpush1.msra.mxu0 0.0
    %1790 = vmatprep.subr.mxu0 0.0
    %1791 = vmatpush1.msra.mxu0 0.0
    %1792 = vmatprep.subr.mxu0 0.0
    %1793 = vmatpush1.msra.mxu0 0.0
    %1794 = vmatprep.subr.mxu0 0.0
    %1795 = vmatpush1.msra.mxu0 0.0
    %1796 = vmatprep.subr.mxu0 0.0
    %1797 = vmatpush1.msra.mxu0 0.0
    %1798 = vmatprep.subr.mxu0 0.0
    %1799 = vmatpush1.msra.mxu0 0.0
    %1800 = vmatprep.subr.mxu0 0.0
    %1801 = vmatpush1.msra.mxu0 0.0
    %1802 = vmatprep.subr.mxu0 0.0
    %1803 = vmatpush1.msra.mxu0 0.0
    %1804 = vmatprep.subr.mxu0 0.0
    %1805 = vmatpush1.msra.mxu0 0.0
    %1806 = vmatprep.subr.mxu0 0.0
    %1807 = vmatpush1.msra.mxu0 0.0
    %1808 = vmatprep.subr.mxu0 0.0
    %1809 = vmatpush1.msra.mxu0 0.0
    %1810 = vmatprep.subr.mxu0 0.0
    %1811 = vmatpush1.msra.mxu0 0.0
    %1812 = vmatprep.subr.mxu0 0.0
    %1813 = vmatpush1.msra.mxu0 0.0
    %1814 = vmatprep.subr.mxu0 0.0
    %1815 = vmatpush1.msra.mxu0 0.0
    %1816 = vmatprep.mubr.f32.mxu0 0.0
    %1817 = vmatmul.mubr.f32.gmra.mrb[0].mxu0 %v1043
    %v1818 = vpop.f32.mrb[0].mxu0
    %v1819 = vadd.f32 0.0, %v1818
    %v1820 = vpop.f32.mrb[0].mxu0
    %1821 = vmatprep.mubr.f32.mxu0 0.0
    %1822 = vmatmul.mubr.f32.gmra.mrb[0].mxu0 %v1046
    %v1823 = vpop.f32.mrb[0].mxu0
    %v1824 = vadd.f32 0.0, %v1823
    %v1825 = vpop.f32.mrb[0].mxu0
    %1826 = vdwg.mxu0
    %v1827 = vld [vmem:[#allocation19] sm:$0xff]
    %v1828 = vld [vmem:[#allocation19 + $0x8] sm:$0xff]
    %v1829 = vld [vmem:[#allocation19 + $0x10] sm:$0xff]
    %v1830 = vld [vmem:[#allocation19 + $0x18] sm:$0xff]
    %v1831 = vld [vmem:[#allocation19 + $0x20] sm:$0xff]
    %v1832 = vld [vmem:[#allocation19 + $0x28] sm:$0xff]
    %v1833 = vld [vmem:[#allocation19 + $0x30] sm:$0xff]
    %v1834 = vld [vmem:[#allocation19 + $0x38] sm:$0xff]
    %v1835 = vld [vmem:[#allocation19 + $0x40] sm:$0xff]
    %v1836 = vld [vmem:[#allocation19 + $0x48] sm:$0xff]
    %v1837 = vld [vmem:[#allocation19 + $0x50] sm:$0xff]
    %v1838 = vld [vmem:[#allocation19 + $0x58] sm:$0xff]
    %v1839 = vld [vmem:[#allocation19 + $0x60] sm:$0xff]
    %v1840 = vld [vmem:[#allocation19 + $0x68] sm:$0xff]
    %v1841 = vld [vmem:[#allocation19 + $0x70] sm:$0xff]
    %v1842 = vld [vmem:[#allocation19 + $0x78] sm:$0xff]
    %1843 = vmatprep.subr.mxu0 0.0
    %1844 = vmatpush1.msra.mxu0 %v1827
    %1845 = vmatprep.subr.mxu0 0.0
    %1846 = vmatpush1.msra.mxu0 %v1828
    %1847 = vmatprep.subr.mxu0 0.0
    %1848 = vmatpush1.msra.mxu0 %v1829
    %1849 = vmatprep.subr.mxu0 0.0
    %1850 = vmatpush1.msra.mxu0 %v1830
    %1851 = vmatprep.subr.mxu0 0.0
    %1852 = vmatpush1.msra.mxu0 %v1831
    %1853 = vmatprep.subr.mxu0 0.0
    %1854 = vmatpush1.msra.mxu0 %v1832
    %1855 = vmatprep.subr.mxu0 0.0
    %1856 = vmatpush1.msra.mxu0 %v1833
    %1857 = vmatprep.subr.mxu0 0.0
    %1858 = vmatpush1.msra.mxu0 %v1834
    %1859 = vmatprep.subr.mxu0 0.0
    %1860 = vmatpush1.msra.mxu0 %v1835
    %1861 = vmatprep.subr.mxu0 0.0
    %1862 = vmatpush1.msra.mxu0 %v1836
    %1863 = vmatprep.subr.mxu0 0.0
    %1864 = vmatpush1.msra.mxu0 %v1837
    %1865 = vmatprep.subr.mxu0 0.0
    %1866 = vmatpush1.msra.mxu0 %v1838
    %1867 = vmatprep.subr.mxu0 0.0
    %1868 = vmatpush1.msra.mxu0 %v1839
    %1869 = vmatprep.subr.mxu0 0.0
    %1870 = vmatpush1.msra.mxu0 %v1840
    %1871 = vmatprep.subr.mxu0 0.0
    %1872 = vmatpush1.msra.mxu0 %v1841
    %1873 = vmatprep.subr.mxu0 0.0
    %1874 = vmatpush1.msra.mxu0 %v1842
    %1875 = vmatprep.subr.mxu0 0.0
    %1876 = vmatpush1.msra.mxu0 0.0
    %1877 = vmatprep.subr.mxu0 0.0
    %1878 = vmatpush1.msra.mxu0 0.0
    %1879 = vmatprep.subr.mxu0 0.0
    %1880 = vmatpush1.msra.mxu0 0.0
    %1881 = vmatprep.subr.mxu0 0.0
    %1882 = vmatpush1.msra.mxu0 0.0
    %1883 = vmatprep.subr.mxu0 0.0
    %1884 = vmatpush1.msra.mxu0 0.0
    %1885 = vmatprep.subr.mxu0 0.0
    %1886 = vmatpush1.msra.mxu0 0.0
    %1887 = vmatprep.subr.mxu0 0.0
    %1888 = vmatpush1.msra.mxu0 0.0
    %1889 = vmatprep.subr.mxu0 0.0
    %1890 = vmatpush1.msra.mxu0 0.0
    %1891 = vmatprep.subr.mxu0 0.0
    %1892 = vmatpush1.msra.mxu0 0.0
    %1893 = vmatprep.subr.mxu0 0.0
    %1894 = vmatpush1.msra.mxu0 0.0
    %1895 = vmatprep.subr.mxu0 0.0
    %1896 = vmatpush1.msra.mxu0 0.0
    %1897 = vmatprep.subr.mxu0 0.0
    %1898 = vmatpush1.msra.mxu0 0.0
    %1899 = vmatprep.subr.mxu0 0.0
    %1900 = vmatpush1.msra.mxu0 0.0
    %1901 = vmatprep.subr.mxu0 0.0
    %1902 = vmatpush1.msra.mxu0 0.0
    %1903 = vmatprep.subr.mxu0 0.0
    %1904 = vmatpush1.msra.mxu0 0.0
    %1905 = vmatprep.subr.mxu0 0.0
    %1906 = vmatpush1.msra.mxu0 0.0
    %1907 = vmatprep.mubr.f32.mxu0 0.0
    %1908 = vmatmul.mubr.f32.gmra.mrb[0].mxu0 %v1819
    %v1909 = vpop.f32.mrb[0].mxu0
    %v1910 = vadd.f32 0.0, %v1909
    %v1911 = vpop.f32.mrb[0].mxu0
    %1912 = vmatprep.mubr.f32.mxu0 0.0
    %1913 = vmatmul.mubr.f32.gmra.mrb[0].mxu0 %v1824
    %v1914 = vpop.f32.mrb[0].mxu0
    %v1915 = vadd.f32 0.0, %v1914
    %v1916 = vpop.f32.mrb[0].mxu0
    %1917 = vdwg.mxu0
    %v1918 = vadd.f32 %v1744, %v1910
    %v1919 = vadd.f32 %v1749, %v1915
    %v1920 = vmax.f32 %v1918, 0.0
    %v1921 = vmax.f32 %v1919, 0.0
    %v1922 = vld [vmem:[#allocation32] sm:$0xff]
    %v1923 = vld [vmem:[#allocation32 + $0x8] sm:$0xff]
    %v1924 = vld [vmem:[#allocation32 + $0x10] sm:$0xff]
    %v1925 = vld [vmem:[#allocation32 + $0x18] sm:$0xff]
    %v1926 = vld [vmem:[#allocation32 + $0x20] sm:$0xff]
    %v1927 = vld [vmem:[#allocation32 + $0x28] sm:$0xff]
    %v1928 = vld [vmem:[#allocation32 + $0x30] sm:$0xff]
    %v1929 = vld [vmem:[#allocation32 + $0x38] sm:$0xff]
    %v1930 = vld [vmem:[#allocation32 + $0x40] sm:$0xff]
    %v1931 = vld [vmem:[#allocation32 + $0x48] sm:$0xff]
    %v1932 = vld [vmem:[#allocation32 + $0x50] sm:$0xff]
    %v1933 = vld [vmem:[#allocation32 + $0x58] sm:$0xff]
    %v1934 = vld [vmem:[#allocation32 + $0x60] sm:$0xff]
    %v1935 = vld [vmem:[#allocation32 + $0x68] sm:$0xff]
    %v1936 = vld [vmem:[#allocation32 + $0x70] sm:$0xff]
    %v1937 = vld [vmem:[#allocation32 + $0x78] sm:$0xff]
    %v1938 = vld [vmem:[%s53] sm:$0x1]
    %v1940 = vlaneseq
    %v1941 = vshrl.u32 %v1940, 7
    %v1942 = vsub.s32 0, %v1941
    %v1943 = vrot.slane %v1938, %v1942
    %1945 = vmatprep.subr.mxu0 0.0
    %1946 = vmatpush1.msra.mxu0 %v1922
    %1947 = vmatprep.subr.mxu0 0.0
    %1948 = vmatpush1.msra.mxu0 %v1923
    %1949 = vmatprep.subr.mxu0 0.0
    %1950 = vmatpush1.msra.mxu0 %v1924
    %1951 = vmatprep.subr.mxu0 0.0
    %1952 = vmatpush1.msra.mxu0 %v1925
    %1953 = vmatprep.subr.mxu0 0.0
    %1954 = vmatpush1.msra.mxu0 %v1926
    %1955 = vmatprep.subr.mxu0 0.0
    %1956 = vmatpush1.msra.mxu0 %v1927
    %1957 = vmatprep.subr.mxu0 0.0
    %1958 = vmatpush1.msra.mxu0 %v1928
    %1959 = vmatprep.subr.mxu0 0.0
    %1960 = vmatpush1.msra.mxu0 %v1929
    %1961 = vmatprep.subr.mxu0 0.0
    %1962 = vmatpush1.msra.mxu0 %v1930
    %1963 = vmatprep.subr.mxu0 0.0
    %1964 = vmatpush1.msra.mxu0 %v1931
    %1965 = vmatprep.subr.mxu0 0.0
    %1966 = vmatpush1.msra.mxu0 %v1932
    %1967 = vmatprep.subr.mxu0 0.0
    %1968 = vmatpush1.msra.mxu0 %v1933
    %1969 = vmatprep.subr.mxu0 0.0
    %1970 = vmatpush1.msra.mxu0 %v1934
    %1971 = vmatprep.subr.mxu0 0.0
    %1972 = vmatpush1.msra.mxu0 %v1935
    %1973 = vmatprep.subr.mxu0 0.0
    %1974 = vmatpush1.msra.mxu0 %v1936
    %1975 = vmatprep.subr.mxu0 0.0
    %1976 = vmatpush1.msra.mxu0 %v1937
    %1977 = vmatprep.subr.mxu0 0.0
    %1978 = vmatpush1.msra.mxu0 0.0
    %1979 = vmatprep.subr.mxu0 0.0
    %1980 = vmatpush1.msra.mxu0 0.0
    %1981 = vmatprep.subr.mxu0 0.0
    %1982 = vmatpush1.msra.mxu0 0.0
    %1983 = vmatprep.subr.mxu0 0.0
    %1984 = vmatpush1.msra.mxu0 0.0
    %1985 = vmatprep.subr.mxu0 0.0
    %1986 = vmatpush1.msra.mxu0 0.0
    %1987 = vmatprep.subr.mxu0 0.0
    %1988 = vmatpush1.msra.mxu0 0.0
    %1989 = vmatprep.subr.mxu0 0.0
    %1990 = vmatpush1.msra.mxu0 0.0
    %1991 = vmatprep.subr.mxu0 0.0
    %1992 = vmatpush1.msra.mxu0 0.0
    %1993 = vmatprep.subr.mxu0 0.0
    %1994 = vmatpush1.msra.mxu0 0.0
    %1995 = vmatprep.subr.mxu0 0.0
    %1996 = vmatpush1.msra.mxu0 0.0
    %1997 = vmatprep.subr.mxu0 0.0
    %1998 = vmatpush1.msra.mxu0 0.0
    %1999 = vmatprep.subr.mxu0 0.0
    %2000 = vmatpush1.msra.mxu0 0.0
    %2001 = vmatprep.subr.mxu0 0.0
    %2002 = vmatpush1.msra.mxu0 0.0
    %2003 = vmatprep.subr.mxu0 0.0
    %2004 = vmatpush1.msra.mxu0 0.0
    %2005 = vmatprep.subr.mxu0 0.0
    %2006 = vmatpush1.msra.mxu0 0.0
    %2007 = vmatprep.subr.mxu0 0.0
    %2008 = vmatpush1.msra.mxu0 0.0
    %2009 = vmatprep.mubr.f32.mxu0 0.0
    %2010 = vmatmul.mubr.f32.gmra.mrb[0].mxu0 %v1652
    %v2011 = vpop.f32.mrb[0].mxu0
    %v2012 = vadd.f32 %v1943, %v2011
    %v2013 = vpop.f32.mrb[0].mxu0
    %2014 = vmatprep.mubr.f32.mxu0 0.0
    %2015 = vmatmul.mubr.f32.gmra.mrb[0].mxu0 %v1653
    %v2016 = vpop.f32.mrb[0].mxu0
    %v2017 = vadd.f32 %v1943, %v2016
    %v2018 = vpop.f32.mrb[0].mxu0
    %2019 = vdwg.mxu0
    %2020 = vmatprep.subr.mxu0 0.0
    %2021 = vmatpush1.msra.mxu0 %v1652
    %2022 = vmatprep.subr.mxu0 0.0
    %2023 = vmatpush1.msra.mxu0 %v1653
    %2024 = vmatprep.subr.mxu0 0.0
    %2025 = vmatpush1.msra.mxu0 0.0
    %2026 = vmatprep.subr.mxu0 0.0
    %2027 = vmatpush1.msra.mxu0 0.0
    %2028 = vmatprep.subr.mxu0 0.0
    %2029 = vmatpush1.msra.mxu0 0.0
    %2030 = vmatprep.subr.mxu0 0.0
    %2031 = vmatpush1.msra.mxu0 0.0
    %2032 = vmatprep.subr.mxu0 0.0
    %2033 = vmatpush1.msra.mxu0 0.0
    %2034 = vmatprep.subr.mxu0 0.0
    %2035 = vmatpush1.msra.mxu0 0.0
    %2036 = vmatprep.subr.mxu0 0.0
    %2037 = vmatpush1.msra.mxu0 0.0
    %2038 = vmatprep.subr.mxu0 0.0
    %2039 = vmatpush1.msra.mxu0 0.0
    %2040 = vmatprep.subr.mxu0 0.0
    %2041 = vmatpush1.msra.mxu0 0.0
    %2042 = vmatprep.subr.mxu0 0.0
    %2043 = vmatpush1.msra.mxu0 0.0
    %2044 = vmatprep.subr.mxu0 0.0
    %2045 = vmatpush1.msra.mxu0 0.0
    %2046 = vmatprep.subr.mxu0 0.0
    %2047 = vmatpush1.msra.mxu0 0.0
    %2048 = vmatprep.subr.mxu0 0.0
    %2049 = vmatpush1.msra.mxu0 0.0
    %2050 = vmatprep.subr.mxu0 0.0
    %2051 = vmatpush1.msra.mxu0 0.0
    %2052 = vmatprep.subr.mxu0 0.0
    %2053 = vmatpush1.msra.mxu0 0.0
    %2054 = vmatprep.subr.mxu0 0.0
    %2055 = vmatpush1.msra.mxu0 0.0
    %2056 = vmatprep.subr.mxu0 0.0
    %2057 = vmatpush1.msra.mxu0 0.0
    %2058 = vmatprep.subr.mxu0 0.0
    %2059 = vmatpush1.msra.mxu0 0.0
    %2060 = vmatprep.subr.mxu0 0.0
    %2061 = vmatpush1.msra.mxu0 0.0
    %2062 = vmatprep.subr.mxu0 0.0
    %2063 = vmatpush1.msra.mxu0 0.0
    %2064 = vmatprep.subr.mxu0 0.0
    %2065 = vmatpush1.msra.mxu0 0.0
    %2066 = vmatprep.subr.mxu0 0.0
    %2067 = vmatpush1.msra.mxu0 0.0
    %2068 = vmatprep.subr.mxu0 0.0
    %2069 = vmatpush1.msra.mxu0 0.0
    %2070 = vmatprep.subr.mxu0 0.0
    %2071 = vmatpush1.msra.mxu0 0.0
    %2072 = vmatprep.subr.mxu0 0.0
    %2073 = vmatpush1.msra.mxu0 0.0
    %2074 = vmatprep.subr.mxu0 0.0
    %2075 = vmatpush1.msra.mxu0 0.0
    %2076 = vmatprep.subr.mxu0 0.0
    %2077 = vmatpush1.msra.mxu0 0.0
    %2078 = vmatprep.subr.mxu0 0.0
    %2079 = vmatpush1.msra.mxu0 0.0
    %2080 = vmatprep.subr.mxu0 0.0
    %2081 = vmatpush1.msra.mxu0 0.0
    %2082 = vmatprep.subr.mxu0 0.0
    %2083 = vmatpush1.msra.mxu0 0.0
    %2084 = vmatprep.mubr.f32.mxu0 0.0
    %2085 = vmatmul.mubr.f32.gmra.mrb[0].mxu0 %v595
    %v2086 = vpop.f32.mrb[0].mxu0
    %v2087 = vadd.f32 0.0, %v2086
    %v2088 = vpop.f32.mrb[0].mxu0
    %2089 = vmatprep.mubr.f32.mxu0 0.0
    %2090 = vmatmul.mubr.f32.gmra.mrb[0].mxu0 %v598
    %v2091 = vpop.f32.mrb[0].mxu0
    %v2092 = vadd.f32 0.0, %v2091
    %v2093 = vpop.f32.mrb[0].mxu0
    %2094 = vdwg.mxu0
    %v2095 = vld [vmem:[#allocation22] sm:$0xff]
    %v2096 = vld [vmem:[#allocation22 + $0x8] sm:$0xff]
    %v2097 = vld [vmem:[#allocation22 + $0x10] sm:$0xff]
    %v2098 = vld [vmem:[#allocation22 + $0x18] sm:$0xff]
    %v2099 = vld [vmem:[#allocation22 + $0x20] sm:$0xff]
    %v2100 = vld [vmem:[#allocation22 + $0x28] sm:$0xff]
    %v2101 = vld [vmem:[#allocation22 + $0x30] sm:$0xff]
    %v2102 = vld [vmem:[#allocation22 + $0x38] sm:$0xff]
    %v2103 = vld [vmem:[#allocation22 + $0x40] sm:$0xff]
    %v2104 = vld [vmem:[#allocation22 + $0x48] sm:$0xff]
    %v2105 = vld [vmem:[#allocation22 + $0x50] sm:$0xff]
    %v2106 = vld [vmem:[#allocation22 + $0x58] sm:$0xff]
    %v2107 = vld [vmem:[#allocation22 + $0x60] sm:$0xff]
    %v2108 = vld [vmem:[#allocation22 + $0x68] sm:$0xff]
    %v2109 = vld [vmem:[#allocation22 + $0x70] sm:$0xff]
    %v2110 = vld [vmem:[#allocation22 + $0x78] sm:$0xff]
    %2111 = vmatprep.subr.mxu0 0.0
    %2112 = vmatpush1.msra.mxu0 %v2095
    %2113 = vmatprep.subr.mxu0 0.0
    %2114 = vmatpush1.msra.mxu0 %v2096
    %2115 = vmatprep.subr.mxu0 0.0
    %2116 = vmatpush1.msra.mxu0 %v2097
    %2117 = vmatprep.subr.mxu0 0.0
    %2118 = vmatpush1.msra.mxu0 %v2098
    %2119 = vmatprep.subr.mxu0 0.0
    %2120 = vmatpush1.msra.mxu0 %v2099
    %2121 = vmatprep.subr.mxu0 0.0
    %2122 = vmatpush1.msra.mxu0 %v2100
    %2123 = vmatprep.subr.mxu0 0.0
    %2124 = vmatpush1.msra.mxu0 %v2101
    %2125 = vmatprep.subr.mxu0 0.0
    %2126 = vmatpush1.msra.mxu0 %v2102
    %2127 = vmatprep.subr.mxu0 0.0
    %2128 = vmatpush1.msra.mxu0 %v2103
    %2129 = vmatprep.subr.mxu0 0.0
    %2130 = vmatpush1.msra.mxu0 %v2104
    %2131 = vmatprep.subr.mxu0 0.0
    %2132 = vmatpush1.msra.mxu0 %v2105
    %2133 = vmatprep.subr.mxu0 0.0
    %2134 = vmatpush1.msra.mxu0 %v2106
    %2135 = vmatprep.subr.mxu0 0.0
    %2136 = vmatpush1.msra.mxu0 %v2107
    %2137 = vmatprep.subr.mxu0 0.0
    %2138 = vmatpush1.msra.mxu0 %v2108
    %2139 = vmatprep.subr.mxu0 0.0
    %2140 = vmatpush1.msra.mxu0 %v2109
    %2141 = vmatprep.subr.mxu0 0.0
    %2142 = vmatpush1.msra.mxu0 %v2110
    %2143 = vmatprep.subr.mxu0 0.0
    %2144 = vmatpush1.msra.mxu0 0.0
    %2145 = vmatprep.subr.mxu0 0.0
    %2146 = vmatpush1.msra.mxu0 0.0
    %2147 = vmatprep.subr.mxu0 0.0
    %2148 = vmatpush1.msra.mxu0 0.0
    %2149 = vmatprep.subr.mxu0 0.0
    %2150 = vmatpush1.msra.mxu0 0.0
    %2151 = vmatprep.subr.mxu0 0.0
    %2152 = vmatpush1.msra.mxu0 0.0
    %2153 = vmatprep.subr.mxu0 0.0
    %2154 = vmatpush1.msra.mxu0 0.0
    %2155 = vmatprep.subr.mxu0 0.0
    %2156 = vmatpush1.msra.mxu0 0.0
    %2157 = vmatprep.subr.mxu0 0.0
    %2158 = vmatpush1.msra.mxu0 0.0
    %2159 = vmatprep.subr.mxu0 0.0
    %2160 = vmatpush1.msra.mxu0 0.0
    %2161 = vmatprep.subr.mxu0 0.0
    %2162 = vmatpush1.msra.mxu0 0.0
    %2163 = vmatprep.subr.mxu0 0.0
    %2164 = vmatpush1.msra.mxu0 0.0
    %2165 = vmatprep.subr.mxu0 0.0
    %2166 = vmatpush1.msra.mxu0 0.0
    %2167 = vmatprep.subr.mxu0 0.0
    %2168 = vmatpush1.msra.mxu0 0.0
    %2169 = vmatprep.subr.mxu0 0.0
    %2170 = vmatpush1.msra.mxu0 0.0
    %2171 = vmatprep.subr.mxu0 0.0
    %2172 = vmatpush1.msra.mxu0 0.0
    %2173 = vmatprep.subr.mxu0 0.0
    %2174 = vmatpush1.msra.mxu0 0.0
    %2175 = vmatprep.mubr.f32.mxu0 0.0
    %2176 = vmatmul.mubr.f32.gmra.mrb[0].mxu0 %v2087
    %v2177 = vpop.f32.mrb[0].mxu0
    %v2178 = vadd.f32 0.0, %v2177
    %v2179 = vpop.f32.mrb[0].mxu0
    %2180 = vmatprep.mubr.f32.mxu0 0.0
    %2181 = vmatmul.mubr.f32.gmra.mrb[0].mxu0 %v2092
    %v2182 = vpop.f32.mrb[0].mxu0
    %v2183 = vadd.f32 0.0, %v2182
    %v2184 = vpop.f32.mrb[0].mxu0
    %2185 = vdwg.mxu0
    %v2186 = vadd.f32 %v2012, %v2178
    %v2187 = vadd.f32 %v2017, %v2183
    %2188 = vmatprep.subr.mxu0 0.0
    %2189 = vmatpush1.msra.mxu0 %v1920
    %2190 = vmatprep.subr.mxu0 0.0
    %2191 = vmatpush1.msra.mxu0 %v1921
    %2192 = vmatprep.subr.mxu0 0.0
    %2193 = vmatpush1.msra.mxu0 0.0
    %2194 = vmatprep.subr.mxu0 0.0
    %2195 = vmatpush1.msra.mxu0 0.0
    %2196 = vmatprep.subr.mxu0 0.0
    %2197 = vmatpush1.msra.mxu0 0.0
    %2198 = vmatprep.subr.mxu0 0.0
    %2199 = vmatpush1.msra.mxu0 0.0
    %2200 = vmatprep.subr.mxu0 0.0
    %2201 = vmatpush1.msra.mxu0 0.0
    %2202 = vmatprep.subr.mxu0 0.0
    %2203 = vmatpush1.msra.mxu0 0.0
    %2204 = vmatprep.subr.mxu0 0.0
    %2205 = vmatpush1.msra.mxu0 0.0
    %2206 = vmatprep.subr.mxu0 0.0
    %2207 = vmatpush1.msra.mxu0 0.0
    %2208 = vmatprep.subr.mxu0 0.0
    %2209 = vmatpush1.msra.mxu0 0.0
    %2210 = vmatprep.subr.mxu0 0.0
    %2211 = vmatpush1.msra.mxu0 0.0
    %2212 = vmatprep.subr.mxu0 0.0
    %2213 = vmatpush1.msra.mxu0 0.0
    %2214 = vmatprep.subr.mxu0 0.0
    %2215 = vmatpush1.msra.mxu0 0.0
    %2216 = vmatprep.subr.mxu0 0.0
    %2217 = vmatpush1.msra.mxu0 0.0
    %2218 = vmatprep.subr.mxu0 0.0
    %2219 = vmatpush1.msra.mxu0 0.0
    %2220 = vmatprep.subr.mxu0 0.0
    %2221 = vmatpush1.msra.mxu0 0.0
    %2222 = vmatprep.subr.mxu0 0.0
    %2223 = vmatpush1.msra.mxu0 0.0
    %2224 = vmatprep.subr.mxu0 0.0
    %2225 = vmatpush1.msra.mxu0 0.0
    %2226 = vmatprep.subr.mxu0 0.0
    %2227 = vmatpush1.msra.mxu0 0.0
    %2228 = vmatprep.subr.mxu0 0.0
    %2229 = vmatpush1.msra.mxu0 0.0
    %2230 = vmatprep.subr.mxu0 0.0
    %2231 = vmatpush1.msra.mxu0 0.0
    %2232 = vmatprep.subr.mxu0 0.0
    %2233 = vmatpush1.msra.mxu0 0.0
    %2234 = vmatprep.subr.mxu0 0.0
    %2235 = vmatpush1.msra.mxu0 0.0
    %2236 = vmatprep.subr.mxu0 0.0
    %2237 = vmatpush1.msra.mxu0 0.0
    %2238 = vmatprep.subr.mxu0 0.0
    %2239 = vmatpush1.msra.mxu0 0.0
    %2240 = vmatprep.subr.mxu0 0.0
    %2241 = vmatpush1.msra.mxu0 0.0
    %2242 = vmatprep.subr.mxu0 0.0
    %2243 = vmatpush1.msra.mxu0 0.0
    %2244 = vmatprep.subr.mxu0 0.0
    %2245 = vmatpush1.msra.mxu0 0.0
    %2246 = vmatprep.subr.mxu0 0.0
    %2247 = vmatpush1.msra.mxu0 0.0
    %2248 = vmatprep.subr.mxu0 0.0
    %2249 = vmatpush1.msra.mxu0 0.0
    %2250 = vmatprep.subr.mxu0 0.0
    %2251 = vmatpush1.msra.mxu0 0.0
    %2252 = vmatprep.mubr.f32.mxu0 0.0
    %2253 = vmatmul.mubr.f32.gmra.mrb[0].mxu0 %v769
    %v2254 = vpop.f32.mrb[0].mxu0
    %v2255 = vadd.f32 0.0, %v2254
    %v2256 = vpop.f32.mrb[0].mxu0
    %2257 = vmatprep.mubr.f32.mxu0 0.0
    %2258 = vmatmul.mubr.f32.gmra.mrb[0].mxu0 %v772
    %v2259 = vpop.f32.mrb[0].mxu0
    %v2260 = vadd.f32 0.0, %v2259
    %v2261 = vpop.f32.mrb[0].mxu0
    %2262 = vdwg.mxu0
    %v2263 = vld [vmem:[#allocation25] sm:$0xff]
    %v2264 = vld [vmem:[#allocation25 + $0x8] sm:$0xff]
    %v2265 = vld [vmem:[#allocation25 + $0x10] sm:$0xff]
    %v2266 = vld [vmem:[#allocation25 + $0x18] sm:$0xff]
    %v2267 = vld [vmem:[#allocation25 + $0x20] sm:$0xff]
    %v2268 = vld [vmem:[#allocation25 + $0x28] sm:$0xff]
    %v2269 = vld [vmem:[#allocation25 + $0x30] sm:$0xff]
    %v2270 = vld [vmem:[#allocation25 + $0x38] sm:$0xff]
    %v2271 = vld [vmem:[#allocation25 + $0x40] sm:$0xff]
    %v2272 = vld [vmem:[#allocation25 + $0x48] sm:$0xff]
    %v2273 = vld [vmem:[#allocation25 + $0x50] sm:$0xff]
    %v2274 = vld [vmem:[#allocation25 + $0x58] sm:$0xff]
    %v2275 = vld [vmem:[#allocation25 + $0x60] sm:$0xff]
    %v2276 = vld [vmem:[#allocation25 + $0x68] sm:$0xff]
    %v2277 = vld [vmem:[#allocation25 + $0x70] sm:$0xff]
    %v2278 = vld [vmem:[#allocation25 + $0x78] sm:$0xff]
    %2279 = vmatprep.subr.mxu0 0.0
    %2280 = vmatpush1.msra.mxu0 %v2263
    %2281 = vmatprep.subr.mxu0 0.0
    %2282 = vmatpush1.msra.mxu0 %v2264
    %2283 = vmatprep.subr.mxu0 0.0
    %2284 = vmatpush1.msra.mxu0 %v2265
    %2285 = vmatprep.subr.mxu0 0.0
    %2286 = vmatpush1.msra.mxu0 %v2266
    %2287 = vmatprep.subr.mxu0 0.0
    %2288 = vmatpush1.msra.mxu0 %v2267
    %2289 = vmatprep.subr.mxu0 0.0
    %2290 = vmatpush1.msra.mxu0 %v2268
    %2291 = vmatprep.subr.mxu0 0.0
    %2292 = vmatpush1.msra.mxu0 %v2269
    %2293 = vmatprep.subr.mxu0 0.0
    %2294 = vmatpush1.msra.mxu0 %v2270
    %2295 = vmatprep.subr.mxu0 0.0
    %2296 = vmatpush1.msra.mxu0 %v2271
    %2297 = vmatprep.subr.mxu0 0.0
    %2298 = vmatpush1.msra.mxu0 %v2272
    %2299 = vmatprep.subr.mxu0 0.0
    %2300 = vmatpush1.msra.mxu0 %v2273
    %2301 = vmatprep.subr.mxu0 0.0
    %2302 = vmatpush1.msra.mxu0 %v2274
    %2303 = vmatprep.subr.mxu0 0.0
    %2304 = vmatpush1.msra.mxu0 %v2275
    %2305 = vmatprep.subr.mxu0 0.0
    %2306 = vmatpush1.msra.mxu0 %v2276
    %2307 = vmatprep.subr.mxu0 0.0
    %2308 = vmatpush1.msra.mxu0 %v2277
    %2309 = vmatprep.subr.mxu0 0.0
    %2310 = vmatpush1.msra.mxu0 %v2278
    %2311 = vmatprep.subr.mxu0 0.0
    %2312 = vmatpush1.msra.mxu0 0.0
    %2313 = vmatprep.subr.mxu0 0.0
    %2314 = vmatpush1.msra.mxu0 0.0
    %2315 = vmatprep.subr.mxu0 0.0
    %2316 = vmatpush1.msra.mxu0 0.0
    %2317 = vmatprep.subr.mxu0 0.0
    %2318 = vmatpush1.msra.mxu0 0.0
    %2319 = vmatprep.subr.mxu0 0.0
    %2320 = vmatpush1.msra.mxu0 0.0
    %2321 = vmatprep.subr.mxu0 0.0
    %2322 = vmatpush1.msra.mxu0 0.0
    %2323 = vmatprep.subr.mxu0 0.0
    %2324 = vmatpush1.msra.mxu0 0.0
    %2325 = vmatprep.subr.mxu0 0.0
    %2326 = vmatpush1.msra.mxu0 0.0
    %2327 = vmatprep.subr.mxu0 0.0
    %2328 = vmatpush1.msra.mxu0 0.0
    %2329 = vmatprep.subr.mxu0 0.0
    %2330 = vmatpush1.msra.mxu0 0.0
    %2331 = vmatprep.subr.mxu0 0.0
    %2332 = vmatpush1.msra.mxu0 0.0
    %2333 = vmatprep.subr.mxu0 0.0
    %2334 = vmatpush1.msra.mxu0 0.0
    %2335 = vmatprep.subr.mxu0 0.0
    %2336 = vmatpush1.msra.mxu0 0.0
    %2337 = vmatprep.subr.mxu0 0.0
    %2338 = vmatpush1.msra.mxu0 0.0
    %2339 = vmatprep.subr.mxu0 0.0
    %2340 = vmatpush1.msra.mxu0 0.0
    %2341 = vmatprep.subr.mxu0 0.0
    %2342 = vmatpush1.msra.mxu0 0.0
    %2343 = vmatprep.mubr.f32.mxu0 0.0
    %2344 = vmatmul.mubr.f32.gmra.mrb[0].mxu0 %v2255
    %v2345 = vpop.f32.mrb[0].mxu0
    %v2346 = vadd.f32 0.0, %v2345
    %v2347 = vpop.f32.mrb[0].mxu0
    %2348 = vmatprep.mubr.f32.mxu0 0.0
    %2349 = vmatmul.mubr.f32.gmra.mrb[0].mxu0 %v2260
    %v2350 = vpop.f32.mrb[0].mxu0
    %v2351 = vadd.f32 0.0, %v2350
    %v2352 = vpop.f32.mrb[0].mxu0
    %2353 = vdwg.mxu0
    %v2354 = vadd.f32 %v2186, %v2346
    %v2355 = vadd.f32 %v2187, %v2351
    %v2356 = vld [vmem:[#allocation34] sm:$0xff]
    %v2357 = vld [vmem:[#allocation34 + $0x8] sm:$0xff]
    %v2358 = vld [vmem:[#allocation34 + $0x10] sm:$0xff]
    %v2359 = vld [vmem:[#allocation34 + $0x18] sm:$0xff]
    %v2360 = vld [vmem:[#allocation34 + $0x20] sm:$0xff]
    %v2361 = vld [vmem:[#allocation34 + $0x28] sm:$0xff]
    %v2362 = vld [vmem:[#allocation34 + $0x30] sm:$0xff]
    %v2363 = vld [vmem:[#allocation34 + $0x38] sm:$0xff]
    %v2364 = vld [vmem:[#allocation34 + $0x40] sm:$0xff]
    %v2365 = vld [vmem:[#allocation34 + $0x48] sm:$0xff]
    %v2366 = vld [vmem:[#allocation34 + $0x50] sm:$0xff]
    %v2367 = vld [vmem:[#allocation34 + $0x58] sm:$0xff]
    %v2368 = vld [vmem:[#allocation34 + $0x60] sm:$0xff]
    %v2369 = vld [vmem:[#allocation34 + $0x68] sm:$0xff]
    %v2370 = vld [vmem:[#allocation34 + $0x70] sm:$0xff]
    %v2371 = vld [vmem:[#allocation34 + $0x78] sm:$0xff]
    %v2372 = vld [vmem:[%s55] sm:$0x1]
    %v2374 = vlaneseq
    %v2375 = vshrl.u32 %v2374, 7
    %v2376 = vsub.s32 0, %v2375
    %v2377 = vrot.slane %v2372, %v2376
    %2379 = vmatprep.subr.mxu0 0.0
    %2380 = vmatpush1.msra.mxu0 %v2356
    %2381 = vmatprep.subr.mxu0 0.0
    %2382 = vmatpush1.msra.mxu0 %v2357
    %2383 = vmatprep.subr.mxu0 0.0
    %2384 = vmatpush1.msra.mxu0 %v2358
    %2385 = vmatprep.subr.mxu0 0.0
    %2386 = vmatpush1.msra.mxu0 %v2359
    %2387 = vmatprep.subr.mxu0 0.0
    %2388 = vmatpush1.msra.mxu0 %v2360
    %2389 = vmatprep.subr.mxu0 0.0
    %2390 = vmatpush1.msra.mxu0 %v2361
    %2391 = vmatprep.subr.mxu0 0.0
    %2392 = vmatpush1.msra.mxu0 %v2362
    %2393 = vmatprep.subr.mxu0 0.0
    %2394 = vmatpush1.msra.mxu0 %v2363
    %2395 = vmatprep.subr.mxu0 0.0
    %2396 = vmatpush1.msra.mxu0 %v2364
    %2397 = vmatprep.subr.mxu0 0.0
    %2398 = vmatpush1.msra.mxu0 %v2365
    %2399 = vmatprep.subr.mxu0 0.0
    %2400 = vmatpush1.msra.mxu0 %v2366
    %2401 = vmatprep.subr.mxu0 0.0
    %2402 = vmatpush1.msra.mxu0 %v2367
    %2403 = vmatprep.subr.mxu0 0.0
    %2404 = vmatpush1.msra.mxu0 %v2368
    %2405 = vmatprep.subr.mxu0 0.0
    %2406 = vmatpush1.msra.mxu0 %v2369
    %2407 = vmatprep.subr.mxu0 0.0
    %2408 = vmatpush1.msra.mxu0 %v2370
    %2409 = vmatprep.subr.mxu0 0.0
    %2410 = vmatpush1.msra.mxu0 %v2371
    %2411 = vmatprep.subr.mxu0 0.0
    %2412 = vmatpush1.msra.mxu0 0.0
    %2413 = vmatprep.subr.mxu0 0.0
    %2414 = vmatpush1.msra.mxu0 0.0
    %2415 = vmatprep.subr.mxu0 0.0
    %2416 = vmatpush1.msra.mxu0 0.0
    %2417 = vmatprep.subr.mxu0 0.0
    %2418 = vmatpush1.msra.mxu0 0.0
    %2419 = vmatprep.subr.mxu0 0.0
    %2420 = vmatpush1.msra.mxu0 0.0
    %2421 = vmatprep.subr.mxu0 0.0
    %2422 = vmatpush1.msra.mxu0 0.0
    %2423 = vmatprep.subr.mxu0 0.0
    %2424 = vmatpush1.msra.mxu0 0.0
    %2425 = vmatprep.subr.mxu0 0.0
    %2426 = vmatpush1.msra.mxu0 0.0
    %2427 = vmatprep.subr.mxu0 0.0
    %2428 = vmatpush1.msra.mxu0 0.0
    %2429 = vmatprep.subr.mxu0 0.0
    %2430 = vmatpush1.msra.mxu0 0.0
    %2431 = vmatprep.subr.mxu0 0.0
    %2432 = vmatpush1.msra.mxu0 0.0
    %2433 = vmatprep.subr.mxu0 0.0
    %2434 = vmatpush1.msra.mxu0 0.0
    %2435 = vmatprep.subr.mxu0 0.0
    %2436 = vmatpush1.msra.mxu0 0.0
    %2437 = vmatprep.subr.mxu0 0.0
    %2438 = vmatpush1.msra.mxu0 0.0
    %2439 = vmatprep.subr.mxu0 0.0
    %2440 = vmatpush1.msra.mxu0 0.0
    %2441 = vmatprep.subr.mxu0 0.0
    %2442 = vmatpush1.msra.mxu0 0.0
    %2443 = vmatprep.mubr.f32.mxu0 0.0
    %2444 = vmatmul.mubr.f32.gmra.mrb[0].mxu0 %v1920
    %v2445 = vpop.f32.mrb[0].mxu0
    %v2446 = vadd.f32 %v2377, %v2445
    %v2447 = vpop.f32.mrb[0].mxu0
    %2448 = vmatprep.mubr.f32.mxu0 0.0
    %2449 = vmatmul.mubr.f32.gmra.mrb[0].mxu0 %v1921
    %v2450 = vpop.f32.mrb[0].mxu0
    %v2451 = vadd.f32 %v2377, %v2450
    %v2452 = vpop.f32.mrb[0].mxu0
    %2453 = vdwg.mxu0
    %2454 = vmatprep.subr.mxu0 0.0
    %2455 = vmatpush1.msra.mxu0 %v1652
    %2456 = vmatprep.subr.mxu0 0.0
    %2457 = vmatpush1.msra.mxu0 %v1653
    %2458 = vmatprep.subr.mxu0 0.0
    %2459 = vmatpush1.msra.mxu0 0.0
    %2460 = vmatprep.subr.mxu0 0.0
    %2461 = vmatpush1.msra.mxu0 0.0
    %2462 = vmatprep.subr.mxu0 0.0
    %2463 = vmatpush1.msra.mxu0 0.0
    %2464 = vmatprep.subr.mxu0 0.0
    %2465 = vmatpush1.msra.mxu0 0.0
    %2466 = vmatprep.subr.mxu0 0.0
    %2467 = vmatpush1.msra.mxu0 0.0
    %2468 = vmatprep.subr.mxu0 0.0
    %2469 = vmatpush1.msra.mxu0 0.0
    %2470 = vmatprep.subr.mxu0 0.0
    %2471 = vmatpush1.msra.mxu0 0.0
    %2472 = vmatprep.subr.mxu0 0.0
    %2473 = vmatpush1.msra.mxu0 0.0
    %2474 = vmatprep.subr.mxu0 0.0
    %2475 = vmatpush1.msra.mxu0 0.0
    %2476 = vmatprep.subr.mxu0 0.0
    %2477 = vmatpush1.msra.mxu0 0.0
    %2478 = vmatprep.subr.mxu0 0.0
    %2479 = vmatpush1.msra.mxu0 0.0
    %2480 = vmatprep.subr.mxu0 0.0
    %2481 = vmatpush1.msra.mxu0 0.0
    %2482 = vmatprep.subr.mxu0 0.0
    %2483 = vmatpush1.msra.mxu0 0.0
    %2484 = vmatprep.subr.mxu0 0.0
    %2485 = vmatpush1.msra.mxu0 0.0
    %2486 = vmatprep.subr.mxu0 0.0
    %2487 = vmatpush1.msra.mxu0 0.0
    %2488 = vmatprep.subr.mxu0 0.0
    %2489 = vmatpush1.msra.mxu0 0.0
    %2490 = vmatprep.subr.mxu0 0.0
    %2491 = vmatpush1.msra.mxu0 0.0
    %2492 = vmatprep.subr.mxu0 0.0
    %2493 = vmatpush1.msra.mxu0 0.0
    %2494 = vmatprep.subr.mxu0 0.0
    %2495 = vmatpush1.msra.mxu0 0.0
    %2496 = vmatprep.subr.mxu0 0.0
    %2497 = vmatpush1.msra.mxu0 0.0
    %2498 = vmatprep.subr.mxu0 0.0
    %2499 = vmatpush1.msra.mxu0 0.0
    %2500 = vmatprep.subr.mxu0 0.0
    %2501 = vmatpush1.msra.mxu0 0.0
    %2502 = vmatprep.subr.mxu0 0.0
    %2503 = vmatpush1.msra.mxu0 0.0
    %2504 = vmatprep.subr.mxu0 0.0
    %2505 = vmatpush1.msra.mxu0 0.0
    %2506 = vmatprep.subr.mxu0 0.0
    %2507 = vmatpush1.msra.mxu0 0.0
    %2508 = vmatprep.subr.mxu0 0.0
    %2509 = vmatpush1.msra.mxu0 0.0
    %2510 = vmatprep.subr.mxu0 0.0
    %2511 = vmatpush1.msra.mxu0 0.0
    %2512 = vmatprep.subr.mxu0 0.0
    %2513 = vmatpush1.msra.mxu0 0.0
    %2514 = vmatprep.subr.mxu0 0.0
    %2515 = vmatpush1.msra.mxu0 0.0
    %2516 = vmatprep.subr.mxu0 0.0
    %2517 = vmatpush1.msra.mxu0 0.0
    %2518 = vmatprep.mubr.f32.mxu0 0.0
    %2519 = vmatmul.mubr.f32.gmra.mrb[0].mxu0 %v1043
    %v2520 = vpop.f32.mrb[0].mxu0
    %v2521 = vadd.f32 0.0, %v2520
    %v2522 = vpop.f32.mrb[0].mxu0
    %2523 = vmatprep.mubr.f32.mxu0 0.0
    %2524 = vmatmul.mubr.f32.gmra.mrb[0].mxu0 %v1046
    %v2525 = vpop.f32.mrb[0].mxu0
    %v2526 = vadd.f32 0.0, %v2525
    %v2527 = vpop.f32.mrb[0].mxu0
    %2528 = vdwg.mxu0
    %v2529 = vld [vmem:[#allocation23] sm:$0xff]
    %v2530 = vld [vmem:[#allocation23 + $0x8] sm:$0xff]
    %v2531 = vld [vmem:[#allocation23 + $0x10] sm:$0xff]
    %v2532 = vld [vmem:[#allocation23 + $0x18] sm:$0xff]
    %v2533 = vld [vmem:[#allocation23 + $0x20] sm:$0xff]
    %v2534 = vld [vmem:[#allocation23 + $0x28] sm:$0xff]
    %v2535 = vld [vmem:[#allocation23 + $0x30] sm:$0xff]
    %v2536 = vld [vmem:[#allocation23 + $0x38] sm:$0xff]
    %v2537 = vld [vmem:[#allocation23 + $0x40] sm:$0xff]
    %v2538 = vld [vmem:[#allocation23 + $0x48] sm:$0xff]
    %v2539 = vld [vmem:[#allocation23 + $0x50] sm:$0xff]
    %v2540 = vld [vmem:[#allocation23 + $0x58] sm:$0xff]
    %v2541 = vld [vmem:[#allocation23 + $0x60] sm:$0xff]
    %v2542 = vld [vmem:[#allocation23 + $0x68] sm:$0xff]
    %v2543 = vld [vmem:[#allocation23 + $0x70] sm:$0xff]
    %v2544 = vld [vmem:[#allocation23 + $0x78] sm:$0xff]
    %2545 = vmatprep.subr.mxu0 0.0
    %2546 = vmatpush1.msra.mxu0 %v2529
    %2547 = vmatprep.subr.mxu0 0.0
    %2548 = vmatpush1.msra.mxu0 %v2530
    %2549 = vmatprep.subr.mxu0 0.0
    %2550 = vmatpush1.msra.mxu0 %v2531
    %2551 = vmatprep.subr.mxu0 0.0
    %2552 = vmatpush1.msra.mxu0 %v2532
    %2553 = vmatprep.subr.mxu0 0.0
    %2554 = vmatpush1.msra.mxu0 %v2533
    %2555 = vmatprep.subr.mxu0 0.0
    %2556 = vmatpush1.msra.mxu0 %v2534
    %2557 = vmatprep.subr.mxu0 0.0
    %2558 = vmatpush1.msra.mxu0 %v2535
    %2559 = vmatprep.subr.mxu0 0.0
    %2560 = vmatpush1.msra.mxu0 %v2536
    %2561 = vmatprep.subr.mxu0 0.0
    %2562 = vmatpush1.msra.mxu0 %v2537
    %2563 = vmatprep.subr.mxu0 0.0
    %2564 = vmatpush1.msra.mxu0 %v2538
    %2565 = vmatprep.subr.mxu0 0.0
    %2566 = vmatpush1.msra.mxu0 %v2539
    %2567 = vmatprep.subr.mxu0 0.0
    %2568 = vmatpush1.msra.mxu0 %v2540
    %2569 = vmatprep.subr.mxu0 0.0
    %2570 = vmatpush1.msra.mxu0 %v2541
    %2571 = vmatprep.subr.mxu0 0.0
    %2572 = vmatpush1.msra.mxu0 %v2542
    %2573 = vmatprep.subr.mxu0 0.0
    %2574 = vmatpush1.msra.mxu0 %v2543
    %2575 = vmatprep.subr.mxu0 0.0
    %2576 = vmatpush1.msra.mxu0 %v2544
    %2577 = vmatprep.subr.mxu0 0.0
    %2578 = vmatpush1.msra.mxu0 0.0
    %2579 = vmatprep.subr.mxu0 0.0
    %2580 = vmatpush1.msra.mxu0 0.0
    %2581 = vmatprep.subr.mxu0 0.0
    %2582 = vmatpush1.msra.mxu0 0.0
    %2583 = vmatprep.subr.mxu0 0.0
    %2584 = vmatpush1.msra.mxu0 0.0
    %2585 = vmatprep.subr.mxu0 0.0
    %2586 = vmatpush1.msra.mxu0 0.0
    %2587 = vmatprep.subr.mxu0 0.0
    %2588 = vmatpush1.msra.mxu0 0.0
    %2589 = vmatprep.subr.mxu0 0.0
    %2590 = vmatpush1.msra.mxu0 0.0
    %2591 = vmatprep.subr.mxu0 0.0
    %2592 = vmatpush1.msra.mxu0 0.0
    %2593 = vmatprep.subr.mxu0 0.0
    %2594 = vmatpush1.msra.mxu0 0.0
    %2595 = vmatprep.subr.mxu0 0.0
    %2596 = vmatpush1.msra.mxu0 0.0
    %2597 = vmatprep.subr.mxu0 0.0
    %2598 = vmatpush1.msra.mxu0 0.0
    %2599 = vmatprep.subr.mxu0 0.0
    %2600 = vmatpush1.msra.mxu0 0.0
    %2601 = vmatprep.subr.mxu0 0.0
    %2602 = vmatpush1.msra.mxu0 0.0
    %2603 = vmatprep.subr.mxu0 0.0
    %2604 = vmatpush1.msra.mxu0 0.0
    %2605 = vmatprep.subr.mxu0 0.0
    %2606 = vmatpush1.msra.mxu0 0.0
    %2607 = vmatprep.subr.mxu0 0.0
    %2608 = vmatpush1.msra.mxu0 0.0
    %2609 = vmatprep.mubr.f32.mxu0 0.0
    %2610 = vmatmul.mubr.f32.gmra.mrb[0].mxu0 %v2521
    %v2611 = vpop.f32.mrb[0].mxu0
    %v2612 = vadd.f32 0.0, %v2611
    %v2613 = vpop.f32.mrb[0].mxu0
    %2614 = vmatprep.mubr.f32.mxu0 0.0
    %2615 = vmatmul.mubr.f32.gmra.mrb[0].mxu0 %v2526
    %v2616 = vpop.f32.mrb[0].mxu0
    %v2617 = vadd.f32 0.0, %v2616
    %v2618 = vpop.f32.mrb[0].mxu0
    %2619 = vdwg.mxu0
    %v2620 = vadd.f32 %v2446, %v2612
    %v2621 = vadd.f32 %v2451, %v2617
    %v2622 = vld [vmem:[#allocation7] sm:$0xff]
    %v2623 = vld [vmem:[#allocation7 + $0x8] sm:$0xff]
    %vm2624 = vcmp.gt.f32.partialorder %v2622, 0.0
    %vm2625 = vcmp.gt.f32.partialorder %v2623, 0.0
    %v2626 = vsel %vm2624, 1, 0
    %v2627 = vsel %vm2625, 1, 0
    %2628 = vset.pattern.permute.xlu0 0
    %2629 = vperm.xlu0 %2628, %v2626
    %v2630 = vpop.permute.xlu0 %2629
    %2631 = vset.pattern.permute.xlu0 0
    %2632 = vperm.xlu0 %2631, %v2627
    %v2633 = vpop.permute.xlu0 %2632
    %vm2634 = vcmp.eq.s32.totalorder %v2630, 1
    %vm2635 = vcmp.eq.s32.totalorder %v2633, 1
    %v2636 = vsel %vm2634, %v2354, -3e+38
    %v2637 = vsel %vm2635, %v2355, -3e+38
    %v2638 = vmax.f32 %v2636, %v2637
    %v2639 = vrot.slane %v2638, 4
    %v2640 = vmax.f32 %v2638, %v2639
    %v2641 = vrot.slane %v2640, 2
    %v2642 = vmax.f32 %v2640, %v2641
    %v2643 = vrot.slane %v2642, 1
    %v2644 = vmax.f32 %v2642, %v2643
    %vm2645 = vcmask 7168
    %v2646 = vsel %vm2645, %v2622, 0.0
    %v2647 = vsel %vm2645, %v2623, 0.0
    %v2648 = vadd.f32 %v2646, %v2647
    %v2649 = vrot.slane %v2648, 4
    %v2650 = vadd.f32 %v2648, %v2649
    %v2651 = vrot.slane %v2650, 2
    %v2652 = vadd.f32 %v2650, %v2651
    %v2653 = vrot.slane %v2652, 1
    %v2654 = vadd.f32 %v2652, %v2653
    %vm2655 = vcmp.gt.f32.partialorder %v2654, 0.0
    %v2656 = vsel %vm2655, 1, 0
    %2657 = vset.pattern.permute.xlu0 0
    %2658 = vperm.xlu0 %2657, %v2656
    %v2659 = vpop.permute.xlu0 %2658
    %vm2660 = vcmp.eq.s32.totalorder %v2659, 1
    %v2661 = vsel %vm2660, %v2644, 0.0
    %v2662 = vlaneseq
    %v2663 = vshrl.u32 %v2662, 7
    %vm2664 = vcmp.eq.s32.totalorder %v2663, 0
    %v2665 = vsel %vm2664, %v2661, 0.0
    %2666 = vset.pattern.permute.xlu0 1
    %2667 = vperm.xlu0 %2666, %v2626
    %v2668 = vpop.permute.xlu0 %2667
    %2669 = vset.pattern.permute.xlu0 1
    %2670 = vperm.xlu0 %2669, %v2627
    %v2671 = vpop.permute.xlu0 %2670
    %vm2672 = vcmp.eq.s32.totalorder %v2668, 1
    %vm2673 = vcmp.eq.s32.totalorder %v2671, 1
    %v2674 = vsel %vm2672, %v2354, -3e+38
    %v2675 = vsel %vm2673, %v2355, -3e+38
    %v2676 = vmax.f32 %v2674, %v2675
    %v2677 = vrot.slane %v2676, 4
    %v2678 = vmax.f32 %v2676, %v2677
    %v2679 = vrot.slane %v2678, 2
    %v2680 = vmax.f32 %v2678, %v2679
    %v2681 = vrot.slane %v2680, 1
    %v2682 = vmax.f32 %v2680, %v2681
    %vm2683 = vcmask 15368
    %v2684 = vsel %vm2683, %v2622, 0.0
    %v2685 = vsel %vm2683, %v2623, 0.0
    %v2686 = vadd.f32 %v2684, %v2685
    %v2687 = vrot.slane %v2686, 4
    %v2688 = vadd.f32 %v2686, %v2687
    %v2689 = vrot.slane %v2688, 2
    %v2690 = vadd.f32 %v2688, %v2689
    %v2691 = vrot.slane %v2690, 1
    %v2692 = vadd.f32 %v2690, %v2691
    %vm2693 = vcmp.gt.f32.partialorder %v2692, 0.0
    %v2694 = vsel %vm2693, 1, 0
    %2695 = vset.pattern.permute.xlu0 1
    %2696 = vperm.xlu0 %2695, %v2694
    %v2697 = vpop.permute.xlu0 %2696
    %vm2698 = vcmp.eq.s32.totalorder %v2697, 1
    %v2699 = vsel %vm2698, %v2682, 0.0
    %vm2700 = vcmp.eq.s32.totalorder %v2663, 1
    %v2701 = vsel %vm2700, %v2699, %v2665
    %v2702 = vld [vmem:[#allocation35] sm:$0xff]
    %v2703 = vld [vmem:[#allocation35 + $0x8] sm:$0xff]
    %v2704 = vld [vmem:[#allocation35 + $0x10] sm:$0xff]
    %v2705 = vld [vmem:[#allocation35 + $0x18] sm:$0xff]
    %v2706 = vld [vmem:[#allocation35 + $0x20] sm:$0xff]
    %v2707 = vld [vmem:[#allocation35 + $0x28] sm:$0xff]
    %v2708 = vld [vmem:[#allocation35 + $0x30] sm:$0xff]
    %v2709 = vld [vmem:[#allocation35 + $0x38] sm:$0xff]
    %v2710 = vld [vmem:[#allocation35 + $0x40] sm:$0xff]
    %v2711 = vld [vmem:[#allocation35 + $0x48] sm:$0xff]
    %v2712 = vld [vmem:[#allocation35 + $0x50] sm:$0xff]
    %v2713 = vld [vmem:[#allocation35 + $0x58] sm:$0xff]
    %v2714 = vld [vmem:[#allocation35 + $0x60] sm:$0xff]
    %v2715 = vld [vmem:[#allocation35 + $0x68] sm:$0xff]
    %v2716 = vld [vmem:[#allocation35 + $0x70] sm:$0xff]
    %v2717 = vld [vmem:[#allocation35 + $0x78] sm:$0xff]
    %v2718 = vld [vmem:[%s59] sm:$0x1]
    %v2719 = vld [vmem:[#allocation37] sm:$0xff]
    %v2720 = vld [vmem:[#allocation37 + $0x8] sm:$0xff]
    %v2721 = vld [vmem:[#allocation37 + $0x10] sm:$0xff]
    %v2722 = vld [vmem:[#allocation37 + $0x18] sm:$0xff]
    %v2723 = vld [vmem:[#allocation37 + $0x20] sm:$0xff]
    %v2724 = vld [vmem:[#allocation37 + $0x28] sm:$0xff]
    %v2725 = vld [vmem:[#allocation37 + $0x30] sm:$0xff]
    %v2726 = vld [vmem:[#allocation37 + $0x38] sm:$0xff]
    %v2727 = vld [vmem:[#allocation37 + $0x40] sm:$0xff]
    %v2728 = vld [vmem:[#allocation37 + $0x48] sm:$0xff]
    %v2729 = vld [vmem:[#allocation37 + $0x50] sm:$0xff]
    %v2730 = vld [vmem:[#allocation37 + $0x58] sm:$0xff]
    %v2731 = vld [vmem:[#allocation37 + $0x60] sm:$0xff]
    %v2732 = vld [vmem:[#allocation37 + $0x68] sm:$0xff]
    %v2733 = vld [vmem:[#allocation37 + $0x70] sm:$0xff]
    %v2734 = vld [vmem:[#allocation37 + $0x78] sm:$0xff]
    %v2736 = vlaneseq
    %v2737 = vshrl.u32 %v2736, 7
    %v2738 = vsub.s32 0, %v2737
    %v2739 = vrot.slane %v2718, %v2738
    %2741 = vmatprep.subr.mxu0 0.0
    %2742 = vmatpush1.msra.mxu0 %v2702
    %2743 = vmatprep.subr.mxu0 0.0
    %2744 = vmatpush1.msra.mxu0 %v2703
    %2745 = vmatprep.subr.mxu0 0.0
    %2746 = vmatpush1.msra.mxu0 %v2704
    %2747 = vmatprep.subr.mxu0 0.0
    %2748 = vmatpush1.msra.mxu0 %v2705
    %2749 = vmatprep.subr.mxu0 0.0
    %2750 = vmatpush1.msra.mxu0 %v2706
    %2751 = vmatprep.subr.mxu0 0.0
    %2752 = vmatpush1.msra.mxu0 %v2707
    %2753 = vmatprep.subr.mxu0 0.0
    %2754 = vmatpush1.msra.mxu0 %v2708
    %2755 = vmatprep.subr.mxu0 0.0
    %2756 = vmatpush1.msra.mxu0 %v2709
    %2757 = vmatprep.subr.mxu0 0.0
    %2758 = vmatpush1.msra.mxu0 %v2710
    %2759 = vmatprep.subr.mxu0 0.0
    %2760 = vmatpush1.msra.mxu0 %v2711
    %2761 = vmatprep.subr.mxu0 0.0
    %2762 = vmatpush1.msra.mxu0 %v2712
    %2763 = vmatprep.subr.mxu0 0.0
    %2764 = vmatpush1.msra.mxu0 %v2713
    %2765 = vmatprep.subr.mxu0 0.0
    %2766 = vmatpush1.msra.mxu0 %v2714
    %2767 = vmatprep.subr.mxu0 0.0
    %2768 = vmatpush1.msra.mxu0 %v2715
    %2769 = vmatprep.subr.mxu0 0.0
    %2770 = vmatpush1.msra.mxu0 %v2716
    %2771 = vmatprep.subr.mxu0 0.0
    %2772 = vmatpush1.msra.mxu0 %v2717
    %2773 = vmatprep.subr.mxu0 0.0
    %2774 = vmatpush1.msra.mxu0 0.0
    %2775 = vmatprep.subr.mxu0 0.0
    %2776 = vmatpush1.msra.mxu0 0.0
    %2777 = vmatprep.subr.mxu0 0.0
    %2778 = vmatpush1.msra.mxu0 0.0
    %2779 = vmatprep.subr.mxu0 0.0
    %2780 = vmatpush1.msra.mxu0 0.0
    %2781 = vmatprep.subr.mxu0 0.0
    %2782 = vmatpush1.msra.mxu0 0.0
    %2783 = vmatprep.subr.mxu0 0.0
    %2784 = vmatpush1.msra.mxu0 0.0
    %2785 = vmatprep.subr.mxu0 0.0
    %2786 = vmatpush1.msra.mxu0 0.0
    %2787 = vmatprep.subr.mxu0 0.0
    %2788 = vmatpush1.msra.mxu0 0.0
    %2789 = vmatprep.subr.mxu0 0.0
    %2790 = vmatpush1.msra.mxu0 0.0
    %2791 = vmatprep.subr.mxu0 0.0
    %2792 = vmatpush1.msra.mxu0 0.0
    %2793 = vmatprep.subr.mxu0 0.0
    %2794 = vmatpush1.msra.mxu0 0.0
    %2795 = vmatprep.subr.mxu0 0.0
    %2796 = vmatpush1.msra.mxu0 0.0
    %2797 = vmatprep.subr.mxu0 0.0
    %2798 = vmatpush1.msra.mxu0 0.0
    %2799 = vmatprep.subr.mxu0 0.0
    %2800 = vmatpush1.msra.mxu0 0.0
    %2801 = vmatprep.subr.mxu0 0.0
    %2802 = vmatpush1.msra.mxu0 0.0
    %2803 = vmatprep.subr.mxu0 0.0
    %2804 = vmatpush1.msra.mxu0 0.0
    %2805 = vmatprep.mubr.f32.mxu0 0.0
    %2806 = vmatmul.mubr.f32.gmra.mrb[0].mxu0 %v2701
    %v2807 = vpop.f32.mrb[0].mxu0
    %v2808 = vadd.f32 %v2739, %v2807
    %v2809 = vpop.f32.mrb[0].mxu0
    %2810 = vdwg.mxu0
    %v2811 = vmax.f32 %v2808, 0.0
    %v2812 = vld [vmem:[#allocation8] sm:$0xff]
    %v2813 = vld [vmem:[#allocation8 + $0x8] sm:$0xff]
    %vm2814 = vcmp.gt.f32.partialorder %v2812, 0.0
    %vm2815 = vcmp.gt.f32.partialorder %v2813, 0.0
    %v2816 = vsel %vm2814, 1, 0
    %v2817 = vsel %vm2815, 1, 0
    %2818 = vset.pattern.permute.xlu0 0
    %2819 = vperm.xlu0 %2818, %v2816
    %v2820 = vpop.permute.xlu0 %2819
    %2821 = vset.pattern.permute.xlu0 0
    %2822 = vperm.xlu0 %2821, %v2817
    %v2823 = vpop.permute.xlu0 %2822
    %vm2824 = vcmp.eq.s32.totalorder %v2820, 1
    %vm2825 = vcmp.eq.s32.totalorder %v2823, 1
    %v2826 = vsel %vm2824, %v2620, -3e+38
    %v2827 = vsel %vm2825, %v2621, -3e+38
    %v2828 = vmax.f32 %v2826, %v2827
    %v2829 = vrot.slane %v2828, 4
    %v2830 = vmax.f32 %v2828, %v2829
    %v2831 = vrot.slane %v2830, 2
    %v2832 = vmax.f32 %v2830, %v2831
    %v2833 = vrot.slane %v2832, 1
    %v2834 = vmax.f32 %v2832, %v2833
    %v2835 = vsel %vm2645, %v2812, 0.0
    %v2836 = vsel %vm2645, %v2813, 0.0
    %v2837 = vadd.f32 %v2835, %v2836
    %v2838 = vrot.slane %v2837, 4
    %v2839 = vadd.f32 %v2837, %v2838
    %v2840 = vrot.slane %v2839, 2
    %v2841 = vadd.f32 %v2839, %v2840
    %v2842 = vrot.slane %v2841, 1
    %v2843 = vadd.f32 %v2841, %v2842
    %vm2844 = vcmp.gt.f32.partialorder %v2843, 0.0
    %v2845 = vsel %vm2844, 1, 0
    %2846 = vset.pattern.permute.xlu0 0
    %2847 = vperm.xlu0 %2846, %v2845
    %v2848 = vpop.permute.xlu0 %2847
    %vm2849 = vcmp.eq.s32.totalorder %v2848, 1
    %v2850 = vsel %vm2849, %v2834, 0.0
    %v2851 = vsel %vm2664, %v2850, 0.0
    %2852 = vset.pattern.permute.xlu0 1
    %2853 = vperm.xlu0 %2852, %v2816
    %v2854 = vpop.permute.xlu0 %2853
    %2855 = vset.pattern.permute.xlu0 1
    %2856 = vperm.xlu0 %2855, %v2817
    %v2857 = vpop.permute.xlu0 %2856
    %vm2858 = vcmp.eq.s32.totalorder %v2854, 1
    %vm2859 = vcmp.eq.s32.totalorder %v2857, 1
    %v2860 = vsel %vm2858, %v2620, -3e+38
    %v2861 = vsel %vm2859, %v2621, -3e+38
    %v2862 = vmax.f32 %v2860, %v2861
    %v2863 = vrot.slane %v2862, 4
    %v2864 = vmax.f32 %v2862, %v2863
    %v2865 = vrot.slane %v2864, 2
    %v2866 = vmax.f32 %v2864, %v2865
    %v2867 = vrot.slane %v2866, 1
    %v2868 = vmax.f32 %v2866, %v2867
    %v2869 = vsel %vm2683, %v2812, 0.0
    %v2870 = vsel %vm2683, %v2813, 0.0
    %v2871 = vadd.f32 %v2869, %v2870
    %v2872 = vrot.slane %v2871, 4
    %v2873 = vadd.f32 %v2871, %v2872
    %v2874 = vrot.slane %v2873, 2
    %v2875 = vadd.f32 %v2873, %v2874
    %v2876 = vrot.slane %v2875, 1
    %v2877 = vadd.f32 %v2875, %v2876
    %vm2878 = vcmp.gt.f32.partialorder %v2877, 0.0
    %v2879 = vsel %vm2878, 1, 0
    %2880 = vset.pattern.permute.xlu0 1
    %2881 = vperm.xlu0 %2880, %v2879
    %v2882 = vpop.permute.xlu0 %2881
    %vm2883 = vcmp.eq.s32.totalorder %v2882, 1
    %v2884 = vsel %vm2883, %v2868, 0.0
    %v2885 = vsel %vm2700, %v2884, %v2851
    %v2886 = vld [vmem:[#allocation38] sm:$0xff]
    %v2887 = vld [vmem:[#allocation38 + $0x8] sm:$0xff]
    %v2888 = vld [vmem:[#allocation38 + $0x10] sm:$0xff]
    %v2889 = vld [vmem:[#allocation38 + $0x18] sm:$0xff]
    %v2890 = vld [vmem:[#allocation38 + $0x20] sm:$0xff]
    %v2891 = vld [vmem:[#allocation38 + $0x28] sm:$0xff]
    %v2892 = vld [vmem:[#allocation38 + $0x30] sm:$0xff]
    %v2893 = vld [vmem:[#allocation38 + $0x38] sm:$0xff]
    %v2894 = vld [vmem:[#allocation38 + $0x40] sm:$0xff]
    %v2895 = vld [vmem:[#allocation38 + $0x48] sm:$0xff]
    %v2896 = vld [vmem:[#allocation38 + $0x50] sm:$0xff]
    %v2897 = vld [vmem:[#allocation38 + $0x58] sm:$0xff]
    %v2898 = vld [vmem:[#allocation38 + $0x60] sm:$0xff]
    %v2899 = vld [vmem:[#allocation38 + $0x68] sm:$0xff]
    %v2900 = vld [vmem:[#allocation38 + $0x70] sm:$0xff]
    %v2901 = vld [vmem:[#allocation38 + $0x78] sm:$0xff]
    %v2902 = vld [vmem:[%s65] sm:$0x1]
    %v2903 = vld [vmem:[#allocation40] sm:$0xff]
    %v2904 = vld [vmem:[#allocation40 + $0x8] sm:$0xff]
    %v2905 = vld [vmem:[#allocation40 + $0x10] sm:$0xff]
    %v2906 = vld [vmem:[#allocation40 + $0x18] sm:$0xff]
    %v2907 = vld [vmem:[#allocation40 + $0x20] sm:$0xff]
    %v2908 = vld [vmem:[#allocation40 + $0x28] sm:$0xff]
    %v2909 = vld [vmem:[#allocation40 + $0x30] sm:$0xff]
    %v2910 = vld [vmem:[#allocation40 + $0x38] sm:$0xff]
    %v2911 = vld [vmem:[#allocation40 + $0x40] sm:$0xff]
    %v2912 = vld [vmem:[#allocation40 + $0x48] sm:$0xff]
    %v2913 = vld [vmem:[#allocation40 + $0x50] sm:$0xff]
    %v2914 = vld [vmem:[#allocation40 + $0x58] sm:$0xff]
    %v2915 = vld [vmem:[#allocation40 + $0x60] sm:$0xff]
    %v2916 = vld [vmem:[#allocation40 + $0x68] sm:$0xff]
    %v2917 = vld [vmem:[#allocation40 + $0x70] sm:$0xff]
    %v2918 = vld [vmem:[#allocation40 + $0x78] sm:$0xff]
    %v2920 = vlaneseq
    %v2921 = vshrl.u32 %v2920, 7
    %v2922 = vsub.s32 0, %v2921
    %v2923 = vrot.slane %v2902, %v2922
    %2925 = vmatprep.subr.mxu0 0.0
    %2926 = vmatpush1.msra.mxu0 %v2886
    %2927 = vmatprep.subr.mxu0 0.0
    %2928 = vmatpush1.msra.mxu0 %v2887
    %2929 = vmatprep.subr.mxu0 0.0
    %2930 = vmatpush1.msra.mxu0 %v2888
    %2931 = vmatprep.subr.mxu0 0.0
    %2932 = vmatpush1.msra.mxu0 %v2889
    %2933 = vmatprep.subr.mxu0 0.0
    %2934 = vmatpush1.msra.mxu0 %v2890
    %2935 = vmatprep.subr.mxu0 0.0
    %2936 = vmatpush1.msra.mxu0 %v2891
    %2937 = vmatprep.subr.mxu0 0.0
    %2938 = vmatpush1.msra.mxu0 %v2892
    %2939 = vmatprep.subr.mxu0 0.0
    %2940 = vmatpush1.msra.mxu0 %v2893
    %2941 = vmatprep.subr.mxu0 0.0
    %2942 = vmatpush1.msra.mxu0 %v2894
    %2943 = vmatprep.subr.mxu0 0.0
    %2944 = vmatpush1.msra.mxu0 %v2895
    %2945 = vmatprep.subr.mxu0 0.0
    %2946 = vmatpush1.msra.mxu0 %v2896
    %2947 = vmatprep.subr.mxu0 0.0
    %2948 = vmatpush1.msra.mxu0 %v2897
    %2949 = vmatprep.subr.mxu0 0.0
    %2950 = vmatpush1.msra.mxu0 %v2898
    %2951 = vmatprep.subr.mxu0 0.0
    %2952 = vmatpush1.msra.mxu0 %v2899
    %2953 = vmatprep.subr.mxu0 0.0
    %2954 = vmatpush1.msra.mxu0 %v2900
    %2955 = vmatprep.subr.mxu0 0.0
    %2956 = vmatpush1.msra.mxu0 %v2901
    %2957 = vmatprep.subr.mxu0 0.0
    %2958 = vmatpush1.msra.mxu0 0.0
    %2959 = vmatprep.subr.mxu0 0.0
    %2960 = vmatpush1.msra.mxu0 0.0
    %2961 = vmatprep.subr.mxu0 0.0
    %2962 = vmatpush1.msra.mxu0 0.0
    %2963 = vmatprep.subr.mxu0 0.0
    %2964 = vmatpush1.msra.mxu0 0.0
    %2965 = vmatprep.subr.mxu0 0.0
    %2966 = vmatpush1.msra.mxu0 0.0
    %2967 = vmatprep.subr.mxu0 0.0
    %2968 = vmatpush1.msra.mxu0 0.0
    %2969 = vmatprep.subr.mxu0 0.0
    %2970 = vmatpush1.msra.mxu0 0.0
    %2971 = vmatprep.subr.mxu0 0.0
    %2972 = vmatpush1.msra.mxu0 0.0
    %2973 = vmatprep.subr.mxu0 0.0
    %2974 = vmatpush1.msra.mxu0 0.0
    %2975 = vmatprep.subr.mxu0 0.0
    %2976 = vmatpush1.msra.mxu0 0.0
    %2977 = vmatprep.subr.mxu0 0.0
    %2978 = vmatpush1.msra.mxu0 0.0
    %2979 = vmatprep.subr.mxu0 0.0
    %2980 = vmatpush1.msra.mxu0 0.0
    %2981 = vmatprep.subr.mxu0 0.0
    %2982 = vmatpush1.msra.mxu0 0.0
    %2983 = vmatprep.subr.mxu0 0.0
    %2984 = vmatpush1.msra.mxu0 0.0
    %2985 = vmatprep.subr.mxu0 0.0
    %2986 = vmatpush1.msra.mxu0 0.0
    %2987 = vmatprep.subr.mxu0 0.0
    %2988 = vmatpush1.msra.mxu0 0.0
    %2989 = vmatprep.mubr.f32.mxu0 0.0
    %2990 = vmatmul.mubr.f32.gmra.mrb[0].mxu0 %v2885
    %v2991 = vpop.f32.mrb[0].mxu0
    %v2992 = vadd.f32 %v2923, %v2991
    %v2993 = vpop.f32.mrb[0].mxu0
    %2994 = vdwg.mxu0
    %v2995 = vmax.f32 %v2992, 0.0
    %2996 = vmatprep.subr.mxu0 0.0
    %2997 = vmatpush1.msra.mxu0 %v2903
    %2998 = vmatprep.subr.mxu0 0.0
    %2999 = vmatpush1.msra.mxu0 %v2904
    %3000 = vmatprep.subr.mxu0 0.0
    %3001 = vmatpush1.msra.mxu0 %v2905
    %3002 = vmatprep.subr.mxu0 0.0
    %3003 = vmatpush1.msra.mxu0 %v2906
    %3004 = vmatprep.subr.mxu0 0.0
    %3005 = vmatpush1.msra.mxu0 %v2907
    %3006 = vmatprep.subr.mxu0 0.0
    %3007 = vmatpush1.msra.mxu0 %v2908
    %3008 = vmatprep.subr.mxu0 0.0
    %3009 = vmatpush1.msra.mxu0 %v2909
    %3010 = vmatprep.subr.mxu0 0.0
    %3011 = vmatpush1.msra.mxu0 %v2910
    %3012 = vmatprep.subr.mxu0 0.0
    %3013 = vmatpush1.msra.mxu0 %v2911
    %3014 = vmatprep.subr.mxu0 0.0
    %3015 = vmatpush1.msra.mxu0 %v2912
    %3016 = vmatprep.subr.mxu0 0.0
    %3017 = vmatpush1.msra.mxu0 %v2913
    %3018 = vmatprep.subr.mxu0 0.0
    %3019 = vmatpush1.msra.mxu0 %v2914
    %3020 = vmatprep.subr.mxu0 0.0
    %3021 = vmatpush1.msra.mxu0 %v2915
    %3022 = vmatprep.subr.mxu0 0.0
    %3023 = vmatpush1.msra.mxu0 %v2916
    %3024 = vmatprep.subr.mxu0 0.0
    %3025 = vmatpush1.msra.mxu0 %v2917
    %3026 = vmatprep.subr.mxu0 0.0
    %3027 = vmatpush1.msra.mxu0 %v2918
    %3028 = vmatprep.subr.mxu0 0.0
    %3029 = vmatpush1.msra.mxu0 0.0
    %3030 = vmatprep.subr.mxu0 0.0
    %3031 = vmatpush1.msra.mxu0 0.0
    %3032 = vmatprep.subr.mxu0 0.0
    %3033 = vmatpush1.msra.mxu0 0.0
    %3034 = vmatprep.subr.mxu0 0.0
    %3035 = vmatpush1.msra.mxu0 0.0
    %3036 = vmatprep.subr.mxu0 0.0
    %3037 = vmatpush1.msra.mxu0 0.0
    %3038 = vmatprep.subr.mxu0 0.0
    %3039 = vmatpush1.msra.mxu0 0.0
    %3040 = vmatprep.subr.mxu0 0.0
    %3041 = vmatpush1.msra.mxu0 0.0
    %3042 = vmatprep.subr.mxu0 0.0
    %3043 = vmatpush1.msra.mxu0 0.0
    %3044 = vmatprep.subr.mxu0 0.0
    %3045 = vmatpush1.msra.mxu0 0.0
    %3046 = vmatprep.subr.mxu0 0.0
    %3047 = vmatpush1.msra.mxu0 0.0
    %3048 = vmatprep.subr.mxu0 0.0
    %3049 = vmatpush1.msra.mxu0 0.0
    %3050 = vmatprep.subr.mxu0 0.0
    %3051 = vmatpush1.msra.mxu0 0.0
    %3052 = vmatprep.subr.mxu0 0.0
    %3053 = vmatpush1.msra.mxu0 0.0
    %3054 = vmatprep.subr.mxu0 0.0
    %3055 = vmatpush1.msra.mxu0 0.0
    %3056 = vmatprep.subr.mxu0 0.0
    %3057 = vmatpush1.msra.mxu0 0.0
    %3058 = vmatprep.subr.mxu0 0.0
    %3059 = vmatpush1.msra.mxu0 0.0
    %3060 = vmatprep.mubr.f32.mxu0 0.0
    %3061 = vmatmul.mubr.f32.gmra.mrb[0].mxu0 %v2995
    %v3062 = vpop.f32.mrb[0].mxu0
    %v3063 = vadd.f32 0.0, %v3062
    %v3064 = vpop.f32.mrb[0].mxu0
    %3065 = vdwg.mxu0
    %3066 = vmatprep.subr.mxu0 0.0
    %3067 = vmatpush1.msra.mxu0 %v2719
    %3068 = vmatprep.subr.mxu0 0.0
    %3069 = vmatpush1.msra.mxu0 %v2720
    %3070 = vmatprep.subr.mxu0 0.0
    %3071 = vmatpush1.msra.mxu0 %v2721
    %3072 = vmatprep.subr.mxu0 0.0
    %3073 = vmatpush1.msra.mxu0 %v2722
    %3074 = vmatprep.subr.mxu0 0.0
    %3075 = vmatpush1.msra.mxu0 %v2723
    %3076 = vmatprep.subr.mxu0 0.0
    %3077 = vmatpush1.msra.mxu0 %v2724
    %3078 = vmatprep.subr.mxu0 0.0
    %3079 = vmatpush1.msra.mxu0 %v2725
    %3080 = vmatprep.subr.mxu0 0.0
    %3081 = vmatpush1.msra.mxu0 %v2726
    %3082 = vmatprep.subr.mxu0 0.0
    %3083 = vmatpush1.msra.mxu0 %v2727
    %3084 = vmatprep.subr.mxu0 0.0
    %3085 = vmatpush1.msra.mxu0 %v2728
    %3086 = vmatprep.subr.mxu0 0.0
    %3087 = vmatpush1.msra.mxu0 %v2729
    %3088 = vmatprep.subr.mxu0 0.0
    %3089 = vmatpush1.msra.mxu0 %v2730
    %3090 = vmatprep.subr.mxu0 0.0
    %3091 = vmatpush1.msra.mxu0 %v2731
    %3092 = vmatprep.subr.mxu0 0.0
    %3093 = vmatpush1.msra.mxu0 %v2732
    %3094 = vmatprep.subr.mxu0 0.0
    %3095 = vmatpush1.msra.mxu0 %v2733
    %3096 = vmatprep.subr.mxu0 0.0
    %3097 = vmatpush1.msra.mxu0 %v2734
    %3098 = vmatprep.subr.mxu0 0.0
    %3099 = vmatpush1.msra.mxu0 0.0
    %3100 = vmatprep.subr.mxu0 0.0
    %3101 = vmatpush1.msra.mxu0 0.0
    %3102 = vmatprep.subr.mxu0 0.0
    %3103 = vmatpush1.msra.mxu0 0.0
    %3104 = vmatprep.subr.mxu0 0.0
    %3105 = vmatpush1.msra.mxu0 0.0
    %3106 = vmatprep.subr.mxu0 0.0
    %3107 = vmatpush1.msra.mxu0 0.0
    %3108 = vmatprep.subr.mxu0 0.0
    %3109 = vmatpush1.msra.mxu0 0.0
    %3110 = vmatprep.subr.mxu0 0.0
    %3111 = vmatpush1.msra.mxu0 0.0
    %3112 = vmatprep.subr.mxu0 0.0
    %3113 = vmatpush1.msra.mxu0 0.0
    %3114 = vmatprep.subr.mxu0 0.0
    %3115 = vmatpush1.msra.mxu0 0.0
    %3116 = vmatprep.subr.mxu0 0.0
    %3117 = vmatpush1.msra.mxu0 0.0
    %3118 = vmatprep.subr.mxu0 0.0
    %3119 = vmatpush1.msra.mxu0 0.0
    %3120 = vmatprep.subr.mxu0 0.0
    %3121 = vmatpush1.msra.mxu0 0.0
    %3122 = vmatprep.subr.mxu0 0.0
    %3123 = vmatpush1.msra.mxu0 0.0
    %3124 = vmatprep.subr.mxu0 0.0
    %3125 = vmatpush1.msra.mxu0 0.0
    %3126 = vmatprep.subr.mxu0 0.0
    %3127 = vmatpush1.msra.mxu0 0.0
    %3128 = vmatprep.subr.mxu0 0.0
    %3129 = vmatpush1.msra.mxu0 0.0
    %3130 = vmatprep.mubr.f32.mxu0 0.0
    %3131 = vmatmul.mubr.f32.gmra.mrb[0].mxu0 %v2811
    %v3132 = vpop.f32.mrb[0].mxu0
    %v3133 = vadd.f32 %v3063, %v3132
    %v3134 = vpop.f32.mrb[0].mxu0
    %3135 = vdwg.mxu0
    %v3136 = vld [vmem:[%s69] sm:$0x1]
    %v3138 = vlaneseq
    %v3139 = vshrl.u32 %v3138, 7
    %v3140 = vsub.s32 0, %v3139
    %v3141 = vrot.slane %v3136, %v3140
    %v3143 = vadd.f32 %v3133, %v3141
    %3144 = vst [vmem:[#allocation41] sm:$0xff] %v3143
    // Predicated region
    $region242: #{tpu_custom_call.1} parent=1 // pred_check
      _
    $region243: #{tpu_custom_call.1} parent=1 // pred_check_branch
      %3146 = sbr.rel (0) target = $region245
    $region244: #{tpu_custom_call.1} parent=1 // pred_region
      %s3148 = ssub.s32 128, 128
      %3149 = vsyncadd [#allocation4], %s3148
      %s3151 = sshll.u32 [#allocation41], 4
      %s3152 = int_to_ptr.vmem [resolvable:$true] %s3151
      %3154 = dma.vmem_to_hbm [thread:$0]  %s3152, 128, %s71, [#allocation4]
    $region245: #{tpu_custom_call.1} parent=1 // pred_fallthru
      _
    // Predicated region
    $region246: #{tpu_custom_call.1} parent=1 // pred_check
      _
    $region247: #{tpu_custom_call.1} parent=1 // pred_check_branch
      %3156 = sbr.rel (0) target = $region249
    $region248: #{tpu_custom_call.1} parent=1 // pred_region
      %3157 = dma.done [#allocation4], 128
    $region249: #{tpu_custom_call.1} parent=1 // pred_fallthru
      _
    %3158 = vsyncpa [#allocation3], 1
    %3159 = vsyncpa [#allocation6], 1
    %3160 = vsyncpa [#allocation9], 1
    %3161 = vsyncpa [#allocation12], 1
    %3162 = vsyncpa [#allocation15], 1
    %3163 = vsyncpa [#allocation18], 1
    %3164 = vsyncpa [#allocation21], 1
    %3165 = vsyncpa [#allocation24], 1
    %3166 = vsyncpa [#allocation27], 1
    %3167 = vsyncpa [#allocation30], 1
    %3168 = vsyncpa [#allocation33], 1
    %3169 = vsyncpa [#allocation36], 1
    %3170 = vsyncpa [#allocation39], 1
    %3171 = vsyncpa [#allocation4], 1

</llo_original>
